<compile_context>
chip_gen: v7x
topology: tpu7x:2x2x1
jax: 0.10.0
libtpu: 0.0.40
codegen_flags: <defaults>
</compile_context>

<pallas_src>
import functools

import jax
import jax.numpy as jnp
from jax.experimental import pallas as pl
from jax.experimental.pallas import tpu as pltpu

LEAKY_SLOPE = 0.2
EPS = 1e-5
LANE = 128


def _round_up(x, m):
    return (x + m - 1) // m * m


# ----------------------------------------------------------------------------- tile selection
_TM_CANDIDATES = (1024, 512, 256, 128, 64, 32, 16)


def _pick_tm(M):
    """Prefer a divisor of M (no patch re-pad); prefer >=2 blocks for megacore sharding."""
    for want_two in (True, False):
        for tm in _TM_CANDIDATES:
            if M % tm == 0 and (M // tm >= 2 or not want_two):
                return tm, M
    # Ragged M (non power-of-two spatial sizes): pad.  Costs one copy of the patch tensor,
    # in practice only tiny tail-layer maps hit this.
    tm = min(512, _round_up(M, 16))
    return tm, _round_up(M, tm)


def _pick_tk(K):
    """Largest multiple of 128 that divides K and is <= 2048 (K is always a multiple of 128)."""
    cap = min(K, 2048)
    for tk in range(cap, 0, -128):
        if K % tk == 0:
            return tk
    return 128


# ----------------------------------------------------------------------------- Pallas kernels
def _conv_matmul_kernel(*refs, activation, has_bias, nk):
    """Tiled out = act(A @ W [+ b]).  A:[TM,TK] bf16, W:[TK,TN] bf16, b:[1,TN] f32, out bf16."""
    if has_bias:
        a_ref, w_ref, b_ref, o_ref = refs[0], refs[1], refs[2], refs[3]
    else:
        a_ref, w_ref, o_ref = refs[0], refs[1], refs[2]
        b_ref = None

    def epilogue(acc):
        if b_ref is not None:
            acc = acc + b_ref[...]
        if activation == "leaky":
            acc = jnp.where(acc >= 0, acc, LEAKY_SLOPE * acc)
        o_ref[...] = acc.astype(o_ref.dtype)

    if nk == 1:
        # Single K block: no accumulator scratch, no init/copy epilogue overhead.
        epilogue(jnp.dot(a_ref[...], w_ref[...], preferred_element_type=jnp.float32))
    else:
        acc_ref = refs[-1]
        k = pl.program_id(2)

        @pl.when(k == 0)
        def _():
            acc_ref[...] = jnp.zeros_like(acc_ref)

        acc_ref[...] += jnp.dot(a_ref[...], w_ref[...],
                                preferred_element_type=jnp.float32)

        @pl.when(k == nk - 1)
        def _():
            epilogue(acc_ref[...])


def conv_matmul(patches, w2d, bias2d, activation):
    """patches:[M,K] bf16, w2d:[K,Cout_pad] bf16, bias2d:[1,Cout_pad] f32 or None
    -> [M, Cout_pad] bf16."""
    M, K = patches.shape
    Kw, Nc = w2d.shape
    assert K == Kw and K % LANE == 0 and Nc % LANE == 0

    TM, M_pad = _pick_tm(M)
    TN = 256 if Nc >= 256 else Nc       # 256-wide MXU columns on v6e/v7x where possible
    TK = _pick_tk(K)
    if M_pad != M:
        patches = jnp.pad(patches, ((0, M_pad - M), (0, 0)))

    nk = K // TK
    grid = (M_pad // TM, Nc // TN, nk)
    has_bias = bias2d is not None
    kernel = functools.partial(_conv_matmul_kernel, activation=activation,
                               has_bias=has_bias, nk=nk)

    in_specs = [pl.BlockSpec((TM, TK), lambda i, j, k: (i, k)),
                pl.BlockSpec((TK, TN), lambda i, j, k: (k, j))]
    args = [patches, w2d]
    if has_bias:
        in_specs.append(pl.BlockSpec((1, TN), lambda i, j, k: (0, j)))
        args.append(bias2d)
    scratch = [pltpu.VMEM((TM, TN), jnp.float32)] if nk > 1 else []

    bytes_accessed = (patches.size * patches.dtype.itemsize
                      + w2d.size * w2d.dtype.itemsize
                      + (bias2d.size * 4 if has_bias else 0)
                      + M_pad * Nc * 2)
    out = pl.pallas_call(
        kernel,
        out_shape=jax.ShapeDtypeStruct((M_pad, Nc), jnp.bfloat16),
        grid=grid,
        in_specs=in_specs,
        out_specs=pl.BlockSpec((TM, TN), lambda i, j, k: (i, j)),
        scratch_shapes=scratch,
        compiler_params=pltpu.CompilerParams(
            dimension_semantics=("parallel", "parallel", "arbitrary"),
            vmem_limit_bytes=32 * 1024 * 1024),
        cost_estimate=pl.CostEstimate(flops=2 * M_pad * K * Nc,
                                      transcendentals=0,
                                      bytes_accessed=bytes_accessed),
    )(*args)
    return out if M_pad == M else out[:M]


def _instnorm_lrelu_kernel(x_ref, o_ref):
    """Per-(n, channel) InstanceNorm (biased var, eps=1e-5) + LeakyReLU(0.2).

    Block is (1, H*W, 128): spatial on sublanes (reduction axis), channels on lanes.
    bf16 in/out, f32 single-pass (sum & sumsq) statistics.
    """
    x = x_ref[...].astype(jnp.float32)
    inv_hw = 1.0 / x.shape[1]
    s = jnp.sum(x, axis=1, keepdims=True)
    sq = jnp.sum(x * x, axis=1, keepdims=True)
    mean = s * inv_hw
    var = jnp.maximum(sq * inv_hw - mean * mean, 0.0)
    y = (x - mean) * jax.lax.rsqrt(var + EPS)
    o_ref[...] = jnp.where(y >= 0, y, LEAKY_SLOPE * y).astype(o_ref.dtype)


def instnorm_lrelu_cl(x):
    """x: [N, H, W, Cpad] channels-last bf16 (Cpad % 128 == 0)."""
    N, H, W, C = x.shape
    HW = H * W
    x3 = x.reshape(N, HW, C)
    out = pl.pallas_call(
        _instnorm_lrelu_kernel,
        out_shape=jax.ShapeDtypeStruct((N, HW, C), x.dtype),
        grid=(N, C // LANE),
        in_specs=[pl.BlockSpec((1, HW, LANE), lambda n, c: (n, 0, c))],
        out_specs=pl.BlockSpec((1, HW, LANE), lambda n, c: (n, 0, c)),
        compiler_params=pltpu.CompilerParams(
            dimension_semantics=("parallel", "parallel"),
            vmem_limit_bytes=32 * 1024 * 1024),
    )(x3)
    return out.reshape(N, H, W, C)


# ----------------------------------------------------------------------------- glue (plain JAX)
def im2col_nhwc(x, cin_real, cin_pad, kh, kw, stride, pad):
    """x: [N,H,W,C>=cin_real] bf16 -> patches [N*Ho*Wo, kh*kw*cin_pad] (tap-major, ch-minor)."""
    x = x[..., :cin_real]                           # drop lane padding from the previous layer
    xp = jnp.pad(x, ((0, 0), (pad, pad), (pad, pad), (0, cin_pad - cin_real)))
    N, H, W, C = xp.shape
    Ho = (H - kh) // stride + 1
    Wo = (W - kw) // stride + 1
    taps = []
    for i in range(kh):
        for j in range(kw):
            taps.append(xp[:, i:i + stride * Ho:stride, j:j + stride * Wo:stride, :])
    p = jnp.concatenate(taps, axis=-1)              # [N, Ho, Wo, kh*kw*cin_pad]
    return p.reshape(N * Ho * Wo, kh * kw * cin_pad), Ho, Wo


def prep_weight(w, cin_pad, cout_pad, dtype):
    """PyTorch OIHW weight -> [kh*kw*cin_pad, cout_pad], matching im2col column order."""
    cout, cin, kh, kw = w.shape
    wt = jnp.transpose(w, (2, 3, 1, 0))             # [kh, kw, Cin, Cout]
    wt = jnp.pad(wt, ((0, 0), (0, 0), (0, cin_pad - cin), (0, cout_pad - cout)))
    return wt.reshape(kh * kw * cin_pad, cout_pad).astype(dtype)


# (stride, activation fused into conv epilogue, followed-by-InstanceNorm+LeakyReLU)
# Bias is skipped for InstanceNorm layers (exactly cancelled by the mean subtraction);
# the final tanh is applied in XLA on the sliced cout=1 output.
_LAYER_CFG = ((2, "leaky", False),
              (2, "none", True),
              (2, "none", True),
              (1, "none", True),
              (1, "none", False))


def adv_discriminator_forward(x, params, compute_dtype=jnp.bfloat16):
    """x: [N, Cin, H, W] (NCHW, like the PyTorch module) -> [N, 1, Ho, Wo] f32."""
    N = x.shape[0]
    cin_real = x.shape[1]
    h = jnp.transpose(x, (0, 2, 3, 1)).astype(compute_dtype)   # NHWC bf16

    for idx, (stride, act, use_norm) in enumerate(_LAYER_CFG):
        w = params[f"w{idx}"]
        b = params[f"b{idx}"]
        cout, cin, kh, kw = w.shape
        assert cin == cin_real
        cin_pad = _round_up(cin, 8)                 # K = 16*cin_pad is a multiple of 128
        cout_pad = _round_up(cout, LANE)            # lane-dense conv output
        w2d = prep_weight(w, cin_pad, cout_pad, compute_dtype)

        patches, Ho, Wo = im2col_nhwc(h, cin, cin_pad, kh, kw, stride, 1)
        if use_norm:
            out2d = conv_matmul(patches, w2d, None, act)        # bias cancelled by IN
        else:
            b2d = jnp.pad(b, (0, cout_pad - cout)).reshape(1, cout_pad).astype(jnp.float32)
            out2d = conv_matmul(patches, w2d, b2d, act)
        h = out2d.reshape(N, Ho, Wo, cout_pad)                  # bf16, zero in pad channels
        if use_norm:
            h = instnorm_lrelu_cl(h)
        cin_real = cout

    # Last layer: slice to the single real channel, tanh in f32, back to NCHW.
    y = h[..., :cin_real]
    return jnp.tanh(jnp.transpose(y, (0, 3, 1, 2)).astype(jnp.float32))


# ----------------------------------------------------------------------------- reference (plain JAX)
def ref_forward(x, params):
    def conv(x, w, b, s):
        y = jax.lax.conv_general_dilated(
            x, w, (s, s), ((1, 1), (1, 1)),
            dimension_numbers=("NCHW", "OIHW", "NCHW"))
        return y + b.reshape(1, -1, 1, 1)

    def lrelu(v):
        return jnp.where(v >= 0, v, LEAKY_SLOPE * v)

    def inorm(v):
        m = v.mean(axis=(2, 3), keepdims=True)
        var = ((v - m) ** 2).mean(axis=(2, 3), keepdims=True)
        return (v - m) / jnp.sqrt(var + EPS)

    x = lrelu(conv(x, params["w0"], params["b0"], 2))
    x = lrelu(inorm(conv(x, params["w1"], params["b1"], 2)))
    x = lrelu(inorm(conv(x, params["w2"], params["b2"], 2)))
    x = lrelu(inorm(conv(x, params["w3"], params["b3"], 1)))
    x = jnp.tanh(conv(x, params["w4"], params["b4"], 1))
    return x


# ----------------------------------------------------------------------------- params
def init_params(key, in_channel=3, ndf=8):
    # pix2pix-style N(0, 0.02) init, deterministic from the key.
    chans = [(in_channel, ndf), (ndf, 2 * ndf), (2 * ndf, 4 * ndf),
             (4 * ndf, 8 * ndf), (8 * ndf, 1)]
    params = {}
    for idx, (cin, cout) in enumerate(chans):
        key, kw_, kb_ = jax.random.split(key, 3)
        params[f"w{idx}"] = 0.02 * jax.random.normal(kw_, (cout, cin, 4, 4), jnp.float32)
        params[f"b{idx}"] = 0.02 * jax.random.normal(kb_, (cout,), jnp.float32)
    return params


if __name__ == "__main__":
    key = jax.random.PRNGKey(0)
    kx, kp = jax.random.split(key)

    # Small synthetic shapes consistent with the module: batch=2, in_channel=3,
    # ndf=8, 32x32 spatial -> output [2, 1, 2, 2].
    x = jax.random.normal(kx, (2, 3, 32, 32), jnp.float32)
    params = init_params(kp, in_channel=3, ndf=8)

    out = jax.block_until_ready(jax.jit(adv_discriminator_forward)(x, params))
    ref = jax.block_until_ready(ref_forward(x, params))

    assert out.shape == ref.shape == (2, 1, 2, 2), (out.shape, ref.shape)
    max_err = float(jnp.max(jnp.abs(out - ref)))
    # bf16 matmul operands AND bf16 inter-layer activations (f32 accumulation / f32
    # InstanceNorm statistics) vs. an all-f32 reference.
    assert jnp.allclose(out, ref, atol=3e-2, rtol=3e-2), max_err

    print("KERNEL_OK")
</pallas_src>

<mosaic_0001>
module attributes {stable_mosaic.version = 11 : i64} {
  func.func @_conv_matmul_kernel(%arg0: i32, %arg1: i32, %arg2: i32, %arg3: memref<256x128xbf16, #tpu.memory_space<vmem>>, %arg4: memref<128x128xbf16, #tpu.memory_space<vmem>>, %arg5: memref<1x128xf32, #tpu.memory_space<vmem>>, %arg6: memref<256x128xbf16, #tpu.memory_space<vmem>>) attributes {dimension_semantics = [#tpu.dimension_semantics<parallel>, #tpu.dimension_semantics<parallel>, #tpu.dimension_semantics<arbitrary>], iteration_bounds = array<i64: 2, 1, 1>, scalar_prefetch = 0 : i64, scratch_operands = 0 : i64, tpu.core_type = #tpu.core_type<tc>, window_params = [{transform_indices = @transform_0, window_bounds = array<i64: 256, 128>}, {transform_indices = @transform_1, window_bounds = array<i64: 128, 128>}, {transform_indices = @transform_2, window_bounds = array<i64: 1, 128>}, {transform_indices = @transform_3, window_bounds = array<i64: 256, 128>}]} {
    %c0 = arith.constant 0 : index
    %c0_0 = arith.constant 0 : index
    %0 = vector.load %arg3[%c0, %c0_0] : memref<256x128xbf16, #tpu.memory_space<vmem>>, vector<256x128xbf16>
    %c0_1 = arith.constant 0 : index
    %c0_2 = arith.constant 0 : index
    %1 = vector.load %arg4[%c0_1, %c0_2] : memref<128x128xbf16, #tpu.memory_space<vmem>>, vector<128x128xbf16>
    %cst = arith.constant dense<0.000000e+00> : vector<256x128xf32>
    %2 = tpu.matmul %0, %1, %cst {dimension_numbers = #tpu.dot_dimension_numbers<[1], [0], [0], [1], [0, 0, 1, 1], [], []>} : vector<256x128xbf16>, vector<128x128xbf16>, vector<256x128xf32> -> vector<256x128xf32>
    %c0_3 = arith.constant 0 : index
    %c0_4 = arith.constant 0 : index
    %3 = vector.load %arg5[%c0_3, %c0_4] : memref<1x128xf32, #tpu.memory_space<vmem>>, vector<1x128xf32>
    %4 = vector.broadcast %3 : vector<1x128xf32> to vector<256x128xf32>
    %5 = arith.addf %2, %4 : vector<256x128xf32>
    %cst_5 = arith.constant 0.000000e+00 : f32
    %6 = vector.broadcast %cst_5 : f32 to vector<256x128xf32>
    %7 = arith.cmpf oge, %5, %6 : vector<256x128xf32>
    %cst_6 = arith.constant 2.000000e-01 : f32
    %8 = vector.broadcast %cst_6 : f32 to vector<256x128xf32>
    %9 = arith.mulf %8, %5 : vector<256x128xf32>
    %10 = arith.select %7, %5, %9 : vector<256x128xi1>, vector<256x128xf32>
    %11 = arith.truncf %10 : vector<256x128xf32> to vector<256x128xbf16>
    %c0_7 = arith.constant 0 : index
    %c0_8 = arith.constant 0 : index
    %12 = vector.load %arg6[%c0_7, %c0_8] : memref<256x128xbf16, #tpu.memory_space<vmem>>, vector<256x128xbf16>
    tpu.vector_store %arg6[%c0_7, %c0_8], %11 {strides = array<i32>} : memref<256x128xbf16, #tpu.memory_space<vmem>>, vector<256x128xbf16>,
    return
  }
  func.func @transform_0(%arg0: i32, %arg1: i32, %arg2: i32) -> (i32, i32) {
    %c0_i32 = arith.constant 0 : i32
    return %arg0, %arg2 : i32, i32
  }
  func.func @transform_1(%arg0: i32, %arg1: i32, %arg2: i32) -> (i32, i32) {
    %c0_i32 = arith.constant 0 : i32
    return %arg2, %arg1 : i32, i32
  }
  func.func @transform_2(%arg0: i32, %arg1: i32, %arg2: i32) -> (i32, i32) {
    %c0_i32 = arith.constant 0 : i32
    %c0_i32_0 = arith.constant 0 : i32
    return %c0_i32, %arg1 : i32, i32
  }
  func.func @transform_3(%arg0: i32, %arg1: i32, %arg2: i32) -> (i32, i32) {
    %c0_i32 = arith.constant 0 : i32
    return %arg0, %arg1 : i32, i32
  }
}

module attributes {stable_mosaic.version = 11 : i64} {
  func.func @_conv_matmul_kernel(%arg0: i32, %arg1: i32, %arg2: i32, %arg3: memref<64x128xbf16, #tpu.memory_space<vmem>>, %arg4: memref<128x128xbf16, #tpu.memory_space<vmem>>, %arg5: memref<64x128xbf16, #tpu.memory_space<vmem>>) attributes {dimension_semantics = [#tpu.dimension_semantics<parallel>, #tpu.dimension_semantics<parallel>, #tpu.dimension_semantics<arbitrary>], iteration_bounds = array<i64: 2, 1, 1>, scalar_prefetch = 0 : i64, scratch_operands = 0 : i64, tpu.core_type = #tpu.core_type<tc>, window_params = [{transform_indices = @transform_0, window_bounds = array<i64: 64, 128>}, {transform_indices = @transform_1, window_bounds = array<i64: 128, 128>}, {transform_indices = @transform_2, window_bounds = array<i64: 64, 128>}]} {
    %c0 = arith.constant 0 : index
    %c0_0 = arith.constant 0 : index
    %0 = vector.load %arg3[%c0, %c0_0] : memref<64x128xbf16, #tpu.memory_space<vmem>>, vector<64x128xbf16>
    %c0_1 = arith.constant 0 : index
    %c0_2 = arith.constant 0 : index
    %1 = vector.load %arg4[%c0_1, %c0_2] : memref<128x128xbf16, #tpu.memory_space<vmem>>, vector<128x128xbf16>
    %cst = arith.constant dense<0.000000e+00> : vector<64x128xf32>
    %2 = tpu.matmul %0, %1, %cst {dimension_numbers = #tpu.dot_dimension_numbers<[1], [0], [0], [1], [0, 0, 1, 1], [], []>} : vector<64x128xbf16>, vector<128x128xbf16>, vector<64x128xf32> -> vector<64x128xf32>
    %3 = arith.truncf %2 : vector<64x128xf32> to vector<64x128xbf16>
    %c0_3 = arith.constant 0 : index
    %c0_4 = arith.constant 0 : index
    %4 = vector.load %arg5[%c0_3, %c0_4] : memref<64x128xbf16, #tpu.memory_space<vmem>>, vector<64x128xbf16>
    tpu.vector_store %arg5[%c0_3, %c0_4], %3 {strides = array<i32>} : memref<64x128xbf16, #tpu.memory_space<vmem>>, vector<64x128xbf16>,
    return
  }
  func.func @transform_0(%arg0: i32, %arg1: i32, %arg2: i32) -> (i32, i32) {
    %c0_i32 = arith.constant 0 : i32
    return %arg0, %arg2 : i32, i32
  }
  func.func @transform_1(%arg0: i32, %arg1: i32, %arg2: i32) -> (i32, i32) {
    %c0_i32 = arith.constant 0 : i32
    return %arg2, %arg1 : i32, i32
  }
  func.func @transform_2(%arg0: i32, %arg1: i32, %arg2: i32) -> (i32, i32) {
    %c0_i32 = arith.constant 0 : i32
    return %arg0, %arg1 : i32, i32
  }
}

module attributes {stable_mosaic.version = 11 : i64} {
  func.func @_instnorm_lrelu_kernel(%arg0: i32, %arg1: i32, %arg2: memref<1x64x128xbf16, #tpu.memory_space<vmem>>, %arg3: memref<1x64x128xbf16, #tpu.memory_space<vmem>>) attributes {dimension_semantics = [#tpu.dimension_semantics<parallel>, #tpu.dimension_semantics<parallel>], iteration_bounds = array<i64: 2, 1>, scalar_prefetch = 0 : i64, scratch_operands = 0 : i64, tpu.core_type = #tpu.core_type<tc>, window_params = [{transform_indices = @transform_0, window_bounds = array<i64: 1, 64, 128>}, {transform_indices = @transform_1, window_bounds = array<i64: 1, 64, 128>}]} {
    %c0 = arith.constant 0 : index
    %c0_0 = arith.constant 0 : index
    %c0_1 = arith.constant 0 : index
    %0 = vector.load %arg2[%c0, %c0_0, %c0_1] : memref<1x64x128xbf16, #tpu.memory_space<vmem>>, vector<1x64x128xbf16>
    %1 = arith.extf %0 : vector<1x64x128xbf16> to vector<1x64x128xf32>
    %cst = arith.constant dense<0.000000e+00> : vector<1x128xf32>
    %2 = vector.multi_reduction <add>, %1, %cst [1] : vector<1x64x128xf32> to vector<1x128xf32>
    %3 = vector.shape_cast %2 : vector<1x128xf32> to vector<1x1x128xf32>
    %4 = arith.mulf %1, %1 : vector<1x64x128xf32>
    %cst_2 = arith.constant dense<0.000000e+00> : vector<1x128xf32>
    %5 = vector.multi_reduction <add>, %4, %cst_2 [1] : vector<1x64x128xf32> to vector<1x128xf32>
    %6 = vector.shape_cast %5 : vector<1x128xf32> to vector<1x1x128xf32>
    %cst_3 = arith.constant 1.562500e-02 : f32
    %7 = vector.broadcast %cst_3 : f32 to vector<1x1x128xf32>
    %8 = arith.mulf %3, %7 : vector<1x1x128xf32>
    %cst_4 = arith.constant 1.562500e-02 : f32
    %9 = vector.broadcast %cst_4 : f32 to vector<1x1x128xf32>
    %10 = arith.mulf %6, %9 : vector<1x1x128xf32>
    %11 = arith.mulf %8, %8 : vector<1x1x128xf32>
    %12 = arith.subf %10, %11 : vector<1x1x128xf32>
    %cst_5 = arith.constant 0.000000e+00 : f32
    %13 = vector.broadcast %cst_5 : f32 to vector<1x1x128xf32>
    %14 = arith.maximumf %12, %13 : vector<1x1x128xf32>
    %15 = vector.broadcast %8 : vector<1x1x128xf32> to vector<1x64x128xf32>
    %16 = arith.subf %1, %15 : vector<1x64x128xf32>
    %cst_6 = arith.constant 9.99999974E-6 : f32
    %17 = vector.broadcast %cst_6 : f32 to vector<1x1x128xf32>
    %18 = arith.addf %14, %17 : vector<1x1x128xf32>
    %19 = math.rsqrt %18 : vector<1x1x128xf32>
    %20 = vector.broadcast %19 : vector<1x1x128xf32> to vector<1x64x128xf32>
    %21 = arith.mulf %16, %20 : vector<1x64x128xf32>
    %cst_7 = arith.constant 0.000000e+00 : f32
    %22 = vector.broadcast %cst_7 : f32 to vector<1x64x128xf32>
    %23 = arith.cmpf oge, %21, %22 : vector<1x64x128xf32>
    %cst_8 = arith.constant 2.000000e-01 : f32
    %24 = vector.broadcast %cst_8 : f32 to vector<1x64x128xf32>
    %25 = arith.mulf %24, %21 : vector<1x64x128xf32>
    %26 = arith.select %23, %21, %25 : vector<1x64x128xi1>, vector<1x64x128xf32>
    %27 = arith.truncf %26 : vector<1x64x128xf32> to vector<1x64x128xbf16>
    %c0_9 = arith.constant 0 : index
    %c0_10 = arith.constant 0 : index
    %c0_11 = arith.constant 0 : index
    %28 = vector.load %arg3[%c0_9, %c0_10, %c0_11] : memref<1x64x128xbf16, #tpu.memory_space<vmem>>, vector<1x64x128xbf16>
    tpu.vector_store %arg3[%c0_9, %c0_10, %c0_11], %27 {strides = array<i32>} : memref<1x64x128xbf16, #tpu.memory_space<vmem>>, vector<1x64x128xbf16>,
    return
  }
  func.func @transform_0(%arg0: i32, %arg1: i32) -> (i32, i32, i32) {
    %c0_i32 = arith.constant 0 : i32
    %c0_i32_0 = arith.constant 0 : i32
    return %arg0, %c0_i32, %arg1 : i32, i32, i32
  }
  func.func @transform_1(%arg0: i32, %arg1: i32) -> (i32, i32, i32) {
    %c0_i32 = arith.constant 0 : i32
    %c0_i32_0 = arith.constant 0 : i32
    return %arg0, %c0_i32, %arg1 : i32, i32, i32
  }
}

module attributes {stable_mosaic.version = 11 : i64} {
  func.func @_conv_matmul_kernel(%arg0: i32, %arg1: i32, %arg2: i32, %arg3: memref<16x256xbf16, #tpu.memory_space<vmem>>, %arg4: memref<256x128xbf16, #tpu.memory_space<vmem>>, %arg5: memref<16x128xbf16, #tpu.memory_space<vmem>>) attributes {dimension_semantics = [#tpu.dimension_semantics<parallel>, #tpu.dimension_semantics<parallel>, #tpu.dimension_semantics<arbitrary>], iteration_bounds = array<i64: 2, 1, 1>, scalar_prefetch = 0 : i64, scratch_operands = 0 : i64, tpu.core_type = #tpu.core_type<tc>, window_params = [{transform_indices = @transform_0, window_bounds = array<i64: 16, 256>}, {transform_indices = @transform_1, window_bounds = array<i64: 256, 128>}, {transform_indices = @transform_2, window_bounds = array<i64: 16, 128>}]} {
    %c0 = arith.constant 0 : index
    %c0_0 = arith.constant 0 : index
    %0 = vector.load %arg3[%c0, %c0_0] : memref<16x256xbf16, #tpu.memory_space<vmem>>, vector<16x256xbf16>
    %c0_1 = arith.constant 0 : index
    %c0_2 = arith.constant 0 : index
    %1 = vector.load %arg4[%c0_1, %c0_2] : memref<256x128xbf16, #tpu.memory_space<vmem>>, vector<256x128xbf16>
    %cst = arith.constant dense<0.000000e+00> : vector<16x128xf32>
    %2 = tpu.matmul %0, %1, %cst {dimension_numbers = #tpu.dot_dimension_numbers<[1], [0], [0], [1], [0, 0, 1, 1], [], []>} : vector<16x256xbf16>, vector<256x128xbf16>, vector<16x128xf32> -> vector<16x128xf32>
    %3 = arith.truncf %2 : vector<16x128xf32> to vector<16x128xbf16>
    %c0_3 = arith.constant 0 : index
    %c0_4 = arith.constant 0 : index
    %4 = vector.load %arg5[%c0_3, %c0_4] : memref<16x128xbf16, #tpu.memory_space<vmem>>, vector<16x128xbf16>
    tpu.vector_store %arg5[%c0_3, %c0_4], %3 {strides = array<i32>} : memref<16x128xbf16, #tpu.memory_space<vmem>>, vector<16x128xbf16>,
    return
  }
  func.func @transform_0(%arg0: i32, %arg1: i32, %arg2: i32) -> (i32, i32) {
    %c0_i32 = arith.constant 0 : i32
    return %arg0, %arg2 : i32, i32
  }
  func.func @transform_1(%arg0: i32, %arg1: i32, %arg2: i32) -> (i32, i32) {
    %c0_i32 = arith.constant 0 : i32
    return %arg2, %arg1 : i32, i32
  }
  func.func @transform_2(%arg0: i32, %arg1: i32, %arg2: i32) -> (i32, i32) {
    %c0_i32 = arith.constant 0 : i32
    return %arg0, %arg1 : i32, i32
  }
}

module attributes {stable_mosaic.version = 11 : i64} {
  func.func @_instnorm_lrelu_kernel(%arg0: i32, %arg1: i32, %arg2: memref<1x16x128xbf16, #tpu.memory_space<vmem>>, %arg3: memref<1x16x128xbf16, #tpu.memory_space<vmem>>) attributes {dimension_semantics = [#tpu.dimension_semantics<parallel>, #tpu.dimension_semantics<parallel>], iteration_bounds = array<i64: 2, 1>, scalar_prefetch = 0 : i64, scratch_operands = 0 : i64, tpu.core_type = #tpu.core_type<tc>, window_params = [{transform_indices = @transform_0, window_bounds = array<i64: 1, 16, 128>}, {transform_indices = @transform_1, window_bounds = array<i64: 1, 16, 128>}]} {
    %c0 = arith.constant 0 : index
    %c0_0 = arith.constant 0 : index
    %c0_1 = arith.constant 0 : index
    %0 = vector.load %arg2[%c0, %c0_0, %c0_1] : memref<1x16x128xbf16, #tpu.memory_space<vmem>>, vector<1x16x128xbf16>
    %1 = arith.extf %0 : vector<1x16x128xbf16> to vector<1x16x128xf32>
    %cst = arith.constant dense<0.000000e+00> : vector<1x128xf32>
    %2 = vector.multi_reduction <add>, %1, %cst [1] : vector<1x16x128xf32> to vector<1x128xf32>
    %3 = vector.shape_cast %2 : vector<1x128xf32> to vector<1x1x128xf32>
    %4 = arith.mulf %1, %1 : vector<1x16x128xf32>
    %cst_2 = arith.constant dense<0.000000e+00> : vector<1x128xf32>
    %5 = vector.multi_reduction <add>, %4, %cst_2 [1] : vector<1x16x128xf32> to vector<1x128xf32>
    %6 = vector.shape_cast %5 : vector<1x128xf32> to vector<1x1x128xf32>
    %cst_3 = arith.constant 6.250000e-02 : f32
    %7 = vector.broadcast %cst_3 : f32 to vector<1x1x128xf32>
    %8 = arith.mulf %3, %7 : vector<1x1x128xf32>
    %cst_4 = arith.constant 6.250000e-02 : f32
    %9 = vector.broadcast %cst_4 : f32 to vector<1x1x128xf32>
    %10 = arith.mulf %6, %9 : vector<1x1x128xf32>
    %11 = arith.mulf %8, %8 : vector<1x1x128xf32>
    %12 = arith.subf %10, %11 : vector<1x1x128xf32>
    %cst_5 = arith.constant 0.000000e+00 : f32
    %13 = vector.broadcast %cst_5 : f32 to vector<1x1x128xf32>
    %14 = arith.maximumf %12, %13 : vector<1x1x128xf32>
    %15 = vector.broadcast %8 : vector<1x1x128xf32> to vector<1x16x128xf32>
    %16 = arith.subf %1, %15 : vector<1x16x128xf32>
    %cst_6 = arith.constant 9.99999974E-6 : f32
    %17 = vector.broadcast %cst_6 : f32 to vector<1x1x128xf32>
    %18 = arith.addf %14, %17 : vector<1x1x128xf32>
    %19 = math.rsqrt %18 : vector<1x1x128xf32>
    %20 = vector.broadcast %19 : vector<1x1x128xf32> to vector<1x16x128xf32>
    %21 = arith.mulf %16, %20 : vector<1x16x128xf32>
    %cst_7 = arith.constant 0.000000e+00 : f32
    %22 = vector.broadcast %cst_7 : f32 to vector<1x16x128xf32>
    %23 = arith.cmpf oge, %21, %22 : vector<1x16x128xf32>
    %cst_8 = arith.constant 2.000000e-01 : f32
    %24 = vector.broadcast %cst_8 : f32 to vector<1x16x128xf32>
    %25 = arith.mulf %24, %21 : vector<1x16x128xf32>
    %26 = arith.select %23, %21, %25 : vector<1x16x128xi1>, vector<1x16x128xf32>
    %27 = arith.truncf %26 : vector<1x16x128xf32> to vector<1x16x128xbf16>
    %c0_9 = arith.constant 0 : index
    %c0_10 = arith.constant 0 : index
    %c0_11 = arith.constant 0 : index
    %28 = vector.load %arg3[%c0_9, %c0_10, %c0_11] : memref<1x16x128xbf16, #tpu.memory_space<vmem>>, vector<1x16x128xbf16>
    tpu.vector_store %arg3[%c0_9, %c0_10, %c0_11], %27 {strides = array<i32>} : memref<1x16x128xbf16, #tpu.memory_space<vmem>>, vector<1x16x128xbf16>,
    return
  }
  func.func @transform_0(%arg0: i32, %arg1: i32) -> (i32, i32, i32) {
    %c0_i32 = arith.constant 0 : i32
    %c0_i32_0 = arith.constant 0 : i32
    return %arg0, %c0_i32, %arg1 : i32, i32, i32
  }
  func.func @transform_1(%arg0: i32, %arg1: i32) -> (i32, i32, i32) {
    %c0_i32 = arith.constant 0 : i32
    %c0_i32_0 = arith.constant 0 : i32
    return %arg0, %c0_i32, %arg1 : i32, i32, i32
  }
}

module attributes {stable_mosaic.version = 11 : i64} {
  func.func @_conv_matmul_kernel(%arg0: i32, %arg1: i32, %arg2: i32, %arg3: memref<32x512xbf16, #tpu.memory_space<vmem>>, %arg4: memref<512x128xbf16, #tpu.memory_space<vmem>>, %arg5: memref<32x128xbf16, #tpu.memory_space<vmem>>) attributes {dimension_semantics = [#tpu.dimension_semantics<parallel>, #tpu.dimension_semantics<parallel>, #tpu.dimension_semantics<arbitrary>], iteration_bounds = array<i64: 1, 1, 1>, scalar_prefetch = 0 : i64, scratch_operands = 0 : i64, tpu.core_type = #tpu.core_type<tc>, window_params = [{transform_indices = @transform_0, window_bounds = array<i64: 32, 512>}, {transform_indices = @transform_1, window_bounds = array<i64: 512, 128>}, {transform_indices = @transform_2, window_bounds = array<i64: 32, 128>}]} {
    %c0 = arith.constant 0 : index
    %c0_0 = arith.constant 0 : index
    %0 = vector.load %arg3[%c0, %c0_0] : memref<32x512xbf16, #tpu.memory_space<vmem>>, vector<32x512xbf16>
    %c0_1 = arith.constant 0 : index
    %c0_2 = arith.constant 0 : index
    %1 = vector.load %arg4[%c0_1, %c0_2] : memref<512x128xbf16, #tpu.memory_space<vmem>>, vector<512x128xbf16>
    %cst = arith.constant dense<0.000000e+00> : vector<32x128xf32>
    %2 = tpu.matmul %0, %1, %cst {dimension_numbers = #tpu.dot_dimension_numbers<[1], [0], [0], [1], [0, 0, 1, 1], [], []>} : vector<32x512xbf16>, vector<512x128xbf16>, vector<32x128xf32> -> vector<32x128xf32>
    %3 = arith.truncf %2 : vector<32x128xf32> to vector<32x128xbf16>
    %c0_3 = arith.constant 0 : index
    %c0_4 = arith.constant 0 : index
    %4 = vector.load %arg5[%c0_3, %c0_4] : memref<32x128xbf16, #tpu.memory_space<vmem>>, vector<32x128xbf16>
    tpu.vector_store %arg5[%c0_3, %c0_4], %3 {strides = array<i32>} : memref<32x128xbf16, #tpu.memory_space<vmem>>, vector<32x128xbf16>,
    return
  }
  func.func @transform_0(%arg0: i32, %arg1: i32, %arg2: i32) -> (i32, i32) {
    %c0_i32 = arith.constant 0 : i32
    return %arg0, %arg2 : i32, i32
  }
  func.func @transform_1(%arg0: i32, %arg1: i32, %arg2: i32) -> (i32, i32) {
    %c0_i32 = arith.constant 0 : i32
    return %arg2, %arg1 : i32, i32
  }
  func.func @transform_2(%arg0: i32, %arg1: i32, %arg2: i32) -> (i32, i32) {
    %c0_i32 = arith.constant 0 : i32
    return %arg0, %arg1 : i32, i32
  }
}

module attributes {stable_mosaic.version = 11 : i64} {
  func.func @_instnorm_lrelu_kernel(%arg0: i32, %arg1: i32, %arg2: memref<1x9x128xbf16, #tpu.memory_space<vmem>>, %arg3: memref<1x9x128xbf16, #tpu.memory_space<vmem>>) attributes {dimension_semantics = [#tpu.dimension_semantics<parallel>, #tpu.dimension_semantics<parallel>], iteration_bounds = array<i64: 2, 1>, scalar_prefetch = 0 : i64, scratch_operands = 0 : i64, tpu.core_type = #tpu.core_type<tc>, window_params = [{transform_indices = @transform_0, window_bounds = array<i64: 1, 9, 128>}, {transform_indices = @transform_1, window_bounds = array<i64: 1, 9, 128>}]} {
    %c0 = arith.constant 0 : index
    %c0_0 = arith.constant 0 : index
    %c0_1 = arith.constant 0 : index
    %0 = vector.load %arg2[%c0, %c0_0, %c0_1] : memref<1x9x128xbf16, #tpu.memory_space<vmem>>, vector<1x9x128xbf16>
    %1 = arith.extf %0 : vector<1x9x128xbf16> to vector<1x9x128xf32>
    %cst = arith.constant dense<0.000000e+00> : vector<1x128xf32>
    %2 = vector.multi_reduction <add>, %1, %cst [1] : vector<1x9x128xf32> to vector<1x128xf32>
    %3 = vector.shape_cast %2 : vector<1x128xf32> to vector<1x1x128xf32>
    %4 = arith.mulf %1, %1 : vector<1x9x128xf32>
    %cst_2 = arith.constant dense<0.000000e+00> : vector<1x128xf32>
    %5 = vector.multi_reduction <add>, %4, %cst_2 [1] : vector<1x9x128xf32> to vector<1x128xf32>
    %6 = vector.shape_cast %5 : vector<1x128xf32> to vector<1x1x128xf32>
    %cst_3 = arith.constant 0.111111112 : f32
    %7 = vector.broadcast %cst_3 : f32 to vector<1x1x128xf32>
    %8 = arith.mulf %3, %7 : vector<1x1x128xf32>
    %cst_4 = arith.constant 0.111111112 : f32
    %9 = vector.broadcast %cst_4 : f32 to vector<1x1x128xf32>
    %10 = arith.mulf %6, %9 : vector<1x1x128xf32>
    %11 = arith.mulf %8, %8 : vector<1x1x128xf32>
    %12 = arith.subf %10, %11 : vector<1x1x128xf32>
    %cst_5 = arith.constant 0.000000e+00 : f32
    %13 = vector.broadcast %cst_5 : f32 to vector<1x1x128xf32>
    %14 = arith.maximumf %12, %13 : vector<1x1x128xf32>
    %15 = vector.broadcast %8 : vector<1x1x128xf32> to vector<1x9x128xf32>
    %16 = arith.subf %1, %15 : vector<1x9x128xf32>
    %cst_6 = arith.constant 9.99999974E-6 : f32
    %17 = vector.broadcast %cst_6 : f32 to vector<1x1x128xf32>
    %18 = arith.addf %14, %17 : vector<1x1x128xf32>
    %19 = math.rsqrt %18 : vector<1x1x128xf32>
    %20 = vector.broadcast %19 : vector<1x1x128xf32> to vector<1x9x128xf32>
    %21 = arith.mulf %16, %20 : vector<1x9x128xf32>
    %cst_7 = arith.constant 0.000000e+00 : f32
    %22 = vector.broadcast %cst_7 : f32 to vector<1x9x128xf32>
    %23 = arith.cmpf oge, %21, %22 : vector<1x9x128xf32>
    %cst_8 = arith.constant 2.000000e-01 : f32
    %24 = vector.broadcast %cst_8 : f32 to vector<1x9x128xf32>
    %25 = arith.mulf %24, %21 : vector<1x9x128xf32>
    %26 = arith.select %23, %21, %25 : vector<1x9x128xi1>, vector<1x9x128xf32>
    %27 = arith.truncf %26 : vector<1x9x128xf32> to vector<1x9x128xbf16>
    %c0_9 = arith.constant 0 : index
    %c0_10 = arith.constant 0 : index
    %c0_11 = arith.constant 0 : index
    %28 = vector.load %arg3[%c0_9, %c0_10, %c0_11] : memref<1x9x128xbf16, #tpu.memory_space<vmem>>, vector<1x9x128xbf16>
    tpu.vector_store %arg3[%c0_9, %c0_10, %c0_11], %27 {strides = array<i32>} : memref<1x9x128xbf16, #tpu.memory_space<vmem>>, vector<1x9x128xbf16>,
    return
  }
  func.func @transform_0(%arg0: i32, %arg1: i32) -> (i32, i32, i32) {
    %c0_i32 = arith.constant 0 : i32
    %c0_i32_0 = arith.constant 0 : i32
    return %arg0, %c0_i32, %arg1 : i32, i32, i32
  }
  func.func @transform_1(%arg0: i32, %arg1: i32) -> (i32, i32, i32) {
    %c0_i32 = arith.constant 0 : i32
    %c0_i32_0 = arith.constant 0 : i32
    return %arg0, %c0_i32, %arg1 : i32, i32, i32
  }
}

module attributes {stable_mosaic.version = 11 : i64} {
  func.func @_conv_matmul_kernel(%arg0: i32, %arg1: i32, %arg2: i32, %arg3: memref<16x1024xbf16, #tpu.memory_space<vmem>>, %arg4: memref<1024x128xbf16, #tpu.memory_space<vmem>>, %arg5: memref<1x128xf32, #tpu.memory_space<vmem>>, %arg6: memref<16x128xbf16, #tpu.memory_space<vmem>>) attributes {dimension_semantics = [#tpu.dimension_semantics<parallel>, #tpu.dimension_semantics<parallel>, #tpu.dimension_semantics<arbitrary>], iteration_bounds = array<i64: 1, 1, 1>, scalar_prefetch = 0 : i64, scratch_operands = 0 : i64, tpu.core_type = #tpu.core_type<tc>, window_params = [{transform_indices = @transform_0, window_bounds = array<i64: 16, 1024>}, {transform_indices = @transform_1, window_bounds = array<i64: 1024, 128>}, {transform_indices = @transform_2, window_bounds = array<i64: 1, 128>}, {transform_indices = @transform_3, window_bounds = array<i64: 16, 128>}]} {
    %c0 = arith.constant 0 : index
    %c0_0 = arith.constant 0 : index
    %0 = vector.load %arg3[%c0, %c0_0] : memref<16x1024xbf16, #tpu.memory_space<vmem>>, vector<16x1024xbf16>
    %c0_1 = arith.constant 0 : index
    %c0_2 = arith.constant 0 : index
    %1 = vector.load %arg4[%c0_1, %c0_2] : memref<1024x128xbf16, #tpu.memory_space<vmem>>, vector<1024x128xbf16>
    %cst = arith.constant dense<0.000000e+00> : vector<16x128xf32>
    %2 = tpu.matmul %0, %1, %cst {dimension_numbers = #tpu.dot_dimension_numbers<[1], [0], [0], [1], [0, 0, 1, 1], [], []>} : vector<16x1024xbf16>, vector<1024x128xbf16>, vector<16x128xf32> -> vector<16x128xf32>
    %c0_3 = arith.constant 0 : index
    %c0_4 = arith.constant 0 : index
    %3 = vector.load %arg5[%c0_3, %c0_4] : memref<1x128xf32, #tpu.memory_space<vmem>>, vector<1x128xf32>
    %4 = vector.broadcast %3 : vector<1x128xf32> to vector<16x128xf32>
    %5 = arith.addf %2, %4 : vector<16x128xf32>
    %6 = arith.truncf %5 : vector<16x128xf32> to vector<16x128xbf16>
    %c0_5 = arith.constant 0 : index
    %c0_6 = arith.constant 0 : index
    %7 = vector.load %arg6[%c0_5, %c0_6] : memref<16x128xbf16, #tpu.memory_space<vmem>>, vector<16x128xbf16>
    tpu.vector_store %arg6[%c0_5, %c0_6], %6 {strides = array<i32>} : memref<16x128xbf16, #tpu.memory_space<vmem>>, vector<16x128xbf16>,
    return
  }
  func.func @transform_0(%arg0: i32, %arg1: i32, %arg2: i32) -> (i32, i32) {
    %c0_i32 = arith.constant 0 : i32
    return %arg0, %arg2 : i32, i32
  }
  func.func @transform_1(%arg0: i32, %arg1: i32, %arg2: i32) -> (i32, i32) {
    %c0_i32 = arith.constant 0 : i32
    return %arg2, %arg1 : i32, i32
  }
  func.func @transform_2(%arg0: i32, %arg1: i32, %arg2: i32) -> (i32, i32) {
    %c0_i32 = arith.constant 0 : i32
    %c0_i32_0 = arith.constant 0 : i32
    return %c0_i32, %arg1 : i32, i32
  }
  func.func @transform_3(%arg0: i32, %arg1: i32, %arg2: i32) -> (i32, i32) {
    %c0_i32 = arith.constant 0 : i32
    return %arg0, %arg1 : i32, i32
  }
}

</mosaic_0001>

<llo_original>
// kernel: adv_discriminator_forward.8
$region0: #{adv_discriminator_forward.8}
  #allocation0 [shape = 'u32[]', space=smem, size = 0x4, offset = 0x4, fixed_abs, tag = 'smem constant byte address 0x4 - core index']
  #allocation1 [shape = 'u32[144,128]{1,0:T(1,128)}', space=vmem, size = 0x12000, scoped, tag = 'internal scratch']
  %s0 = inlined_call_operand.vmem [shape: bf16[512,128], index: 0, kind: input, shape index: {}]
  %s1 = inlined_call_operand.vmem [shape: bf16[128,128], index: 1, kind: input, shape index: {}]
  %s2 = inlined_call_operand.vmem [shape: f32[1,128], index: 2, kind: input, shape index: {}]
  %s3 = inlined_call_operand.vmem [shape: bf16[512,128], index: 3, kind: output, shape index: {}]
  %s4 = sld [smem:[#allocation0]]
  $region45: #{adv_discriminator_forward.8} parent=0
    _
  %s6 = ssub.s32 1, %s4
  %s7 = scalar_select 0, %s6, %s4
  loop: start=0, step=1, limit=4
  $region2: #{adv_discriminator_forward.8} parent=0 // loop_pre_header
    _
  $region3: #{adv_discriminator_forward.8} parent=0 // loop_header
    %s9 = sphi 0, %s13
    %p10 = scmp.ge.s32.totalorder %s9, 4
    %s16 = sphi 0, %s35
    %s17 = sphi 0, %s31
    %s18 = sphi 0, %s27
    %s19 = sphi 0, %s16
    %s20 = sphi 0, %s17
    %s21 = sphi 0, %s18
    %s22 = sphi 0, %s19
    %s23 = sphi 0, %s20
    %s24 = sphi 0, %s21
    %s40 = sphi 0, %s42
    %s43 = sphi 0, %s40
    %s44 = sphi 0, %s43
    %s60 = sphi 0, %s44
    %s68 = sphi 0, %s70
    %s71 = sphi 0, %s68
    %s72 = sphi 0, %s71
    %s88 = sphi 0, %s72
    %s94 = sphi 0, %s96
    %s97 = sphi 0, %s94
    %s98 = sphi 0, %s97
    %s114 = sphi 0, %s98
    %s122 = sphi 0, %s124
    %s125 = sphi 0, %s122
    %s126 = sphi 0, %s125
    %s142 = sphi 0, %s126
  $region4: #{adv_discriminator_forward.8} parent=0 // loop_header_branch
    %12 = sbr.rel (%p10) target = $region8
  $region5: #{adv_discriminator_forward.8} parent=0 // loop_body
    %s14 = ssub.s32 %s9, 1
    %s15 = ssub.s32 %s9, 2
    %s25 = sadd.s32 1, %s18
    %p26 = scmp.ge.s32.totalorder %s25, 1
    %s27 = scalar_select %p26, 0, %s25
    %s28 = sadd.s32 1, %s17
    %s29 = scalar_select %p26, %s28, %s17
    %p30 = scmp.ge.s32.totalorder %s29, 1
    %s31 = scalar_select %p30, 0, %s29
    %s32 = sadd.s32 1, %s16
    %s33 = scalar_select %p30, %s32, %s16
    %p34 = scmp.ge.s32.totalorder %s33, 2
    %s35 = scalar_select %p34, 0, %s33
    %s36 = ssub.s32 %s16, %s35
    %s37 = ssub.s32 %s18, %s27
    %s38 = sor.u32 %s36, %s37
    %p39 = scmp.eq.s32.totalorder %s38, 0
    %s41 = sadd.s32 %s40, 1
    %s42 = scalar_select %p39, %s40, %s41
    %p45 = pneg %p39
    %p46 = scmp.eq.s32.totalorder %s9, 1
    %p47 = por %p45, %p46
    %p48 = scmp.ne.s32.totalorder %s40, %s43
    %p49 = scmp.eq.s32.totalorder %s9, 0
    %p50 = por %p48, %p49
    %p51 = scmp.ne.s32.totalorder %s40, %s43
    %p52 = scmp.eq.s32.totalorder %s14, 1
    %p53 = por %p51, %p52
    %p54 = scmp.ne.s32.totalorder %s43, %s44
    %p55 = scmp.eq.s32.totalorder %s14, 0
    %p56 = por %p54, %p55
    %p57 = scmp.ne.s32.totalorder %s43, %s44
    %p58 = scmp.eq.s32.totalorder %s15, 1
    %p59 = por %p57, %p58
    %p61 = scmp.ne.s32.totalorder %s44, %s60
    %p62 = scmp.eq.s32.totalorder %s15, 0
    %p63 = por %p61, %p62
    %s64 = ssub.s32 %s18, %s27
    %s65 = ssub.s32 %s17, %s31
    %s66 = sor.u32 %s64, %s65
    %p67 = scmp.eq.s32.totalorder %s66, 0
    %s69 = sadd.s32 %s68, 1
    %s70 = scalar_select %p67, %s68, %s69
    %p73 = pneg %p67
    %p74 = scmp.eq.s32.totalorder %s9, 1
    %p75 = por %p73, %p74
    %p76 = scmp.ne.s32.totalorder %s68, %s71
    %p77 = scmp.eq.s32.totalorder %s9, 0
    %p78 = por %p76, %p77
    %p79 = scmp.ne.s32.totalorder %s68, %s71
    %p80 = scmp.eq.s32.totalorder %s14, 1
    %p81 = por %p79, %p80
    %p82 = scmp.ne.s32.totalorder %s71, %s72
    %p83 = scmp.eq.s32.totalorder %s14, 0
    %p84 = por %p82, %p83
    %p85 = scmp.ne.s32.totalorder %s71, %s72
    %p86 = scmp.eq.s32.totalorder %s15, 1
    %p87 = por %p85, %p86
    %p89 = scmp.ne.s32.totalorder %s72, %s88
    %p90 = scmp.eq.s32.totalorder %s15, 0
    %p91 = por %p89, %p90
    %s92 = ssub.s32 %s17, %s31
    %p93 = scmp.eq.s32.totalorder %s92, 0
    %s95 = sadd.s32 %s94, 1
    %s96 = scalar_select %p93, %s94, %s95
    %p99 = pneg %p93
    %p100 = scmp.eq.s32.totalorder %s9, 1
    %p101 = por %p99, %p100
    %p102 = scmp.ne.s32.totalorder %s94, %s97
    %p103 = scmp.eq.s32.totalorder %s9, 0
    %p104 = por %p102, %p103
    %p105 = scmp.ne.s32.totalorder %s94, %s97
    %p106 = scmp.eq.s32.totalorder %s14, 1
    %p107 = por %p105, %p106
    %p108 = scmp.ne.s32.totalorder %s97, %s98
    %p109 = scmp.eq.s32.totalorder %s14, 0
    %p110 = por %p108, %p109
    %p111 = scmp.ne.s32.totalorder %s97, %s98
    %p112 = scmp.eq.s32.totalorder %s15, 1
    %p113 = por %p111, %p112
    %p115 = scmp.ne.s32.totalorder %s98, %s114
    %p116 = scmp.eq.s32.totalorder %s15, 0
    %p117 = por %p115, %p116
    %s118 = ssub.s32 %s16, %s35
    %s119 = ssub.s32 %s17, %s31
    %s120 = sor.u32 %s118, %s119
    %p121 = scmp.eq.s32.totalorder %s120, 0
    %s123 = sadd.s32 %s122, 1
    %s124 = scalar_select %p121, %s122, %s123
    %p127 = pneg %p121
    %p128 = scmp.eq.s32.totalorder %s9, 1
    %p129 = por %p127, %p128
    %p130 = scmp.ne.s32.totalorder %s122, %s125
    %p131 = scmp.eq.s32.totalorder %s9, 0
    %p132 = por %p130, %p131
    %p133 = scmp.ne.s32.totalorder %s122, %s125
    %p134 = scmp.eq.s32.totalorder %s14, 1
    %p135 = por %p133, %p134
    %p136 = scmp.ne.s32.totalorder %s125, %s126
    %p137 = scmp.eq.s32.totalorder %s14, 0
    %p138 = por %p136, %p137
    %p139 = scmp.ne.s32.totalorder %s125, %s126
    %p140 = scmp.eq.s32.totalorder %s15, 1
    %p141 = por %p139, %p140
    %p143 = scmp.ne.s32.totalorder %s126, %s142
    %p144 = scmp.eq.s32.totalorder %s15, 0
    %p145 = por %p143, %p144
    %p146 = scmp.le.s32.totalorder 1, %s9
    %p147 = scmp.lt.s32.totalorder %s9, 3
    %p148 = pnand %p146, %p147
    %p149 = pneg %p148
    // Predicated region
    $region9: #{adv_discriminator_forward.8} parent=5 // pred_check
      _
    $region10: #{adv_discriminator_forward.8} parent=5 // pred_check_branch
      %151 = sbr.rel (%p148) target = $region12
    $region11: #{adv_discriminator_forward.8} parent=5 // pred_region
      %s152 = ssub.s32 %s9, 1
      // Predicated region
      $region13: #{adv_discriminator_forward.8} parent=11 // pred_check
        %p153 = pneg %p84
      $region14: #{adv_discriminator_forward.8} parent=11 // pred_check_branch
        %155 = sbr.rel (%p153) target = $region16
      $region15: #{adv_discriminator_forward.8} parent=11 // pred_region
        %s156 = smul.u32 16, %s21
        %p157 = scmp.lt.s32.totalorder %s156, 15
        %s158 = scalar_select %p157, %s156, 15
        %p159 = scmp.lt.s32.totalorder %s20, 0
        %s160 = scalar_select %p159, %s20, 0
        %s161 = sadd.s32 %s160, %s158
        %s162 = smul.addr %s161, 4
        %s163 = scalar_lea.vmem %s1, %s162
        %s164 = smul.u32 16, %s21
      $region16: #{adv_discriminator_forward.8} parent=11 // pred_fallthru
        _
      // Predicated region
      $region17: #{adv_discriminator_forward.8} parent=11 // pred_check
        %p165 = pneg %p110
      $region18: #{adv_discriminator_forward.8} parent=11 // pred_check_branch
        %167 = sbr.rel (%p165) target = $region20
      $region19: #{adv_discriminator_forward.8} parent=11 // pred_region
        %p168 = scmp.lt.s32.totalorder %s20, 0
        %s169 = scalar_select %p168, %s20, 0
        %s170 = scalar_lea.vmem %s2, %s169
      $region20: #{adv_discriminator_forward.8} parent=11 // pred_fallthru
        _
    $region12: #{adv_discriminator_forward.8} parent=5 // pred_fallthru
      _
    %p171 = scmp.lt.s32.totalorder %s9, 2
    // Predicated region
    $region21: #{adv_discriminator_forward.8} parent=5 // pred_check
      %p172 = pneg %p171
    $region22: #{adv_discriminator_forward.8} parent=5 // pred_check_branch
      %174 = sbr.rel (%p172) target = $region24
    $region23: #{adv_discriminator_forward.8} parent=5 // pred_region
      // Predicated region
      $region25: #{adv_discriminator_forward.8} parent=23 // pred_check
        %p175 = pneg %p50
      $region26: #{adv_discriminator_forward.8} parent=23 // pred_check_branch
        %177 = sbr.rel (%p175) target = $region28
      $region27: #{adv_discriminator_forward.8} parent=23 // pred_region
        %s178 = smul.u32 32, %s16
        %p179 = scmp.lt.s32.totalorder %s178, 63
        %s180 = scalar_select %p179, %s178, 63
        %p181 = scmp.lt.s32.totalorder %s18, 0
        %s182 = scalar_select %p181, %s18, 0
        %s183 = sadd.s32 %s182, %s180
        %s184 = smul.addr %s183, 4
        %s185 = scalar_lea.vmem %s0, %s184
        %s186 = smul.u32 32, %s16
      $region28: #{adv_discriminator_forward.8} parent=23 // pred_fallthru
        _
    $region24: #{adv_discriminator_forward.8} parent=5 // pred_fallthru
      _
    %p187 = scmp.le.s32.totalorder 1, %s9
    %p188 = scmp.lt.s32.totalorder %s9, 3
    %p189 = pnand %p187, %p188
    %p190 = pneg %p189
    // Predicated region
    $region29: #{adv_discriminator_forward.8} parent=5 // pred_check
      _
    $region30: #{adv_discriminator_forward.8} parent=5 // pred_check_branch
      %192 = sbr.rel (%p189) target = $region32
    $region31: #{adv_discriminator_forward.8} parent=5 // pred_region
      %s193 = ssub.s32 %s9, 1
      %s194 = smul.u32 32, %s19
      %p195 = scmp.lt.s32.totalorder %s194, 63
      %s196 = scalar_select %p195, %s194, 63
      %p197 = scmp.lt.s32.totalorder %s21, 0
      %s198 = scalar_select %p197, %s21, 0
      %s199 = sadd.s32 %s198, %s196
      %s200 = smul.addr %s199, 4
      %s201 = scalar_lea.vmem %s0, %s200
      %p202 = pneg %p56
      %p203 = pneg %p53
      %s204 = smul.u32 16, %s21
      %p205 = scmp.lt.s32.totalorder %s204, 15
      %s206 = scalar_select %p205, %s204, 15
      %p207 = scmp.lt.s32.totalorder %s20, 0
      %s208 = scalar_select %p207, %s20, 0
      %s209 = sadd.s32 %s208, %s206
      %s210 = smul.addr %s209, 4
      %s211 = scalar_lea.vmem %s1, %s210
      %p212 = pneg %p84
      %p213 = pneg %p81
      %p214 = scmp.lt.s32.totalorder %s20, 0
      %s215 = scalar_select %p214, %s20, 0
      %s216 = scalar_lea.vmem %s2, %s215
      %p217 = pneg %p110
      %p218 = pneg %p107
      %p219 = pneg %p138
      %p220 = pneg %p135
      %s221 = smul.u32 32, %s19
      %p222 = scmp.lt.s32.totalorder %s221, 63
      %s223 = scalar_select %p222, %s221, 63
      %p224 = scmp.lt.s32.totalorder %s20, 0
      %s225 = scalar_select %p224, %s20, 0
      %s226 = sadd.s32 %s225, %s223
      %s227 = smul.addr %s226, 4
      %s228 = scalar_lea.vmem %s3, %s227
      %s229 = smul.u32 32, %s19
      %p230 = scmp.lt.s32.totalorder %s229, 63
      %s231 = scalar_select %p230, %s229, 63
      %p232 = scmp.lt.s32.totalorder %s21, 0
      %s233 = scalar_select %p232, %s21, 0
      %s234 = sadd.s32 %s233, %s231
      %s235 = smul.addr %s234, 4
      %s236 = scalar_lea.vmem %s0, %s235
      %s237 = smul.u32 32, %s19
      %s238 = smul.u32 16, %s21
      %p239 = scmp.lt.s32.totalorder %s238, 15
      %s240 = scalar_select %p239, %s238, 15
      %p241 = scmp.lt.s32.totalorder %s20, 0
      %s242 = scalar_select %p241, %s20, 0
      %s243 = sadd.s32 %s242, %s240
      %s244 = smul.addr %s243, 4
      %s245 = scalar_lea.vmem %s1, %s244
      %s246 = smul.u32 16, %s21
      %p247 = scmp.lt.s32.totalorder %s20, 0
      %s248 = scalar_select %p247, %s20, 0
      %s249 = scalar_lea.vmem %s2, %s248
      %s250 = smul.u32 32, %s19
      %p251 = scmp.lt.s32.totalorder %s250, 63
      %s252 = scalar_select %p251, %s250, 63
      %p253 = scmp.lt.s32.totalorder %s20, 0
      %s254 = scalar_select %p253, %s20, 0
      %s255 = sadd.s32 %s254, %s252
      %s256 = smul.addr %s255, 4
      %s257 = scalar_lea.vmem %s3, %s256
      %s258 = smul.u32 32, %s19
      %v260 = vld [vmem:[%s236] sm:$0xf]
      %v261 = vld [vmem:[%s236 + $0x4] sm:$0xf]
      %v262 = vld [vmem:[%s236 + $0x8] sm:$0xf]
      %v263 = vld [vmem:[%s236 + $0xc] sm:$0xf]
      %v264 = vld [vmem:[%s236 + $0x10] sm:$0xf]
      %v265 = vld [vmem:[%s236 + $0x14] sm:$0xf]
      %v266 = vld [vmem:[%s236 + $0x18] sm:$0xf]
      %v267 = vld [vmem:[%s236 + $0x1c] sm:$0xf]
      %v268 = vld [vmem:[%s236 + $0x20] sm:$0xf]
      %v269 = vld [vmem:[%s236 + $0x24] sm:$0xf]
      %v270 = vld [vmem:[%s236 + $0x28] sm:$0xf]
      %v271 = vld [vmem:[%s236 + $0x2c] sm:$0xf]
      %v272 = vld [vmem:[%s236 + $0x30] sm:$0xf]
      %v273 = vld [vmem:[%s236 + $0x34] sm:$0xf]
      %v274 = vld [vmem:[%s236 + $0x38] sm:$0xf]
      %v275 = vld [vmem:[%s236 + $0x3c] sm:$0xf]
      %v276 = vld [vmem:[%s236 + $0x40] sm:$0xf]
      %v277 = vld [vmem:[%s236 + $0x44] sm:$0xf]
      %v278 = vld [vmem:[%s236 + $0x48] sm:$0xf]
      %v279 = vld [vmem:[%s236 + $0x4c] sm:$0xf]
      %v280 = vld [vmem:[%s236 + $0x50] sm:$0xf]
      %v281 = vld [vmem:[%s236 + $0x54] sm:$0xf]
      %v282 = vld [vmem:[%s236 + $0x58] sm:$0xf]
      %v283 = vld [vmem:[%s236 + $0x5c] sm:$0xf]
      %v284 = vld [vmem:[%s236 + $0x60] sm:$0xf]
      %v285 = vld [vmem:[%s236 + $0x64] sm:$0xf]
      %v286 = vld [vmem:[%s236 + $0x68] sm:$0xf]
      %v287 = vld [vmem:[%s236 + $0x6c] sm:$0xf]
      %v288 = vld [vmem:[%s236 + $0x70] sm:$0xf]
      %v289 = vld [vmem:[%s236 + $0x74] sm:$0xf]
      %v290 = vld [vmem:[%s236 + $0x78] sm:$0xf]
      %v291 = vld [vmem:[%s236 + $0x7c] sm:$0xf]
      %v292 = vld [vmem:[%s245] sm:$0xf]
      %v293 = vld [vmem:[%s245 + $0x4] sm:$0xf]
      %v294 = vld [vmem:[%s245 + $0x8] sm:$0xf]
      %v295 = vld [vmem:[%s245 + $0xc] sm:$0xf]
      %v296 = vld [vmem:[%s245 + $0x10] sm:$0xf]
      %v297 = vld [vmem:[%s245 + $0x14] sm:$0xf]
      %v298 = vld [vmem:[%s245 + $0x18] sm:$0xf]
      %v299 = vld [vmem:[%s245 + $0x1c] sm:$0xf]
      %v300 = vld [vmem:[%s245 + $0x20] sm:$0xf]
      %v301 = vld [vmem:[%s245 + $0x24] sm:$0xf]
      %v302 = vld [vmem:[%s245 + $0x28] sm:$0xf]
      %v303 = vld [vmem:[%s245 + $0x2c] sm:$0xf]
      %v304 = vld [vmem:[%s245 + $0x30] sm:$0xf]
      %v305 = vld [vmem:[%s245 + $0x34] sm:$0xf]
      %v306 = vld [vmem:[%s245 + $0x38] sm:$0xf]
      %v307 = vld [vmem:[%s245 + $0x3c] sm:$0xf]
      %v308 = vld [vmem:[%s249] sm:$0x1]
      %v310 = vlaneseq
      %v311 = vshrl.u32 %v310, 7
      %v312 = vsub.s32 0, %v311
      %v313 = vrot.slane %v308, %v312
      %v347 = vunpack.c.l.b16 %v260
      %v348 = vunpack.c.l.b16 %v261
      %v349 = vunpack.c.l.b16 %v262
      %v350 = vunpack.c.l.b16 %v263
      %v351 = vunpack.c.l.b16 %v264
      %v352 = vunpack.c.l.b16 %v265
      %v353 = vunpack.c.l.b16 %v266
      %v354 = vunpack.c.l.b16 %v267
      %v355 = vunpack.c.l.b16 %v268
      %v356 = vunpack.c.l.b16 %v269
      %v357 = vunpack.c.l.b16 %v270
      %v358 = vunpack.c.l.b16 %v271
      %v359 = vunpack.c.l.b16 %v272
      %v360 = vunpack.c.l.b16 %v273
      %v361 = vunpack.c.l.b16 %v274
      %v362 = vunpack.c.l.b16 %v275
      %v363 = vunpack.c.l.b16 %v276
      %v364 = vunpack.c.l.b16 %v277
      %v365 = vunpack.c.l.b16 %v278
      %v366 = vunpack.c.l.b16 %v279
      %v367 = vunpack.c.l.b16 %v280
      %v368 = vunpack.c.l.b16 %v281
      %v369 = vunpack.c.l.b16 %v282
      %v370 = vunpack.c.l.b16 %v283
      %v371 = vunpack.c.l.b16 %v284
      %v372 = vunpack.c.l.b16 %v285
      %v373 = vunpack.c.l.b16 %v286
      %v374 = vunpack.c.l.b16 %v287
      %v375 = vunpack.c.l.b16 %v288
      %v376 = vunpack.c.l.b16 %v289
      %v377 = vunpack.c.l.b16 %v290
      %v378 = vunpack.c.l.b16 %v291
      %v379 = vpack.c.b16 %v348, %v347
      %v380 = vpack.c.b16 %v350, %v349
      %v381 = vpack.c.b16 %v352, %v351
      %v382 = vpack.c.b16 %v354, %v353
      %v383 = vpack.c.b16 %v356, %v355
      %v384 = vpack.c.b16 %v358, %v357
      %v385 = vpack.c.b16 %v360, %v359
      %v386 = vpack.c.b16 %v362, %v361
      %v387 = vpack.c.b16 %v364, %v363
      %v388 = vpack.c.b16 %v366, %v365
      %v389 = vpack.c.b16 %v368, %v367
      %v390 = vpack.c.b16 %v370, %v369
      %v391 = vpack.c.b16 %v372, %v371
      %v392 = vpack.c.b16 %v374, %v373
      %v393 = vpack.c.b16 %v376, %v375
      %v394 = vpack.c.b16 %v378, %v377
      %v427 = vunpack.c.l.b16 %v292
      %v428 = vunpack.c.l.b16 %v293
      %v429 = vunpack.c.l.b16 %v294
      %v430 = vunpack.c.l.b16 %v295
      %v431 = vunpack.c.l.b16 %v296
      %v432 = vunpack.c.l.b16 %v297
      %v433 = vunpack.c.l.b16 %v298
      %v434 = vunpack.c.l.b16 %v299
      %v435 = vunpack.c.l.b16 %v300
      %v436 = vunpack.c.l.b16 %v301
      %v437 = vunpack.c.l.b16 %v302
      %v438 = vunpack.c.l.b16 %v303
      %v439 = vunpack.c.l.b16 %v304
      %v440 = vunpack.c.l.b16 %v305
      %v441 = vunpack.c.l.b16 %v306
      %v442 = vunpack.c.l.b16 %v307
      %v443 = vpack.c.b16 %v428, %v427
      %v444 = vpack.c.b16 %v430, %v429
      %v445 = vpack.c.b16 %v432, %v431
      %v446 = vpack.c.b16 %v434, %v433
      %v447 = vpack.c.b16 %v436, %v435
      %v448 = vpack.c.b16 %v438, %v437
      %v449 = vpack.c.b16 %v440, %v439
      %v450 = vpack.c.b16 %v442, %v441
      %459 = vmatprep.subr.bf16.mxu0 0
      %460 = vmatpush1.bf16.msra.mxu0 %v443
      %461 = vmatprep.subr.bf16.mxu0 0
      %462 = vmatpush1.bf16.msra.mxu0 %v444
      %463 = vmatprep.subr.bf16.mxu0 0
      %464 = vmatpush1.bf16.msra.mxu0 %v445
      %465 = vmatprep.subr.bf16.mxu0 0
      %466 = vmatpush1.bf16.msra.mxu0 %v446
      %467 = vmatprep.subr.bf16.mxu0 0
      %468 = vmatpush1.bf16.msra.mxu0 %v447
      %469 = vmatprep.subr.bf16.mxu0 0
      %470 = vmatpush1.bf16.msra.mxu0 %v448
      %471 = vmatprep.subr.bf16.mxu0 0
      %472 = vmatpush1.bf16.msra.mxu0 %v449
      %473 = vmatprep.subr.bf16.mxu0 0
      %474 = vmatpush1.bf16.msra.mxu0 %v450
      %475 = vmatprep.subr.bf16.mxu0 0
      %476 = vmatpush1.bf16.msra.mxu0 0
      %477 = vmatprep.subr.bf16.mxu0 0
      %478 = vmatpush1.bf16.msra.mxu0 0
      %479 = vmatprep.subr.bf16.mxu0 0
      %480 = vmatpush1.bf16.msra.mxu0 0
      %481 = vmatprep.subr.bf16.mxu0 0
      %482 = vmatpush1.bf16.msra.mxu0 0
      %483 = vmatprep.subr.bf16.mxu0 0
      %484 = vmatpush1.bf16.msra.mxu0 0
      %485 = vmatprep.subr.bf16.mxu0 0
      %486 = vmatpush1.bf16.msra.mxu0 0
      %487 = vmatprep.subr.bf16.mxu0 0
      %488 = vmatpush1.bf16.msra.mxu0 0
      %489 = vmatprep.subr.bf16.mxu0 0
      %490 = vmatpush1.bf16.msra.mxu0 0
      %491 = vmatprep.mubr.bf16.mxu0 0
      %492 = vmatmul.mubr.bf16.gmra.mrb[0].mxu0 %v379
      %v493 = vpop.f32.mrb[0].mxu0
      %v494 = vadd.f32 %v313, %v493
      %v495 = vpop.f32.mrb[0].mxu0
      %v496 = vpop.f32.mrb[0].mxu0
      %v497 = vadd.f32 %v313, %v496
      %v498 = vpop.f32.mrb[0].mxu0
      %499 = vmatprep.mubr.bf16.mxu0 0
      %500 = vmatmul.mubr.bf16.gmra.mrb[0].mxu0 %v380
      %v501 = vpop.f32.mrb[0].mxu0
      %v502 = vadd.f32 %v313, %v501
      %v503 = vpop.f32.mrb[0].mxu0
      %v504 = vpop.f32.mrb[0].mxu0
      %v505 = vadd.f32 %v313, %v504
      %v506 = vpop.f32.mrb[0].mxu0
      %507 = vmatprep.mubr.bf16.mxu0 0
      %508 = vmatmul.mubr.bf16.gmra.mrb[0].mxu0 %v381
      %v509 = vpop.f32.mrb[0].mxu0
      %v510 = vadd.f32 %v313, %v509
      %v511 = vpop.f32.mrb[0].mxu0
      %v512 = vpop.f32.mrb[0].mxu0
      %v513 = vadd.f32 %v313, %v512
      %v514 = vpop.f32.mrb[0].mxu0
      %515 = vmatprep.mubr.bf16.mxu0 0
      %516 = vmatmul.mubr.bf16.gmra.mrb[0].mxu0 %v382
      %v517 = vpop.f32.mrb[0].mxu0
      %v518 = vadd.f32 %v313, %v517
      %v519 = vpop.f32.mrb[0].mxu0
      %v520 = vpop.f32.mrb[0].mxu0
      %v521 = vadd.f32 %v313, %v520
      %v522 = vpop.f32.mrb[0].mxu0
      %523 = vmatprep.mubr.bf16.mxu0 0
      %524 = vmatmul.mubr.bf16.gmra.mrb[0].mxu0 %v383
      %v525 = vpop.f32.mrb[0].mxu0
      %v526 = vadd.f32 %v313, %v525
      %v527 = vpop.f32.mrb[0].mxu0
      %v528 = vpop.f32.mrb[0].mxu0
      %v529 = vadd.f32 %v313, %v528
      %v530 = vpop.f32.mrb[0].mxu0
      %531 = vmatprep.mubr.bf16.mxu0 0
      %532 = vmatmul.mubr.bf16.gmra.mrb[0].mxu0 %v384
      %v533 = vpop.f32.mrb[0].mxu0
      %v534 = vadd.f32 %v313, %v533
      %v535 = vpop.f32.mrb[0].mxu0
      %v536 = vpop.f32.mrb[0].mxu0
      %v537 = vadd.f32 %v313, %v536
      %v538 = vpop.f32.mrb[0].mxu0
      %539 = vmatprep.mubr.bf16.mxu0 0
      %540 = vmatmul.mubr.bf16.gmra.mrb[0].mxu0 %v385
      %v541 = vpop.f32.mrb[0].mxu0
      %v542 = vadd.f32 %v313, %v541
      %v543 = vpop.f32.mrb[0].mxu0
      %v544 = vpop.f32.mrb[0].mxu0
      %v545 = vadd.f32 %v313, %v544
      %v546 = vpop.f32.mrb[0].mxu0
      %547 = vmatprep.mubr.bf16.mxu0 0
      %548 = vmatmul.mubr.bf16.gmra.mrb[0].mxu0 %v386
      %v549 = vpop.f32.mrb[0].mxu0
      %v550 = vadd.f32 %v313, %v549
      %v551 = vpop.f32.mrb[0].mxu0
      %v552 = vpop.f32.mrb[0].mxu0
      %v553 = vadd.f32 %v313, %v552
      %v554 = vpop.f32.mrb[0].mxu0
      %555 = vmatprep.mubr.bf16.mxu0 0
      %556 = vmatmul.mubr.bf16.gmra.mrb[0].mxu0 %v387
      %v557 = vpop.f32.mrb[0].mxu0
      %v558 = vadd.f32 %v313, %v557
      %v559 = vpop.f32.mrb[0].mxu0
      %v560 = vpop.f32.mrb[0].mxu0
      %v561 = vadd.f32 %v313, %v560
      %v562 = vpop.f32.mrb[0].mxu0
      %563 = vmatprep.mubr.bf16.mxu0 0
      %564 = vmatmul.mubr.bf16.gmra.mrb[0].mxu0 %v388
      %v565 = vpop.f32.mrb[0].mxu0
      %v566 = vadd.f32 %v313, %v565
      %v567 = vpop.f32.mrb[0].mxu0
      %v568 = vpop.f32.mrb[0].mxu0
      %v569 = vadd.f32 %v313, %v568
      %v570 = vpop.f32.mrb[0].mxu0
      %571 = vmatprep.mubr.bf16.mxu0 0
      %572 = vmatmul.mubr.bf16.gmra.mrb[0].mxu0 %v389
      %v573 = vpop.f32.mrb[0].mxu0
      %v574 = vadd.f32 %v313, %v573
      %v575 = vpop.f32.mrb[0].mxu0
      %v576 = vpop.f32.mrb[0].mxu0
      %v577 = vadd.f32 %v313, %v576
      %v578 = vpop.f32.mrb[0].mxu0
      %579 = vmatprep.mubr.bf16.mxu0 0
      %580 = vmatmul.mubr.bf16.gmra.mrb[0].mxu0 %v390
      %v581 = vpop.f32.mrb[0].mxu0
      %v582 = vadd.f32 %v313, %v581
      %v583 = vpop.f32.mrb[0].mxu0
      %v584 = vpop.f32.mrb[0].mxu0
      %v585 = vadd.f32 %v313, %v584
      %v586 = vpop.f32.mrb[0].mxu0
      %587 = vmatprep.mubr.bf16.mxu0 0
      %588 = vmatmul.mubr.bf16.gmra.mrb[0].mxu0 %v391
      %v589 = vpop.f32.mrb[0].mxu0
      %v590 = vadd.f32 %v313, %v589
      %v591 = vpop.f32.mrb[0].mxu0
      %v592 = vpop.f32.mrb[0].mxu0
      %v593 = vadd.f32 %v313, %v592
      %v594 = vpop.f32.mrb[0].mxu0
      %595 = vmatprep.mubr.bf16.mxu0 0
      %596 = vmatmul.mubr.bf16.gmra.mrb[0].mxu0 %v392
      %v597 = vpop.f32.mrb[0].mxu0
      %v598 = vadd.f32 %v313, %v597
      %v599 = vpop.f32.mrb[0].mxu0
      %v600 = vpop.f32.mrb[0].mxu0
      %v601 = vadd.f32 %v313, %v600
      %v602 = vpop.f32.mrb[0].mxu0
      %603 = vmatprep.mubr.bf16.mxu0 0
      %604 = vmatmul.mubr.bf16.gmra.mrb[0].mxu0 %v393
      %v605 = vpop.f32.mrb[0].mxu0
      %v606 = vadd.f32 %v313, %v605
      %v607 = vpop.f32.mrb[0].mxu0
      %v608 = vpop.f32.mrb[0].mxu0
      %v609 = vadd.f32 %v313, %v608
      %v610 = vpop.f32.mrb[0].mxu0
      %611 = vmatprep.mubr.bf16.mxu0 0
      %612 = vmatmul.mubr.bf16.gmra.mrb[0].mxu0 %v394
      %v613 = vpop.f32.mrb[0].mxu0
      %v614 = vadd.f32 %v313, %v613
      %v615 = vpop.f32.mrb[0].mxu0
      %v616 = vpop.f32.mrb[0].mxu0
      %v617 = vadd.f32 %v313, %v616
      %v618 = vpop.f32.mrb[0].mxu0
      %619 = vdwg.mxu0
      %vm620 = vcmp.ge.f32.partialorder %v494, 0.0
      %vm621 = vcmp.ge.f32.partialorder %v497, 0.0
      %vm622 = vcmp.ge.f32.partialorder %v502, 0.0
      %vm623 = vcmp.ge.f32.partialorder %v505, 0.0
      %vm624 = vcmp.ge.f32.partialorder %v510, 0.0
      %vm625 = vcmp.ge.f32.partialorder %v513, 0.0
      %vm626 = vcmp.ge.f32.partialorder %v518, 0.0
      %vm627 = vcmp.ge.f32.partialorder %v521, 0.0
      %vm628 = vcmp.ge.f32.partialorder %v526, 0.0
      %vm629 = vcmp.ge.f32.partialorder %v529, 0.0
      %vm630 = vcmp.ge.f32.partialorder %v534, 0.0
      %vm631 = vcmp.ge.f32.partialorder %v537, 0.0
      %vm632 = vcmp.ge.f32.partialorder %v542, 0.0
      %vm633 = vcmp.ge.f32.partialorder %v545, 0.0
      %vm634 = vcmp.ge.f32.partialorder %v550, 0.0
      %vm635 = vcmp.ge.f32.partialorder %v553, 0.0
      %vm636 = vcmp.ge.f32.partialorder %v558, 0.0
      %vm637 = vcmp.ge.f32.partialorder %v561, 0.0
      %vm638 = vcmp.ge.f32.partialorder %v566, 0.0
      %vm639 = vcmp.ge.f32.partialorder %v569, 0.0
      %vm640 = vcmp.ge.f32.partialorder %v574, 0.0
      %vm641 = vcmp.ge.f32.partialorder %v577, 0.0
      %vm642 = vcmp.ge.f32.partialorder %v582, 0.0
      %vm643 = vcmp.ge.f32.partialorder %v585, 0.0
      %vm644 = vcmp.ge.f32.partialorder %v590, 0.0
      %vm645 = vcmp.ge.f32.partialorder %v593, 0.0
      %vm646 = vcmp.ge.f32.partialorder %v598, 0.0
      %vm647 = vcmp.ge.f32.partialorder %v601, 0.0
      %vm648 = vcmp.ge.f32.partialorder %v606, 0.0
      %vm649 = vcmp.ge.f32.partialorder %v609, 0.0
      %vm650 = vcmp.ge.f32.partialorder %v614, 0.0
      %vm651 = vcmp.ge.f32.partialorder %v617, 0.0
      %v652 = vmul.f32 %v494, 0.2
      %v653 = vmul.f32 %v497, 0.2
      %v654 = vmul.f32 %v502, 0.2
      %v655 = vmul.f32 %v505, 0.2
      %v656 = vmul.f32 %v510, 0.2
      %v657 = vmul.f32 %v513, 0.2
      %v658 = vmul.f32 %v518, 0.2
      %v659 = vmul.f32 %v521, 0.2
      %v660 = vmul.f32 %v526, 0.2
      %v661 = vmul.f32 %v529, 0.2
      %v662 = vmul.f32 %v534, 0.2
      %v663 = vmul.f32 %v537, 0.2
      %v664 = vmul.f32 %v542, 0.2
      %v665 = vmul.f32 %v545, 0.2
      %v666 = vmul.f32 %v550, 0.2
      %v667 = vmul.f32 %v553, 0.2
      %v668 = vmul.f32 %v558, 0.2
      %v669 = vmul.f32 %v561, 0.2
      %v670 = vmul.f32 %v566, 0.2
      %v671 = vmul.f32 %v569, 0.2
      %v672 = vmul.f32 %v574, 0.2
      %v673 = vmul.f32 %v577, 0.2
      %v674 = vmul.f32 %v582, 0.2
      %v675 = vmul.f32 %v585, 0.2
      %v676 = vmul.f32 %v590, 0.2
      %v677 = vmul.f32 %v593, 0.2
      %v678 = vmul.f32 %v598, 0.2
      %v679 = vmul.f32 %v601, 0.2
      %v680 = vmul.f32 %v606, 0.2
      %v681 = vmul.f32 %v609, 0.2
      %v682 = vmul.f32 %v614, 0.2
      %v683 = vmul.f32 %v617, 0.2
      %v684 = vsel %vm620, %v494, %v652
      %v685 = vsel %vm621, %v497, %v653
      %v686 = vsel %vm622, %v502, %v654
      %v687 = vsel %vm623, %v505, %v655
      %v688 = vsel %vm624, %v510, %v656
      %v689 = vsel %vm625, %v513, %v657
      %v690 = vsel %vm626, %v518, %v658
      %v691 = vsel %vm627, %v521, %v659
      %v692 = vsel %vm628, %v526, %v660
      %v693 = vsel %vm629, %v529, %v661
      %v694 = vsel %vm630, %v534, %v662
      %v695 = vsel %vm631, %v537, %v663
      %v696 = vsel %vm632, %v542, %v664
      %v697 = vsel %vm633, %v545, %v665
      %v698 = vsel %vm634, %v550, %v666
      %v699 = vsel %vm635, %v553, %v667
      %v700 = vsel %vm636, %v558, %v668
      %v701 = vsel %vm637, %v561, %v669
      %v702 = vsel %vm638, %v566, %v670
      %v703 = vsel %vm639, %v569, %v671
      %v704 = vsel %vm640, %v574, %v672
      %v705 = vsel %vm641, %v577, %v673
      %v706 = vsel %vm642, %v582, %v674
      %v707 = vsel %vm643, %v585, %v675
      %v708 = vsel %vm644, %v590, %v676
      %v709 = vsel %vm645, %v593, %v677
      %v710 = vsel %vm646, %v598, %v678
      %v711 = vsel %vm647, %v601, %v679
      %v712 = vsel %vm648, %v606, %v680
      %v713 = vsel %vm649, %v609, %v681
      %v714 = vsel %vm650, %v614, %v682
      %v715 = vsel %vm651, %v617, %v683
      %v716 = vpack.c.bf16 %v685, %v684
      %v717 = vpack.c.bf16 %v687, %v686
      %v718 = vpack.c.bf16 %v689, %v688
      %v719 = vpack.c.bf16 %v691, %v690
      %v720 = vpack.c.bf16 %v693, %v692
      %v721 = vpack.c.bf16 %v695, %v694
      %v722 = vpack.c.bf16 %v697, %v696
      %v723 = vpack.c.bf16 %v699, %v698
      %v724 = vpack.c.bf16 %v701, %v700
      %v725 = vpack.c.bf16 %v703, %v702
      %v726 = vpack.c.bf16 %v705, %v704
      %v727 = vpack.c.bf16 %v707, %v706
      %v728 = vpack.c.bf16 %v709, %v708
      %v729 = vpack.c.bf16 %v711, %v710
      %v730 = vpack.c.bf16 %v713, %v712
      %v731 = vpack.c.bf16 %v715, %v714
      %v748 = vunpack.c.l.b16 %v716
      %v749 = vunpack.c.h.b16 %v716
      %v750 = vunpack.c.l.b16 %v717
      %v751 = vunpack.c.h.b16 %v717
      %v752 = vunpack.c.l.b16 %v718
      %v753 = vunpack.c.h.b16 %v718
      %v754 = vunpack.c.l.b16 %v719
      %v755 = vunpack.c.h.b16 %v719
      %v756 = vunpack.c.l.b16 %v720
      %v757 = vunpack.c.h.b16 %v720
      %v758 = vunpack.c.l.b16 %v721
      %v759 = vunpack.c.h.b16 %v721
      %v760 = vunpack.c.l.b16 %v722
      %v761 = vunpack.c.h.b16 %v722
      %v762 = vunpack.c.l.b16 %v723
      %v763 = vunpack.c.h.b16 %v723
      %v764 = vunpack.c.l.b16 %v724
      %v765 = vunpack.c.h.b16 %v724
      %v766 = vunpack.c.l.b16 %v725
      %v767 = vunpack.c.h.b16 %v725
      %v768 = vunpack.c.l.b16 %v726
      %v769 = vunpack.c.h.b16 %v726
      %v770 = vunpack.c.l.b16 %v727
      %v771 = vunpack.c.h.b16 %v727
      %v772 = vunpack.c.l.b16 %v728
      %v773 = vunpack.c.h.b16 %v728
      %v774 = vunpack.c.l.b16 %v729
      %v775 = vunpack.c.h.b16 %v729
      %v776 = vunpack.c.l.b16 %v730
      %v777 = vunpack.c.h.b16 %v730
      %v778 = vunpack.c.l.b16 %v731
      %v779 = vunpack.c.h.b16 %v731
      %v780 = vpack.c.b16 %v748, %v748
      %v781 = vpack.c.b16 %v749, %v749
      %v782 = vpack.c.b16 %v750, %v750
      %v783 = vpack.c.b16 %v751, %v751
      %v784 = vpack.c.b16 %v752, %v752
      %v785 = vpack.c.b16 %v753, %v753
      %v786 = vpack.c.b16 %v754, %v754
      %v787 = vpack.c.b16 %v755, %v755
      %v788 = vpack.c.b16 %v756, %v756
      %v789 = vpack.c.b16 %v757, %v757
      %v790 = vpack.c.b16 %v758, %v758
      %v791 = vpack.c.b16 %v759, %v759
      %v792 = vpack.c.b16 %v760, %v760
      %v793 = vpack.c.b16 %v761, %v761
      %v794 = vpack.c.b16 %v762, %v762
      %v795 = vpack.c.b16 %v763, %v763
      %v796 = vpack.c.b16 %v764, %v764
      %v797 = vpack.c.b16 %v765, %v765
      %v798 = vpack.c.b16 %v766, %v766
      %v799 = vpack.c.b16 %v767, %v767
      %v800 = vpack.c.b16 %v768, %v768
      %v801 = vpack.c.b16 %v769, %v769
      %v802 = vpack.c.b16 %v770, %v770
      %v803 = vpack.c.b16 %v771, %v771
      %v804 = vpack.c.b16 %v772, %v772
      %v805 = vpack.c.b16 %v773, %v773
      %v806 = vpack.c.b16 %v774, %v774
      %v807 = vpack.c.b16 %v775, %v775
      %v808 = vpack.c.b16 %v776, %v776
      %v809 = vpack.c.b16 %v777, %v777
      %v810 = vpack.c.b16 %v778, %v778
      %v811 = vpack.c.b16 %v779, %v779
      %844 = vst [vmem:[%s257] sm:$0xf] %v780
      %845 = vst [vmem:[%s257 + $0x4] sm:$0xf] %v781
      %846 = vst [vmem:[%s257 + $0x8] sm:$0xf] %v782
      %847 = vst [vmem:[%s257 + $0xc] sm:$0xf] %v783
      %848 = vst [vmem:[%s257 + $0x10] sm:$0xf] %v784
      %849 = vst [vmem:[%s257 + $0x14] sm:$0xf] %v785
      %850 = vst [vmem:[%s257 + $0x18] sm:$0xf] %v786
      %851 = vst [vmem:[%s257 + $0x1c] sm:$0xf] %v787
      %852 = vst [vmem:[%s257 + $0x20] sm:$0xf] %v788
      %853 = vst [vmem:[%s257 + $0x24] sm:$0xf] %v789
      %854 = vst [vmem:[%s257 + $0x28] sm:$0xf] %v790
      %855 = vst [vmem:[%s257 + $0x2c] sm:$0xf] %v791
      %856 = vst [vmem:[%s257 + $0x30] sm:$0xf] %v792
      %857 = vst [vmem:[%s257 + $0x34] sm:$0xf] %v793
      %858 = vst [vmem:[%s257 + $0x38] sm:$0xf] %v794
      %859 = vst [vmem:[%s257 + $0x3c] sm:$0xf] %v795
      %860 = vst [vmem:[%s257 + $0x40] sm:$0xf] %v796
      %861 = vst [vmem:[%s257 + $0x44] sm:$0xf] %v797
      %862 = vst [vmem:[%s257 + $0x48] sm:$0xf] %v798
      %863 = vst [vmem:[%s257 + $0x4c] sm:$0xf] %v799
      %864 = vst [vmem:[%s257 + $0x50] sm:$0xf] %v800
      %865 = vst [vmem:[%s257 + $0x54] sm:$0xf] %v801
      %866 = vst [vmem:[%s257 + $0x58] sm:$0xf] %v802
      %867 = vst [vmem:[%s257 + $0x5c] sm:$0xf] %v803
      %868 = vst [vmem:[%s257 + $0x60] sm:$0xf] %v804
      %869 = vst [vmem:[%s257 + $0x64] sm:$0xf] %v805
      %870 = vst [vmem:[%s257 + $0x68] sm:$0xf] %v806
      %871 = vst [vmem:[%s257 + $0x6c] sm:$0xf] %v807
      %872 = vst [vmem:[%s257 + $0x70] sm:$0xf] %v808
      %873 = vst [vmem:[%s257 + $0x74] sm:$0xf] %v809
      %874 = vst [vmem:[%s257 + $0x78] sm:$0xf] %v810
      %875 = vst [vmem:[%s257 + $0x7c] sm:$0xf] %v811
      %s876 = smul.u32 32, %s19
      %p877 = scmp.lt.s32.totalorder %s876, 63
      %s878 = scalar_select %p877, %s876, 63
      %p879 = scmp.lt.s32.totalorder %s20, 0
      %s880 = scalar_select %p879, %s20, 0
      %s881 = sadd.s32 %s880, %s878
      %s882 = smul.addr %s881, 4
      %s883 = scalar_lea.vmem %s3, %s882
      // Predicated region
      $region33: #{adv_discriminator_forward.8} parent=31 // pred_check
        %p884 = pneg %p135
      $region34: #{adv_discriminator_forward.8} parent=31 // pred_check_branch
        %886 = sbr.rel (%p884) target = $region36
      $region35: #{adv_discriminator_forward.8} parent=31 // pred_region
        %s887 = smul.u32 32, %s19
      $region36: #{adv_discriminator_forward.8} parent=31 // pred_fallthru
        _
    $region32: #{adv_discriminator_forward.8} parent=5 // pred_fallthru
      _
    %p888 = scmp.le.s32.totalorder 2, %s9
    // Predicated region
    $region37: #{adv_discriminator_forward.8} parent=5 // pred_check
      %p889 = pneg %p888
    $region38: #{adv_discriminator_forward.8} parent=5 // pred_check_branch
      %891 = sbr.rel (%p889) target = $region40
    $region39: #{adv_discriminator_forward.8} parent=5 // pred_region
      %s892 = ssub.s32 %s9, 2
      // Predicated region
      $region41: #{adv_discriminator_forward.8} parent=39 // pred_check
        %p893 = pneg %p141
      $region42: #{adv_discriminator_forward.8} parent=39 // pred_check_branch
        %895 = sbr.rel (%p893) target = $region44
      $region43: #{adv_discriminator_forward.8} parent=39 // pred_region
        %s896 = smul.u32 32, %s22
        %p897 = scmp.lt.s32.totalorder %s896, 63
        %s898 = scalar_select %p897, %s896, 63
        %p899 = scmp.lt.s32.totalorder %s23, 0
        %s900 = scalar_select %p899, %s23, 0
        %s901 = sadd.s32 %s900, %s898
        %s902 = smul.addr %s901, 4
        %s903 = scalar_lea.vmem %s3, %s902
      $region44: #{adv_discriminator_forward.8} parent=39 // pred_fallthru
        _
    $region40: #{adv_discriminator_forward.8} parent=5 // pred_fallthru
      _
  $region6: #{adv_discriminator_forward.8} parent=0 // loop_footer
    %s13 = sadd.s32 1, %s9
  $region7: #{adv_discriminator_forward.8} parent=0 // loop_footer_branch
    %8 = sbr.rel target = $region3
  $region8: #{adv_discriminator_forward.8} parent=0 // loop_exit
    _

// kernel: adv_discriminator_forward.9
$region0: #{adv_discriminator_forward.9}
  #allocation0 [shape = 'u32[]', space=smem, size = 0x4, offset = 0x4, fixed_abs, tag = 'smem constant byte address 0x4 - core index']
  #allocation1 [shape = 'u32[144,128]{1,0:T(1,128)}', space=vmem, size = 0x12000, scoped, tag = 'internal scratch']
  %s0 = inlined_call_operand.vmem [shape: bf16[128,128], index: 0, kind: input, shape index: {}]
  %s1 = inlined_call_operand.vmem [shape: bf16[128,128], index: 1, kind: input, shape index: {}]
  %s2 = inlined_call_operand.vmem [shape: bf16[128,128], index: 2, kind: output, shape index: {}]
  %s3 = sld [smem:[#allocation0]]
  $region41: #{adv_discriminator_forward.9} parent=0
    _
  %s5 = ssub.s32 1, %s3
  %s6 = scalar_select 0, %s5, %s3
  loop: start=0, step=1, limit=4
  $region2: #{adv_discriminator_forward.9} parent=0 // loop_pre_header
    _
  $region3: #{adv_discriminator_forward.9} parent=0 // loop_header
    %s8 = sphi 0, %s12
    %p9 = scmp.ge.s32.totalorder %s8, 4
    %s15 = sphi 0, %s34
    %s16 = sphi 0, %s30
    %s17 = sphi 0, %s26
    %s18 = sphi 0, %s15
    %s19 = sphi 0, %s16
    %s20 = sphi 0, %s17
    %s21 = sphi 0, %s18
    %s22 = sphi 0, %s19
    %s23 = sphi 0, %s20
    %s39 = sphi 0, %s41
    %s42 = sphi 0, %s39
    %s43 = sphi 0, %s42
    %s59 = sphi 0, %s43
    %s67 = sphi 0, %s69
    %s70 = sphi 0, %s67
    %s71 = sphi 0, %s70
    %s87 = sphi 0, %s71
    %s95 = sphi 0, %s97
    %s98 = sphi 0, %s95
    %s99 = sphi 0, %s98
    %s115 = sphi 0, %s99
  $region4: #{adv_discriminator_forward.9} parent=0 // loop_header_branch
    %11 = sbr.rel (%p9) target = $region8
  $region5: #{adv_discriminator_forward.9} parent=0 // loop_body
    %s13 = ssub.s32 %s8, 1
    %s14 = ssub.s32 %s8, 2
    %s24 = sadd.s32 1, %s17
    %p25 = scmp.ge.s32.totalorder %s24, 1
    %s26 = scalar_select %p25, 0, %s24
    %s27 = sadd.s32 1, %s16
    %s28 = scalar_select %p25, %s27, %s16
    %p29 = scmp.ge.s32.totalorder %s28, 1
    %s30 = scalar_select %p29, 0, %s28
    %s31 = sadd.s32 1, %s15
    %s32 = scalar_select %p29, %s31, %s15
    %p33 = scmp.ge.s32.totalorder %s32, 2
    %s34 = scalar_select %p33, 0, %s32
    %s35 = ssub.s32 %s15, %s34
    %s36 = ssub.s32 %s17, %s26
    %s37 = sor.u32 %s35, %s36
    %p38 = scmp.eq.s32.totalorder %s37, 0
    %s40 = sadd.s32 %s39, 1
    %s41 = scalar_select %p38, %s39, %s40
    %p44 = pneg %p38
    %p45 = scmp.eq.s32.totalorder %s8, 1
    %p46 = por %p44, %p45
    %p47 = scmp.ne.s32.totalorder %s39, %s42
    %p48 = scmp.eq.s32.totalorder %s8, 0
    %p49 = por %p47, %p48
    %p50 = scmp.ne.s32.totalorder %s39, %s42
    %p51 = scmp.eq.s32.totalorder %s13, 1
    %p52 = por %p50, %p51
    %p53 = scmp.ne.s32.totalorder %s42, %s43
    %p54 = scmp.eq.s32.totalorder %s13, 0
    %p55 = por %p53, %p54
    %p56 = scmp.ne.s32.totalorder %s42, %s43
    %p57 = scmp.eq.s32.totalorder %s14, 1
    %p58 = por %p56, %p57
    %p60 = scmp.ne.s32.totalorder %s43, %s59
    %p61 = scmp.eq.s32.totalorder %s14, 0
    %p62 = por %p60, %p61
    %s63 = ssub.s32 %s17, %s26
    %s64 = ssub.s32 %s16, %s30
    %s65 = sor.u32 %s63, %s64
    %p66 = scmp.eq.s32.totalorder %s65, 0
    %s68 = sadd.s32 %s67, 1
    %s69 = scalar_select %p66, %s67, %s68
    %p72 = pneg %p66
    %p73 = scmp.eq.s32.totalorder %s8, 1
    %p74 = por %p72, %p73
    %p75 = scmp.ne.s32.totalorder %s67, %s70
    %p76 = scmp.eq.s32.totalorder %s8, 0
    %p77 = por %p75, %p76
    %p78 = scmp.ne.s32.totalorder %s67, %s70
    %p79 = scmp.eq.s32.totalorder %s13, 1
    %p80 = por %p78, %p79
    %p81 = scmp.ne.s32.totalorder %s70, %s71
    %p82 = scmp.eq.s32.totalorder %s13, 0
    %p83 = por %p81, %p82
    %p84 = scmp.ne.s32.totalorder %s70, %s71
    %p85 = scmp.eq.s32.totalorder %s14, 1
    %p86 = por %p84, %p85
    %p88 = scmp.ne.s32.totalorder %s71, %s87
    %p89 = scmp.eq.s32.totalorder %s14, 0
    %p90 = por %p88, %p89
    %s91 = ssub.s32 %s15, %s34
    %s92 = ssub.s32 %s16, %s30
    %s93 = sor.u32 %s91, %s92
    %p94 = scmp.eq.s32.totalorder %s93, 0
    %s96 = sadd.s32 %s95, 1
    %s97 = scalar_select %p94, %s95, %s96
    %p100 = pneg %p94
    %p101 = scmp.eq.s32.totalorder %s8, 1
    %p102 = por %p100, %p101
    %p103 = scmp.ne.s32.totalorder %s95, %s98
    %p104 = scmp.eq.s32.totalorder %s8, 0
    %p105 = por %p103, %p104
    %p106 = scmp.ne.s32.totalorder %s95, %s98
    %p107 = scmp.eq.s32.totalorder %s13, 1
    %p108 = por %p106, %p107
    %p109 = scmp.ne.s32.totalorder %s98, %s99
    %p110 = scmp.eq.s32.totalorder %s13, 0
    %p111 = por %p109, %p110
    %p112 = scmp.ne.s32.totalorder %s98, %s99
    %p113 = scmp.eq.s32.totalorder %s14, 1
    %p114 = por %p112, %p113
    %p116 = scmp.ne.s32.totalorder %s99, %s115
    %p117 = scmp.eq.s32.totalorder %s14, 0
    %p118 = por %p116, %p117
    %p119 = scmp.le.s32.totalorder 1, %s8
    %p120 = scmp.lt.s32.totalorder %s8, 3
    %p121 = pnand %p119, %p120
    %p122 = pneg %p121
    // Predicated region
    $region9: #{adv_discriminator_forward.9} parent=5 // pred_check
      _
    $region10: #{adv_discriminator_forward.9} parent=5 // pred_check_branch
      %124 = sbr.rel (%p121) target = $region12
    $region11: #{adv_discriminator_forward.9} parent=5 // pred_region
      %s125 = ssub.s32 %s8, 1
      // Predicated region
      $region13: #{adv_discriminator_forward.9} parent=11 // pred_check
        %p126 = pneg %p83
      $region14: #{adv_discriminator_forward.9} parent=11 // pred_check_branch
        %128 = sbr.rel (%p126) target = $region16
      $region15: #{adv_discriminator_forward.9} parent=11 // pred_region
        %s129 = smul.u32 16, %s20
        %p130 = scmp.lt.s32.totalorder %s129, 15
        %s131 = scalar_select %p130, %s129, 15
        %p132 = scmp.lt.s32.totalorder %s19, 0
        %s133 = scalar_select %p132, %s19, 0
        %s134 = sadd.s32 %s133, %s131
        %s135 = smul.addr %s134, 4
        %s136 = scalar_lea.vmem %s1, %s135
        %s137 = smul.u32 16, %s20
      $region16: #{adv_discriminator_forward.9} parent=11 // pred_fallthru
        _
    $region12: #{adv_discriminator_forward.9} parent=5 // pred_fallthru
      _
    %p138 = scmp.lt.s32.totalorder %s8, 2
    // Predicated region
    $region17: #{adv_discriminator_forward.9} parent=5 // pred_check
      %p139 = pneg %p138
    $region18: #{adv_discriminator_forward.9} parent=5 // pred_check_branch
      %141 = sbr.rel (%p139) target = $region20
    $region19: #{adv_discriminator_forward.9} parent=5 // pred_region
      // Predicated region
      $region21: #{adv_discriminator_forward.9} parent=19 // pred_check
        %p142 = pneg %p49
      $region22: #{adv_discriminator_forward.9} parent=19 // pred_check_branch
        %144 = sbr.rel (%p142) target = $region24
      $region23: #{adv_discriminator_forward.9} parent=19 // pred_region
        %s145 = smul.u32 8, %s15
        %p146 = scmp.lt.s32.totalorder %s145, 15
        %s147 = scalar_select %p146, %s145, 15
        %p148 = scmp.lt.s32.totalorder %s17, 0
        %s149 = scalar_select %p148, %s17, 0
        %s150 = sadd.s32 %s149, %s147
        %s151 = smul.addr %s150, 4
        %s152 = scalar_lea.vmem %s0, %s151
        %s153 = smul.u32 8, %s15
      $region24: #{adv_discriminator_forward.9} parent=19 // pred_fallthru
        _
    $region20: #{adv_discriminator_forward.9} parent=5 // pred_fallthru
      _
    %p154 = scmp.le.s32.totalorder 1, %s8
    %p155 = scmp.lt.s32.totalorder %s8, 3
    %p156 = pnand %p154, %p155
    %p157 = pneg %p156
    // Predicated region
    $region25: #{adv_discriminator_forward.9} parent=5 // pred_check
      _
    $region26: #{adv_discriminator_forward.9} parent=5 // pred_check_branch
      %159 = sbr.rel (%p156) target = $region28
    $region27: #{adv_discriminator_forward.9} parent=5 // pred_region
      %s160 = ssub.s32 %s8, 1
      %s161 = smul.u32 8, %s18
      %p162 = scmp.lt.s32.totalorder %s161, 15
      %s163 = scalar_select %p162, %s161, 15
      %p164 = scmp.lt.s32.totalorder %s20, 0
      %s165 = scalar_select %p164, %s20, 0
      %s166 = sadd.s32 %s165, %s163
      %s167 = smul.addr %s166, 4
      %s168 = scalar_lea.vmem %s0, %s167
      %p169 = pneg %p55
      %p170 = pneg %p52
      %s171 = smul.u32 16, %s20
      %p172 = scmp.lt.s32.totalorder %s171, 15
      %s173 = scalar_select %p172, %s171, 15
      %p174 = scmp.lt.s32.totalorder %s19, 0
      %s175 = scalar_select %p174, %s19, 0
      %s176 = sadd.s32 %s175, %s173
      %s177 = smul.addr %s176, 4
      %s178 = scalar_lea.vmem %s1, %s177
      %p179 = pneg %p83
      %p180 = pneg %p80
      %p181 = pneg %p111
      %p182 = pneg %p108
      %s183 = smul.u32 8, %s18
      %p184 = scmp.lt.s32.totalorder %s183, 15
      %s185 = scalar_select %p184, %s183, 15
      %p186 = scmp.lt.s32.totalorder %s19, 0
      %s187 = scalar_select %p186, %s19, 0
      %s188 = sadd.s32 %s187, %s185
      %s189 = smul.addr %s188, 4
      %s190 = scalar_lea.vmem %s2, %s189
      %s191 = smul.u32 8, %s18
      %p192 = scmp.lt.s32.totalorder %s191, 15
      %s193 = scalar_select %p192, %s191, 15
      %p194 = scmp.lt.s32.totalorder %s20, 0
      %s195 = scalar_select %p194, %s20, 0
      %s196 = sadd.s32 %s195, %s193
      %s197 = smul.addr %s196, 4
      %s198 = scalar_lea.vmem %s0, %s197
      %s199 = smul.u32 8, %s18
      %s200 = smul.u32 16, %s20
      %p201 = scmp.lt.s32.totalorder %s200, 15
      %s202 = scalar_select %p201, %s200, 15
      %p203 = scmp.lt.s32.totalorder %s19, 0
      %s204 = scalar_select %p203, %s19, 0
      %s205 = sadd.s32 %s204, %s202
      %s206 = smul.addr %s205, 4
      %s207 = scalar_lea.vmem %s1, %s206
      %s208 = smul.u32 16, %s20
      %s209 = smul.u32 8, %s18
      %p210 = scmp.lt.s32.totalorder %s209, 15
      %s211 = scalar_select %p210, %s209, 15
      %p212 = scmp.lt.s32.totalorder %s19, 0
      %s213 = scalar_select %p212, %s19, 0
      %s214 = sadd.s32 %s213, %s211
      %s215 = smul.addr %s214, 4
      %s216 = scalar_lea.vmem %s2, %s215
      %s217 = smul.u32 8, %s18
      %v219 = vld [vmem:[%s198] sm:$0xf]
      %v220 = vld [vmem:[%s198 + $0x4] sm:$0xf]
      %v221 = vld [vmem:[%s198 + $0x8] sm:$0xf]
      %v222 = vld [vmem:[%s198 + $0xc] sm:$0xf]
      %v223 = vld [vmem:[%s198 + $0x10] sm:$0xf]
      %v224 = vld [vmem:[%s198 + $0x14] sm:$0xf]
      %v225 = vld [vmem:[%s198 + $0x18] sm:$0xf]
      %v226 = vld [vmem:[%s198 + $0x1c] sm:$0xf]
      %v227 = vld [vmem:[%s207] sm:$0xf]
      %v228 = vld [vmem:[%s207 + $0x4] sm:$0xf]
      %v229 = vld [vmem:[%s207 + $0x8] sm:$0xf]
      %v230 = vld [vmem:[%s207 + $0xc] sm:$0xf]
      %v231 = vld [vmem:[%s207 + $0x10] sm:$0xf]
      %v232 = vld [vmem:[%s207 + $0x14] sm:$0xf]
      %v233 = vld [vmem:[%s207 + $0x18] sm:$0xf]
      %v234 = vld [vmem:[%s207 + $0x1c] sm:$0xf]
      %v235 = vld [vmem:[%s207 + $0x20] sm:$0xf]
      %v236 = vld [vmem:[%s207 + $0x24] sm:$0xf]
      %v237 = vld [vmem:[%s207 + $0x28] sm:$0xf]
      %v238 = vld [vmem:[%s207 + $0x2c] sm:$0xf]
      %v239 = vld [vmem:[%s207 + $0x30] sm:$0xf]
      %v240 = vld [vmem:[%s207 + $0x34] sm:$0xf]
      %v241 = vld [vmem:[%s207 + $0x38] sm:$0xf]
      %v242 = vld [vmem:[%s207 + $0x3c] sm:$0xf]
      %v251 = vunpack.c.l.b16 %v219
      %v252 = vunpack.c.l.b16 %v220
      %v253 = vunpack.c.l.b16 %v221
      %v254 = vunpack.c.l.b16 %v222
      %v255 = vunpack.c.l.b16 %v223
      %v256 = vunpack.c.l.b16 %v224
      %v257 = vunpack.c.l.b16 %v225
      %v258 = vunpack.c.l.b16 %v226
      %v259 = vpack.c.b16 %v252, %v251
      %v260 = vpack.c.b16 %v254, %v253
      %v261 = vpack.c.b16 %v256, %v255
      %v262 = vpack.c.b16 %v258, %v257
      %v283 = vunpack.c.l.b16 %v227
      %v284 = vunpack.c.l.b16 %v228
      %v285 = vunpack.c.l.b16 %v229
      %v286 = vunpack.c.l.b16 %v230
      %v287 = vunpack.c.l.b16 %v231
      %v288 = vunpack.c.l.b16 %v232
      %v289 = vunpack.c.l.b16 %v233
      %v290 = vunpack.c.l.b16 %v234
      %v291 = vunpack.c.l.b16 %v235
      %v292 = vunpack.c.l.b16 %v236
      %v293 = vunpack.c.l.b16 %v237
      %v294 = vunpack.c.l.b16 %v238
      %v295 = vunpack.c.l.b16 %v239
      %v296 = vunpack.c.l.b16 %v240
      %v297 = vunpack.c.l.b16 %v241
      %v298 = vunpack.c.l.b16 %v242
      %v299 = vpack.c.b16 %v284, %v283
      %v300 = vpack.c.b16 %v286, %v285
      %v301 = vpack.c.b16 %v288, %v287
      %v302 = vpack.c.b16 %v290, %v289
      %v303 = vpack.c.b16 %v292, %v291
      %v304 = vpack.c.b16 %v294, %v293
      %v305 = vpack.c.b16 %v296, %v295
      %v306 = vpack.c.b16 %v298, %v297
      %315 = vmatprep.subr.bf16.mxu0 0
      %316 = vmatpush1.bf16.msra.mxu0 %v299
      %317 = vmatprep.subr.bf16.mxu0 0
      %318 = vmatpush1.bf16.msra.mxu0 %v300
      %319 = vmatprep.subr.bf16.mxu0 0
      %320 = vmatpush1.bf16.msra.mxu0 %v301
      %321 = vmatprep.subr.bf16.mxu0 0
      %322 = vmatpush1.bf16.msra.mxu0 %v302
      %323 = vmatprep.subr.bf16.mxu0 0
      %324 = vmatpush1.bf16.msra.mxu0 %v303
      %325 = vmatprep.subr.bf16.mxu0 0
      %326 = vmatpush1.bf16.msra.mxu0 %v304
      %327 = vmatprep.subr.bf16.mxu0 0
      %328 = vmatpush1.bf16.msra.mxu0 %v305
      %329 = vmatprep.subr.bf16.mxu0 0
      %330 = vmatpush1.bf16.msra.mxu0 %v306
      %331 = vmatprep.subr.bf16.mxu0 0
      %332 = vmatpush1.bf16.msra.mxu0 0
      %333 = vmatprep.subr.bf16.mxu0 0
      %334 = vmatpush1.bf16.msra.mxu0 0
      %335 = vmatprep.subr.bf16.mxu0 0
      %336 = vmatpush1.bf16.msra.mxu0 0
      %337 = vmatprep.subr.bf16.mxu0 0
      %338 = vmatpush1.bf16.msra.mxu0 0
      %339 = vmatprep.subr.bf16.mxu0 0
      %340 = vmatpush1.bf16.msra.mxu0 0
      %341 = vmatprep.subr.bf16.mxu0 0
      %342 = vmatpush1.bf16.msra.mxu0 0
      %343 = vmatprep.subr.bf16.mxu0 0
      %344 = vmatpush1.bf16.msra.mxu0 0
      %345 = vmatprep.subr.bf16.mxu0 0
      %346 = vmatpush1.bf16.msra.mxu0 0
      %347 = vmatprep.mubr.bf16.mxu0 0
      %348 = vmatmul.mubr.bf16.gmra.mrb[0].mxu0 %v259
      %v349 = vpop.f32.mrb[0].mxu0
      %v350 = vadd.f32 0.0, %v349
      %v351 = vpop.f32.mrb[0].mxu0
      %v352 = vpop.f32.mrb[0].mxu0
      %v353 = vadd.f32 0.0, %v352
      %v354 = vpop.f32.mrb[0].mxu0
      %355 = vmatprep.mubr.bf16.mxu0 0
      %356 = vmatmul.mubr.bf16.gmra.mrb[0].mxu0 %v260
      %v357 = vpop.f32.mrb[0].mxu0
      %v358 = vadd.f32 0.0, %v357
      %v359 = vpop.f32.mrb[0].mxu0
      %v360 = vpop.f32.mrb[0].mxu0
      %v361 = vadd.f32 0.0, %v360
      %v362 = vpop.f32.mrb[0].mxu0
      %363 = vmatprep.mubr.bf16.mxu0 0
      %364 = vmatmul.mubr.bf16.gmra.mrb[0].mxu0 %v261
      %v365 = vpop.f32.mrb[0].mxu0
      %v366 = vadd.f32 0.0, %v365
      %v367 = vpop.f32.mrb[0].mxu0
      %v368 = vpop.f32.mrb[0].mxu0
      %v369 = vadd.f32 0.0, %v368
      %v370 = vpop.f32.mrb[0].mxu0
      %371 = vmatprep.mubr.bf16.mxu0 0
      %372 = vmatmul.mubr.bf16.gmra.mrb[0].mxu0 %v262
      %v373 = vpop.f32.mrb[0].mxu0
      %v374 = vadd.f32 0.0, %v373
      %v375 = vpop.f32.mrb[0].mxu0
      %v376 = vpop.f32.mrb[0].mxu0
      %v377 = vadd.f32 0.0, %v376
      %v378 = vpop.f32.mrb[0].mxu0
      %379 = vdwg.mxu0
      %v380 = vpack.c.bf16 %v353, %v350
      %v381 = vpack.c.bf16 %v361, %v358
      %v382 = vpack.c.bf16 %v369, %v366
      %v383 = vpack.c.bf16 %v377, %v374
      %v388 = vunpack.c.l.b16 %v380
      %v389 = vunpack.c.h.b16 %v380
      %v390 = vunpack.c.l.b16 %v381
      %v391 = vunpack.c.h.b16 %v381
      %v392 = vunpack.c.l.b16 %v382
      %v393 = vunpack.c.h.b16 %v382
      %v394 = vunpack.c.l.b16 %v383
      %v395 = vunpack.c.h.b16 %v383
      %v396 = vpack.c.b16 %v388, %v388
      %v397 = vpack.c.b16 %v389, %v389
      %v398 = vpack.c.b16 %v390, %v390
      %v399 = vpack.c.b16 %v391, %v391
      %v400 = vpack.c.b16 %v392, %v392
      %v401 = vpack.c.b16 %v393, %v393
      %v402 = vpack.c.b16 %v394, %v394
      %v403 = vpack.c.b16 %v395, %v395
      %412 = vst [vmem:[%s216] sm:$0xf] %v396
      %413 = vst [vmem:[%s216 + $0x4] sm:$0xf] %v397
      %414 = vst [vmem:[%s216 + $0x8] sm:$0xf] %v398
      %415 = vst [vmem:[%s216 + $0xc] sm:$0xf] %v399
      %416 = vst [vmem:[%s216 + $0x10] sm:$0xf] %v400
      %417 = vst [vmem:[%s216 + $0x14] sm:$0xf] %v401
      %418 = vst [vmem:[%s216 + $0x18] sm:$0xf] %v402
      %419 = vst [vmem:[%s216 + $0x1c] sm:$0xf] %v403
      %s420 = smul.u32 8, %s18
      %p421 = scmp.lt.s32.totalorder %s420, 15
      %s422 = scalar_select %p421, %s420, 15
      %p423 = scmp.lt.s32.totalorder %s19, 0
      %s424 = scalar_select %p423, %s19, 0
      %s425 = sadd.s32 %s424, %s422
      %s426 = smul.addr %s425, 4
      %s427 = scalar_lea.vmem %s2, %s426
      // Predicated region
      $region29: #{adv_discriminator_forward.9} parent=27 // pred_check
        %p428 = pneg %p108
      $region30: #{adv_discriminator_forward.9} parent=27 // pred_check_branch
        %430 = sbr.rel (%p428) target = $region32
      $region31: #{adv_discriminator_forward.9} parent=27 // pred_region
        %s431 = smul.u32 8, %s18
      $region32: #{adv_discriminator_forward.9} parent=27 // pred_fallthru
        _
    $region28: #{adv_discriminator_forward.9} parent=5 // pred_fallthru
      _
    %p432 = scmp.le.s32.totalorder 2, %s8
    // Predicated region
    $region33: #{adv_discriminator_forward.9} parent=5 // pred_check
      %p433 = pneg %p432
    $region34: #{adv_discriminator_forward.9} parent=5 // pred_check_branch
      %435 = sbr.rel (%p433) target = $region36
    $region35: #{adv_discriminator_forward.9} parent=5 // pred_region
      %s436 = ssub.s32 %s8, 2
      // Predicated region
      $region37: #{adv_discriminator_forward.9} parent=35 // pred_check
        %p437 = pneg %p114
      $region38: #{adv_discriminator_forward.9} parent=35 // pred_check_branch
        %439 = sbr.rel (%p437) target = $region40
      $region39: #{adv_discriminator_forward.9} parent=35 // pred_region
        %s440 = smul.u32 8, %s21
        %p441 = scmp.lt.s32.totalorder %s440, 15
        %s442 = scalar_select %p441, %s440, 15
        %p443 = scmp.lt.s32.totalorder %s22, 0
        %s444 = scalar_select %p443, %s22, 0
        %s445 = sadd.s32 %s444, %s442
        %s446 = smul.addr %s445, 4
        %s447 = scalar_lea.vmem %s2, %s446
      $region40: #{adv_discriminator_forward.9} parent=35 // pred_fallthru
        _
    $region36: #{adv_discriminator_forward.9} parent=5 // pred_fallthru
      _
  $region6: #{adv_discriminator_forward.9} parent=0 // loop_footer
    %s12 = sadd.s32 1, %s8
  $region7: #{adv_discriminator_forward.9} parent=0 // loop_footer_branch
    %7 = sbr.rel target = $region3
  $region8: #{adv_discriminator_forward.9} parent=0 // loop_exit
    _

// kernel: adv_discriminator_forward.10
$region0: #{adv_discriminator_forward.10}
  #allocation0 [shape = 'u32[]', space=smem, size = 0x4, offset = 0x4, fixed_abs, tag = 'smem constant byte address 0x4 - core index']
  #allocation1 [shape = 'u32[144,128]{1,0:T(1,128)}', space=vmem, size = 0x12000, scoped, tag = 'internal scratch']
  %s0 = inlined_call_operand.vmem [shape: bf16[2,64,128], index: 0, kind: input, shape index: {}]
  %s1 = inlined_call_operand.vmem [shape: bf16[2,64,128], index: 1, kind: output, shape index: {}]
  %s2 = sld [smem:[#allocation0]]
  $region37: #{adv_discriminator_forward.10} parent=0
    _
  %s4 = ssub.s32 1, %s2
  %s5 = scalar_select 0, %s4, %s2
  loop: start=0, step=1, limit=4
  $region2: #{adv_discriminator_forward.10} parent=0 // loop_pre_header
    _
  $region3: #{adv_discriminator_forward.10} parent=0 // loop_header
    %s7 = sphi 0, %s11
    %p8 = scmp.ge.s32.totalorder %s7, 4
    %s14 = sphi 0, %s26
    %s15 = sphi 0, %s22
    %s16 = sphi 0, %s14
    %s17 = sphi 0, %s15
    %s18 = sphi 0, %s16
    %s19 = sphi 0, %s17
    %s31 = sphi 0, %s33
    %s34 = sphi 0, %s31
    %s35 = sphi 0, %s34
    %s51 = sphi 0, %s35
    %s59 = sphi 0, %s61
    %s62 = sphi 0, %s59
    %s63 = sphi 0, %s62
    %s79 = sphi 0, %s63
  $region4: #{adv_discriminator_forward.10} parent=0 // loop_header_branch
    %10 = sbr.rel (%p8) target = $region8
  $region5: #{adv_discriminator_forward.10} parent=0 // loop_body
    %s12 = ssub.s32 %s7, 1
    %s13 = ssub.s32 %s7, 2
    %s20 = sadd.s32 1, %s15
    %p21 = scmp.ge.s32.totalorder %s20, 1
    %s22 = scalar_select %p21, 0, %s20
    %s23 = sadd.s32 1, %s14
    %s24 = scalar_select %p21, %s23, %s14
    %p25 = scmp.ge.s32.totalorder %s24, 2
    %s26 = scalar_select %p25, 0, %s24
    %s27 = ssub.s32 %s14, %s26
    %s28 = ssub.s32 %s15, %s22
    %s29 = sor.u32 %s27, %s28
    %p30 = scmp.eq.s32.totalorder %s29, 0
    %s32 = sadd.s32 %s31, 1
    %s33 = scalar_select %p30, %s31, %s32
    %p36 = pneg %p30
    %p37 = scmp.eq.s32.totalorder %s7, 1
    %p38 = por %p36, %p37
    %p39 = scmp.ne.s32.totalorder %s31, %s34
    %p40 = scmp.eq.s32.totalorder %s7, 0
    %p41 = por %p39, %p40
    %p42 = scmp.ne.s32.totalorder %s31, %s34
    %p43 = scmp.eq.s32.totalorder %s12, 1
    %p44 = por %p42, %p43
    %p45 = scmp.ne.s32.totalorder %s34, %s35
    %p46 = scmp.eq.s32.totalorder %s12, 0
    %p47 = por %p45, %p46
    %p48 = scmp.ne.s32.totalorder %s34, %s35
    %p49 = scmp.eq.s32.totalorder %s13, 1
    %p50 = por %p48, %p49
    %p52 = scmp.ne.s32.totalorder %s35, %s51
    %p53 = scmp.eq.s32.totalorder %s13, 0
    %p54 = por %p52, %p53
    %s55 = ssub.s32 %s14, %s26
    %s56 = ssub.s32 %s15, %s22
    %s57 = sor.u32 %s55, %s56
    %p58 = scmp.eq.s32.totalorder %s57, 0
    %s60 = sadd.s32 %s59, 1
    %s61 = scalar_select %p58, %s59, %s60
    %p64 = pneg %p58
    %p65 = scmp.eq.s32.totalorder %s7, 1
    %p66 = por %p64, %p65
    %p67 = scmp.ne.s32.totalorder %s59, %s62
    %p68 = scmp.eq.s32.totalorder %s7, 0
    %p69 = por %p67, %p68
    %p70 = scmp.ne.s32.totalorder %s59, %s62
    %p71 = scmp.eq.s32.totalorder %s12, 1
    %p72 = por %p70, %p71
    %p73 = scmp.ne.s32.totalorder %s62, %s63
    %p74 = scmp.eq.s32.totalorder %s12, 0
    %p75 = por %p73, %p74
    %p76 = scmp.ne.s32.totalorder %s62, %s63
    %p77 = scmp.eq.s32.totalorder %s13, 1
    %p78 = por %p76, %p77
    %p80 = scmp.ne.s32.totalorder %s63, %s79
    %p81 = scmp.eq.s32.totalorder %s13, 0
    %p82 = por %p80, %p81
    %p83 = scmp.le.s32.totalorder 1, %s7
    %p84 = scmp.lt.s32.totalorder %s7, 3
    %p85 = pnand %p83, %p84
    %p86 = pneg %p85
    // Predicated region
    $region9: #{adv_discriminator_forward.10} parent=5 // pred_check
      _
    $region10: #{adv_discriminator_forward.10} parent=5 // pred_check_branch
      %88 = sbr.rel (%p85) target = $region12
    $region11: #{adv_discriminator_forward.10} parent=5 // pred_region
      %s89 = ssub.s32 %s7, 1
    $region12: #{adv_discriminator_forward.10} parent=5 // pred_fallthru
      _
    %p90 = scmp.lt.s32.totalorder %s7, 2
    // Predicated region
    $region13: #{adv_discriminator_forward.10} parent=5 // pred_check
      %p91 = pneg %p90
    $region14: #{adv_discriminator_forward.10} parent=5 // pred_check_branch
      %93 = sbr.rel (%p91) target = $region16
    $region15: #{adv_discriminator_forward.10} parent=5 // pred_region
      // Predicated region
      $region17: #{adv_discriminator_forward.10} parent=15 // pred_check
        %p94 = pneg %p41
      $region18: #{adv_discriminator_forward.10} parent=15 // pred_check_branch
        %96 = sbr.rel (%p94) target = $region20
      $region19: #{adv_discriminator_forward.10} parent=15 // pred_region
        %p97 = scmp.lt.s32.totalorder %s14, 1
        %s98 = scalar_select %p97, %s14, 1
        %p99 = scmp.lt.s32.totalorder %s15, 0
        %s100 = scalar_select %p99, %s15, 0
        %s101 = smul.addr %s98, 8
        %s102 = sadd.s32 %s100, %s101
        %s103 = smul.addr %s102, 4
        %s104 = scalar_lea.vmem %s0, %s103
      $region20: #{adv_discriminator_forward.10} parent=15 // pred_fallthru
        _
    $region16: #{adv_discriminator_forward.10} parent=5 // pred_fallthru
      _
    %p105 = scmp.le.s32.totalorder 1, %s7
    %p106 = scmp.lt.s32.totalorder %s7, 3
    %p107 = pnand %p105, %p106
    %p108 = pneg %p107
    // Predicated region
    $region21: #{adv_discriminator_forward.10} parent=5 // pred_check
      _
    $region22: #{adv_discriminator_forward.10} parent=5 // pred_check_branch
      %110 = sbr.rel (%p107) target = $region24
    $region23: #{adv_discriminator_forward.10} parent=5 // pred_region
      %s111 = ssub.s32 %s7, 1
      %p112 = scmp.lt.s32.totalorder %s16, 1
      %s113 = scalar_select %p112, %s16, 1
      %p114 = scmp.lt.s32.totalorder %s17, 0
      %s115 = scalar_select %p114, %s17, 0
      %s116 = smul.addr %s113, 8
      %s117 = sadd.s32 %s115, %s116
      %s118 = smul.addr %s117, 4
      %s119 = scalar_lea.vmem %s0, %s118
      %p120 = pneg %p47
      %p121 = pneg %p44
      %p122 = pneg %p75
      %p123 = pneg %p72
      %p124 = scmp.lt.s32.totalorder %s16, 1
      %s125 = scalar_select %p124, %s16, 1
      %p126 = scmp.lt.s32.totalorder %s17, 0
      %s127 = scalar_select %p126, %s17, 0
      %s128 = smul.addr %s125, 8
      %s129 = sadd.s32 %s127, %s128
      %s130 = smul.addr %s129, 4
      %s131 = scalar_lea.vmem %s1, %s130
      %p132 = scmp.lt.s32.totalorder %s16, 1
      %s133 = scalar_select %p132, %s16, 1
      %p134 = scmp.lt.s32.totalorder %s17, 0
      %s135 = scalar_select %p134, %s17, 0
      %s136 = smul.addr %s133, 8
      %s137 = sadd.s32 %s135, %s136
      %s138 = smul.addr %s137, 4
      %s139 = scalar_lea.vmem %s0, %s138
      %p140 = scmp.lt.s32.totalorder %s16, 1
      %s141 = scalar_select %p140, %s16, 1
      %p142 = scmp.lt.s32.totalorder %s17, 0
      %s143 = scalar_select %p142, %s17, 0
      %s144 = smul.addr %s141, 8
      %s145 = sadd.s32 %s143, %s144
      %s146 = smul.addr %s145, 4
      %s147 = scalar_lea.vmem %s1, %s146
      %v148 = vld [vmem:[%s139] sm:$0xf]
      %v149 = vld [vmem:[%s139 + $0x4] sm:$0xf]
      %v150 = vld [vmem:[%s139 + $0x8] sm:$0xf]
      %v151 = vld [vmem:[%s139 + $0xc] sm:$0xf]
      %v152 = vld [vmem:[%s139 + $0x10] sm:$0xf]
      %v153 = vld [vmem:[%s139 + $0x14] sm:$0xf]
      %v154 = vld [vmem:[%s139 + $0x18] sm:$0xf]
      %v155 = vld [vmem:[%s139 + $0x1c] sm:$0xf]
      %v156 = vunpack.c.l.bf16 %v148
      %v157 = vunpack.c.l.bf16 %v149
      %v158 = vunpack.c.l.bf16 %v150
      %v159 = vunpack.c.l.bf16 %v151
      %v160 = vunpack.c.l.bf16 %v152
      %v161 = vunpack.c.l.bf16 %v153
      %v162 = vunpack.c.l.bf16 %v154
      %v163 = vunpack.c.l.bf16 %v155
      %v164 = vadd.f32 %v156, %v157
      %v165 = vadd.f32 %v164, %v158
      %v166 = vadd.f32 %v165, %v159
      %v167 = vadd.f32 %v166, %v160
      %v168 = vadd.f32 %v167, %v161
      %v169 = vadd.f32 %v168, %v162
      %v170 = vadd.f32 %v169, %v163
      %v171 = vrot.slane %v170, 4
      %v172 = vadd.f32 %v170, %v171
      %v173 = vrot.slane %v172, 2
      %v174 = vadd.f32 %v172, %v173
      %v175 = vrot.slane %v174, 1
      %v176 = vadd.f32 %v174, %v175
      %v177 = vmul.f32 %v156, %v156
      %v178 = vmul.f32 %v157, %v157
      %v179 = vmul.f32 %v158, %v158
      %v180 = vmul.f32 %v159, %v159
      %v181 = vmul.f32 %v160, %v160
      %v182 = vmul.f32 %v161, %v161
      %v183 = vmul.f32 %v162, %v162
      %v184 = vmul.f32 %v163, %v163
      %v185 = vadd.f32 %v177, %v178
      %v186 = vadd.f32 %v185, %v179
      %v187 = vadd.f32 %v186, %v180
      %v188 = vadd.f32 %v187, %v181
      %v189 = vadd.f32 %v188, %v182
      %v190 = vadd.f32 %v189, %v183
      %v191 = vadd.f32 %v190, %v184
      %v192 = vrot.slane %v191, 4
      %v193 = vadd.f32 %v191, %v192
      %v194 = vrot.slane %v193, 2
      %v195 = vadd.f32 %v193, %v194
      %v196 = vrot.slane %v195, 1
      %v197 = vadd.f32 %v195, %v196
      %v198 = vmul.f32 %v176, 0.015625
      %v199 = vmul.f32 %v197, 0.015625
      %v200 = vmul.f32 %v198, %v198
      %v201 = vsub.f32 %v199, %v200
      %v202 = vmax.f32 %v201, 0.0
      %v203 = vsub.f32 %v156, %v198
      %v204 = vsub.f32 %v157, %v198
      %v205 = vsub.f32 %v158, %v198
      %v206 = vsub.f32 %v159, %v198
      %v207 = vsub.f32 %v160, %v198
      %v208 = vsub.f32 %v161, %v198
      %v209 = vsub.f32 %v162, %v198
      %v210 = vsub.f32 %v163, %v198
      %v211 = vadd.f32 %v202, 1e-05
      %v212 = vrsqrt.pop %v211
      %v213 = vmul.f32 %v203, %v212
      %v214 = vmul.f32 %v204, %v212
      %v215 = vmul.f32 %v205, %v212
      %v216 = vmul.f32 %v206, %v212
      %v217 = vmul.f32 %v207, %v212
      %v218 = vmul.f32 %v208, %v212
      %v219 = vmul.f32 %v209, %v212
      %v220 = vmul.f32 %v210, %v212
      %vm221 = vcmp.ge.f32.partialorder %v213, 0.0
      %vm222 = vcmp.ge.f32.partialorder %v214, 0.0
      %vm223 = vcmp.ge.f32.partialorder %v215, 0.0
      %vm224 = vcmp.ge.f32.partialorder %v216, 0.0
      %vm225 = vcmp.ge.f32.partialorder %v217, 0.0
      %vm226 = vcmp.ge.f32.partialorder %v218, 0.0
      %vm227 = vcmp.ge.f32.partialorder %v219, 0.0
      %vm228 = vcmp.ge.f32.partialorder %v220, 0.0
      %v229 = vmul.f32 %v213, 0.2
      %v230 = vmul.f32 %v214, 0.2
      %v231 = vmul.f32 %v215, 0.2
      %v232 = vmul.f32 %v216, 0.2
      %v233 = vmul.f32 %v217, 0.2
      %v234 = vmul.f32 %v218, 0.2
      %v235 = vmul.f32 %v219, 0.2
      %v236 = vmul.f32 %v220, 0.2
      %v237 = vsel %vm221, %v213, %v229
      %v238 = vsel %vm222, %v214, %v230
      %v239 = vsel %vm223, %v215, %v231
      %v240 = vsel %vm224, %v216, %v232
      %v241 = vsel %vm225, %v217, %v233
      %v242 = vsel %vm226, %v218, %v234
      %v243 = vsel %vm227, %v219, %v235
      %v244 = vsel %vm228, %v220, %v236
      %v245 = vpack.c.bf16 %v238, %v237
      %v246 = vpack.c.bf16 %v240, %v239
      %v247 = vpack.c.bf16 %v242, %v241
      %v248 = vpack.c.bf16 %v244, %v243
      %v253 = vunpack.c.l.b16 %v245
      %v254 = vunpack.c.h.b16 %v245
      %v255 = vunpack.c.l.b16 %v246
      %v256 = vunpack.c.h.b16 %v246
      %v257 = vunpack.c.l.b16 %v247
      %v258 = vunpack.c.h.b16 %v247
      %v259 = vunpack.c.l.b16 %v248
      %v260 = vunpack.c.h.b16 %v248
      %v261 = vpack.c.b16 %v253, %v253
      %v262 = vpack.c.b16 %v254, %v254
      %v263 = vpack.c.b16 %v255, %v255
      %v264 = vpack.c.b16 %v256, %v256
      %v265 = vpack.c.b16 %v257, %v257
      %v266 = vpack.c.b16 %v258, %v258
      %v267 = vpack.c.b16 %v259, %v259
      %v268 = vpack.c.b16 %v260, %v260
      %277 = vst [vmem:[%s147] sm:$0xf] %v261
      %278 = vst [vmem:[%s147 + $0x4] sm:$0xf] %v262
      %279 = vst [vmem:[%s147 + $0x8] sm:$0xf] %v263
      %280 = vst [vmem:[%s147 + $0xc] sm:$0xf] %v264
      %281 = vst [vmem:[%s147 + $0x10] sm:$0xf] %v265
      %282 = vst [vmem:[%s147 + $0x14] sm:$0xf] %v266
      %283 = vst [vmem:[%s147 + $0x18] sm:$0xf] %v267
      %284 = vst [vmem:[%s147 + $0x1c] sm:$0xf] %v268
      %p285 = scmp.lt.s32.totalorder %s16, 1
      %s286 = scalar_select %p285, %s16, 1
      %p287 = scmp.lt.s32.totalorder %s17, 0
      %s288 = scalar_select %p287, %s17, 0
      %s289 = smul.addr %s286, 8
      %s290 = sadd.s32 %s288, %s289
      %s291 = smul.addr %s290, 4
      %s292 = scalar_lea.vmem %s1, %s291
      // Predicated region
      $region25: #{adv_discriminator_forward.10} parent=23 // pred_check
        %p293 = pneg %p72
      $region26: #{adv_discriminator_forward.10} parent=23 // pred_check_branch
        %295 = sbr.rel (%p293) target = $region28
      $region27: #{adv_discriminator_forward.10} parent=23 // pred_region
        _
      $region28: #{adv_discriminator_forward.10} parent=23 // pred_fallthru
        _
    $region24: #{adv_discriminator_forward.10} parent=5 // pred_fallthru
      _
    %p296 = scmp.le.s32.totalorder 2, %s7
    // Predicated region
    $region29: #{adv_discriminator_forward.10} parent=5 // pred_check
      %p297 = pneg %p296
    $region30: #{adv_discriminator_forward.10} parent=5 // pred_check_branch
      %299 = sbr.rel (%p297) target = $region32
    $region31: #{adv_discriminator_forward.10} parent=5 // pred_region
      %s300 = ssub.s32 %s7, 2
      // Predicated region
      $region33: #{adv_discriminator_forward.10} parent=31 // pred_check
        %p301 = pneg %p78
      $region34: #{adv_discriminator_forward.10} parent=31 // pred_check_branch
        %303 = sbr.rel (%p301) target = $region36
      $region35: #{adv_discriminator_forward.10} parent=31 // pred_region
        %p304 = scmp.lt.s32.totalorder %s18, 1
        %s305 = scalar_select %p304, %s18, 1
        %p306 = scmp.lt.s32.totalorder %s19, 0
        %s307 = scalar_select %p306, %s19, 0
        %s308 = smul.addr %s305, 8
        %s309 = sadd.s32 %s307, %s308
        %s310 = smul.addr %s309, 4
        %s311 = scalar_lea.vmem %s1, %s310
      $region36: #{adv_discriminator_forward.10} parent=31 // pred_fallthru
        _
    $region32: #{adv_discriminator_forward.10} parent=5 // pred_fallthru
      _
  $region6: #{adv_discriminator_forward.10} parent=0 // loop_footer
    %s11 = sadd.s32 1, %s7
  $region7: #{adv_discriminator_forward.10} parent=0 // loop_footer_branch
    %6 = sbr.rel target = $region3
  $region8: #{adv_discriminator_forward.10} parent=0 // loop_exit
    _

// kernel: adv_discriminator_forward.11
$region0: #{adv_discriminator_forward.11}
  #allocation0 [shape = 'u32[]', space=smem, size = 0x4, offset = 0x4, fixed_abs, tag = 'smem constant byte address 0x4 - core index']
  #allocation1 [shape = 'u32[144,128]{1,0:T(1,128)}', space=vmem, size = 0x12000, scoped, tag = 'internal scratch']
  %s0 = inlined_call_operand.vmem [shape: bf16[32,256], index: 0, kind: input, shape index: {}]
  %s1 = inlined_call_operand.vmem [shape: bf16[256,128], index: 1, kind: input, shape index: {}]
  %s2 = inlined_call_operand.vmem [shape: bf16[32,128], index: 2, kind: output, shape index: {}]
  %s3 = sld [smem:[#allocation0]]
  $region41: #{adv_discriminator_forward.11} parent=0
    _
  %s5 = ssub.s32 1, %s3
  %s6 = scalar_select 0, %s5, %s3
  loop: start=0, step=1, limit=4
  $region2: #{adv_discriminator_forward.11} parent=0 // loop_pre_header
    _
  $region3: #{adv_discriminator_forward.11} parent=0 // loop_header
    %s8 = sphi 0, %s12
    %p9 = scmp.ge.s32.totalorder %s8, 4
    %s15 = sphi 0, %s34
    %s16 = sphi 0, %s30
    %s17 = sphi 0, %s26
    %s18 = sphi 0, %s15
    %s19 = sphi 0, %s16
    %s20 = sphi 0, %s17
    %s21 = sphi 0, %s18
    %s22 = sphi 0, %s19
    %s23 = sphi 0, %s20
    %s39 = sphi 0, %s41
    %s42 = sphi 0, %s39
    %s43 = sphi 0, %s42
    %s59 = sphi 0, %s43
    %s67 = sphi 0, %s69
    %s70 = sphi 0, %s67
    %s71 = sphi 0, %s70
    %s87 = sphi 0, %s71
    %s95 = sphi 0, %s97
    %s98 = sphi 0, %s95
    %s99 = sphi 0, %s98
    %s115 = sphi 0, %s99
  $region4: #{adv_discriminator_forward.11} parent=0 // loop_header_branch
    %11 = sbr.rel (%p9) target = $region8
  $region5: #{adv_discriminator_forward.11} parent=0 // loop_body
    %s13 = ssub.s32 %s8, 1
    %s14 = ssub.s32 %s8, 2
    %s24 = sadd.s32 1, %s17
    %p25 = scmp.ge.s32.totalorder %s24, 1
    %s26 = scalar_select %p25, 0, %s24
    %s27 = sadd.s32 1, %s16
    %s28 = scalar_select %p25, %s27, %s16
    %p29 = scmp.ge.s32.totalorder %s28, 1
    %s30 = scalar_select %p29, 0, %s28
    %s31 = sadd.s32 1, %s15
    %s32 = scalar_select %p29, %s31, %s15
    %p33 = scmp.ge.s32.totalorder %s32, 2
    %s34 = scalar_select %p33, 0, %s32
    %s35 = ssub.s32 %s15, %s34
    %s36 = ssub.s32 %s17, %s26
    %s37 = sor.u32 %s35, %s36
    %p38 = scmp.eq.s32.totalorder %s37, 0
    %s40 = sadd.s32 %s39, 1
    %s41 = scalar_select %p38, %s39, %s40
    %p44 = pneg %p38
    %p45 = scmp.eq.s32.totalorder %s8, 1
    %p46 = por %p44, %p45
    %p47 = scmp.ne.s32.totalorder %s39, %s42
    %p48 = scmp.eq.s32.totalorder %s8, 0
    %p49 = por %p47, %p48
    %p50 = scmp.ne.s32.totalorder %s39, %s42
    %p51 = scmp.eq.s32.totalorder %s13, 1
    %p52 = por %p50, %p51
    %p53 = scmp.ne.s32.totalorder %s42, %s43
    %p54 = scmp.eq.s32.totalorder %s13, 0
    %p55 = por %p53, %p54
    %p56 = scmp.ne.s32.totalorder %s42, %s43
    %p57 = scmp.eq.s32.totalorder %s14, 1
    %p58 = por %p56, %p57
    %p60 = scmp.ne.s32.totalorder %s43, %s59
    %p61 = scmp.eq.s32.totalorder %s14, 0
    %p62 = por %p60, %p61
    %s63 = ssub.s32 %s17, %s26
    %s64 = ssub.s32 %s16, %s30
    %s65 = sor.u32 %s63, %s64
    %p66 = scmp.eq.s32.totalorder %s65, 0
    %s68 = sadd.s32 %s67, 1
    %s69 = scalar_select %p66, %s67, %s68
    %p72 = pneg %p66
    %p73 = scmp.eq.s32.totalorder %s8, 1
    %p74 = por %p72, %p73
    %p75 = scmp.ne.s32.totalorder %s67, %s70
    %p76 = scmp.eq.s32.totalorder %s8, 0
    %p77 = por %p75, %p76
    %p78 = scmp.ne.s32.totalorder %s67, %s70
    %p79 = scmp.eq.s32.totalorder %s13, 1
    %p80 = por %p78, %p79
    %p81 = scmp.ne.s32.totalorder %s70, %s71
    %p82 = scmp.eq.s32.totalorder %s13, 0
    %p83 = por %p81, %p82
    %p84 = scmp.ne.s32.totalorder %s70, %s71
    %p85 = scmp.eq.s32.totalorder %s14, 1
    %p86 = por %p84, %p85
    %p88 = scmp.ne.s32.totalorder %s71, %s87
    %p89 = scmp.eq.s32.totalorder %s14, 0
    %p90 = por %p88, %p89
    %s91 = ssub.s32 %s15, %s34
    %s92 = ssub.s32 %s16, %s30
    %s93 = sor.u32 %s91, %s92
    %p94 = scmp.eq.s32.totalorder %s93, 0
    %s96 = sadd.s32 %s95, 1
    %s97 = scalar_select %p94, %s95, %s96
    %p100 = pneg %p94
    %p101 = scmp.eq.s32.totalorder %s8, 1
    %p102 = por %p100, %p101
    %p103 = scmp.ne.s32.totalorder %s95, %s98
    %p104 = scmp.eq.s32.totalorder %s8, 0
    %p105 = por %p103, %p104
    %p106 = scmp.ne.s32.totalorder %s95, %s98
    %p107 = scmp.eq.s32.totalorder %s13, 1
    %p108 = por %p106, %p107
    %p109 = scmp.ne.s32.totalorder %s98, %s99
    %p110 = scmp.eq.s32.totalorder %s13, 0
    %p111 = por %p109, %p110
    %p112 = scmp.ne.s32.totalorder %s98, %s99
    %p113 = scmp.eq.s32.totalorder %s14, 1
    %p114 = por %p112, %p113
    %p116 = scmp.ne.s32.totalorder %s99, %s115
    %p117 = scmp.eq.s32.totalorder %s14, 0
    %p118 = por %p116, %p117
    %p119 = scmp.le.s32.totalorder 1, %s8
    %p120 = scmp.lt.s32.totalorder %s8, 3
    %p121 = pnand %p119, %p120
    %p122 = pneg %p121
    // Predicated region
    $region9: #{adv_discriminator_forward.11} parent=5 // pred_check
      _
    $region10: #{adv_discriminator_forward.11} parent=5 // pred_check_branch
      %124 = sbr.rel (%p121) target = $region12
    $region11: #{adv_discriminator_forward.11} parent=5 // pred_region
      %s125 = ssub.s32 %s8, 1
      // Predicated region
      $region13: #{adv_discriminator_forward.11} parent=11 // pred_check
        %p126 = pneg %p83
      $region14: #{adv_discriminator_forward.11} parent=11 // pred_check_branch
        %128 = sbr.rel (%p126) target = $region16
      $region15: #{adv_discriminator_forward.11} parent=11 // pred_region
        %s129 = smul.u32 32, %s20
        %p130 = scmp.lt.s32.totalorder %s129, 31
        %s131 = scalar_select %p130, %s129, 31
        %p132 = scmp.lt.s32.totalorder %s19, 0
        %s133 = scalar_select %p132, %s19, 0
        %s134 = sadd.s32 %s133, %s131
        %s135 = smul.addr %s134, 4
        %s136 = scalar_lea.vmem %s1, %s135
        %s137 = smul.u32 32, %s20
      $region16: #{adv_discriminator_forward.11} parent=11 // pred_fallthru
        _
    $region12: #{adv_discriminator_forward.11} parent=5 // pred_fallthru
      _
    %p138 = scmp.lt.s32.totalorder %s8, 2
    // Predicated region
    $region17: #{adv_discriminator_forward.11} parent=5 // pred_check
      %p139 = pneg %p138
    $region18: #{adv_discriminator_forward.11} parent=5 // pred_check_branch
      %141 = sbr.rel (%p139) target = $region20
    $region19: #{adv_discriminator_forward.11} parent=5 // pred_region
      // Predicated region
      $region21: #{adv_discriminator_forward.11} parent=19 // pred_check
        %p142 = pneg %p49
      $region22: #{adv_discriminator_forward.11} parent=19 // pred_check_branch
        %144 = sbr.rel (%p142) target = $region24
      $region23: #{adv_discriminator_forward.11} parent=19 // pred_region
        %s145 = smul.u32 2, %s15
        %s146 = smul.u32 2, %s17
        %p147 = scmp.lt.s32.totalorder %s145, 3
        %s148 = scalar_select %p147, %s145, 3
        %p149 = scmp.lt.s32.totalorder %s146, 1
        %s150 = scalar_select %p149, %s146, 1
        %s151 = smul.addr %s148, 2
        %s152 = sadd.s32 %s150, %s151
        %s153 = smul.addr %s152, 4
        %s154 = scalar_lea.vmem %s0, %s153
        %s155 = smul.u32 2, %s15
        %s156 = smul.u32 2, %s17
      $region24: #{adv_discriminator_forward.11} parent=19 // pred_fallthru
        _
    $region20: #{adv_discriminator_forward.11} parent=5 // pred_fallthru
      _
    %p157 = scmp.le.s32.totalorder 1, %s8
    %p158 = scmp.lt.s32.totalorder %s8, 3
    %p159 = pnand %p157, %p158
    %p160 = pneg %p159
    // Predicated region
    $region25: #{adv_discriminator_forward.11} parent=5 // pred_check
      _
    $region26: #{adv_discriminator_forward.11} parent=5 // pred_check_branch
      %162 = sbr.rel (%p159) target = $region28
    $region27: #{adv_discriminator_forward.11} parent=5 // pred_region
      %s163 = ssub.s32 %s8, 1
      %s164 = smul.u32 2, %s18
      %s165 = smul.u32 2, %s20
      %p166 = scmp.lt.s32.totalorder %s164, 3
      %s167 = scalar_select %p166, %s164, 3
      %p168 = scmp.lt.s32.totalorder %s165, 1
      %s169 = scalar_select %p168, %s165, 1
      %s170 = smul.addr %s167, 2
      %s171 = sadd.s32 %s169, %s170
      %s172 = smul.addr %s171, 4
      %s173 = scalar_lea.vmem %s0, %s172
      %p174 = pneg %p55
      %p175 = pneg %p52
      %s176 = smul.u32 32, %s20
      %p177 = scmp.lt.s32.totalorder %s176, 31
      %s178 = scalar_select %p177, %s176, 31
      %p179 = scmp.lt.s32.totalorder %s19, 0
      %s180 = scalar_select %p179, %s19, 0
      %s181 = sadd.s32 %s180, %s178
      %s182 = smul.addr %s181, 4
      %s183 = scalar_lea.vmem %s1, %s182
      %p184 = pneg %p83
      %p185 = pneg %p80
      %p186 = pneg %p111
      %p187 = pneg %p108
      %s188 = smul.u32 2, %s18
      %p189 = scmp.lt.s32.totalorder %s188, 3
      %s190 = scalar_select %p189, %s188, 3
      %p191 = scmp.lt.s32.totalorder %s19, 0
      %s192 = scalar_select %p191, %s19, 0
      %s193 = sadd.s32 %s192, %s190
      %s194 = smul.addr %s193, 4
      %s195 = scalar_lea.vmem %s2, %s194
      %s196 = smul.u32 2, %s18
      %s197 = smul.u32 2, %s20
      %p198 = scmp.lt.s32.totalorder %s196, 3
      %s199 = scalar_select %p198, %s196, 3
      %p200 = scmp.lt.s32.totalorder %s197, 1
      %s201 = scalar_select %p200, %s197, 1
      %s202 = smul.addr %s199, 2
      %s203 = sadd.s32 %s201, %s202
      %s204 = smul.addr %s203, 4
      %s205 = scalar_lea.vmem %s0, %s204
      %s206 = smul.u32 2, %s18
      %s207 = smul.u32 2, %s20
      %s208 = smul.u32 32, %s20
      %p209 = scmp.lt.s32.totalorder %s208, 31
      %s210 = scalar_select %p209, %s208, 31
      %p211 = scmp.lt.s32.totalorder %s19, 0
      %s212 = scalar_select %p211, %s19, 0
      %s213 = sadd.s32 %s212, %s210
      %s214 = smul.addr %s213, 4
      %s215 = scalar_lea.vmem %s1, %s214
      %s216 = smul.u32 32, %s20
      %s217 = smul.u32 2, %s18
      %p218 = scmp.lt.s32.totalorder %s217, 3
      %s219 = scalar_select %p218, %s217, 3
      %p220 = scmp.lt.s32.totalorder %s19, 0
      %s221 = scalar_select %p220, %s19, 0
      %s222 = sadd.s32 %s221, %s219
      %s223 = smul.addr %s222, 4
      %s224 = scalar_lea.vmem %s2, %s223
      %s225 = smul.u32 2, %s18
      %v227 = vld [vmem:[%s205] sm:$0xff]
      %v228 = vld [vmem:[%s205 + $0x8] sm:$0xff]
      %v229 = vld [vmem:[%s215] sm:$0xf]
      %v230 = vld [vmem:[%s215 + $0x4] sm:$0xf]
      %v231 = vld [vmem:[%s215 + $0x8] sm:$0xf]
      %v232 = vld [vmem:[%s215 + $0xc] sm:$0xf]
      %v233 = vld [vmem:[%s215 + $0x10] sm:$0xf]
      %v234 = vld [vmem:[%s215 + $0x14] sm:$0xf]
      %v235 = vld [vmem:[%s215 + $0x18] sm:$0xf]
      %v236 = vld [vmem:[%s215 + $0x1c] sm:$0xf]
      %v237 = vld [vmem:[%s215 + $0x20] sm:$0xf]
      %v238 = vld [vmem:[%s215 + $0x24] sm:$0xf]
      %v239 = vld [vmem:[%s215 + $0x28] sm:$0xf]
      %v240 = vld [vmem:[%s215 + $0x2c] sm:$0xf]
      %v241 = vld [vmem:[%s215 + $0x30] sm:$0xf]
      %v242 = vld [vmem:[%s215 + $0x34] sm:$0xf]
      %v243 = vld [vmem:[%s215 + $0x38] sm:$0xf]
      %v244 = vld [vmem:[%s215 + $0x3c] sm:$0xf]
      %v245 = vld [vmem:[%s215 + $0x40] sm:$0xf]
      %v246 = vld [vmem:[%s215 + $0x44] sm:$0xf]
      %v247 = vld [vmem:[%s215 + $0x48] sm:$0xf]
      %v248 = vld [vmem:[%s215 + $0x4c] sm:$0xf]
      %v249 = vld [vmem:[%s215 + $0x50] sm:$0xf]
      %v250 = vld [vmem:[%s215 + $0x54] sm:$0xf]
      %v251 = vld [vmem:[%s215 + $0x58] sm:$0xf]
      %v252 = vld [vmem:[%s215 + $0x5c] sm:$0xf]
      %v253 = vld [vmem:[%s215 + $0x60] sm:$0xf]
      %v254 = vld [vmem:[%s215 + $0x64] sm:$0xf]
      %v255 = vld [vmem:[%s215 + $0x68] sm:$0xf]
      %v256 = vld [vmem:[%s215 + $0x6c] sm:$0xf]
      %v257 = vld [vmem:[%s215 + $0x70] sm:$0xf]
      %v258 = vld [vmem:[%s215 + $0x74] sm:$0xf]
      %v259 = vld [vmem:[%s215 + $0x78] sm:$0xf]
      %v260 = vld [vmem:[%s215 + $0x7c] sm:$0xf]
      %v263 = vunpack.c.l.b16 %v227
      %v264 = vunpack.c.h.b16 %v227
      %v265 = vunpack.c.l.b16 %v228
      %v266 = vunpack.c.h.b16 %v228
      %v267 = vpack.c.b16 %v265, %v263
      %v268 = vpack.c.b16 %v266, %v264
      %v303 = vunpack.c.l.b16 %v229
      %v304 = vunpack.c.l.b16 %v230
      %v305 = vunpack.c.l.b16 %v231
      %v306 = vunpack.c.l.b16 %v232
      %v307 = vunpack.c.l.b16 %v233
      %v308 = vunpack.c.l.b16 %v234
      %v309 = vunpack.c.l.b16 %v235
      %v310 = vunpack.c.l.b16 %v236
      %v311 = vunpack.c.l.b16 %v237
      %v312 = vunpack.c.l.b16 %v238
      %v313 = vunpack.c.l.b16 %v239
      %v314 = vunpack.c.l.b16 %v240
      %v315 = vunpack.c.l.b16 %v241
      %v316 = vunpack.c.l.b16 %v242
      %v317 = vunpack.c.l.b16 %v243
      %v318 = vunpack.c.l.b16 %v244
      %v319 = vunpack.c.l.b16 %v245
      %v320 = vunpack.c.l.b16 %v246
      %v321 = vunpack.c.l.b16 %v247
      %v322 = vunpack.c.l.b16 %v248
      %v323 = vunpack.c.l.b16 %v249
      %v324 = vunpack.c.l.b16 %v250
      %v325 = vunpack.c.l.b16 %v251
      %v326 = vunpack.c.l.b16 %v252
      %v327 = vunpack.c.l.b16 %v253
      %v328 = vunpack.c.l.b16 %v254
      %v329 = vunpack.c.l.b16 %v255
      %v330 = vunpack.c.l.b16 %v256
      %v331 = vunpack.c.l.b16 %v257
      %v332 = vunpack.c.l.b16 %v258
      %v333 = vunpack.c.l.b16 %v259
      %v334 = vunpack.c.l.b16 %v260
      %v335 = vpack.c.b16 %v304, %v303
      %v336 = vpack.c.b16 %v306, %v305
      %v337 = vpack.c.b16 %v308, %v307
      %v338 = vpack.c.b16 %v310, %v309
      %v339 = vpack.c.b16 %v312, %v311
      %v340 = vpack.c.b16 %v314, %v313
      %v341 = vpack.c.b16 %v316, %v315
      %v342 = vpack.c.b16 %v318, %v317
      %v343 = vpack.c.b16 %v320, %v319
      %v344 = vpack.c.b16 %v322, %v321
      %v345 = vpack.c.b16 %v324, %v323
      %v346 = vpack.c.b16 %v326, %v325
      %v347 = vpack.c.b16 %v328, %v327
      %v348 = vpack.c.b16 %v330, %v329
      %v349 = vpack.c.b16 %v332, %v331
      %v350 = vpack.c.b16 %v334, %v333
      %367 = vmatprep.subr.bf16.mxu0 0
      %368 = vmatpush1.bf16.msra.mxu0 %v335
      %369 = vmatprep.subr.bf16.mxu0 0
      %370 = vmatpush1.bf16.msra.mxu0 %v336
      %371 = vmatprep.subr.bf16.mxu0 0
      %372 = vmatpush1.bf16.msra.mxu0 %v337
      %373 = vmatprep.subr.bf16.mxu0 0
      %374 = vmatpush1.bf16.msra.mxu0 %v338
      %375 = vmatprep.subr.bf16.mxu0 0
      %376 = vmatpush1.bf16.msra.mxu0 %v339
      %377 = vmatprep.subr.bf16.mxu0 0
      %378 = vmatpush1.bf16.msra.mxu0 %v340
      %379 = vmatprep.subr.bf16.mxu0 0
      %380 = vmatpush1.bf16.msra.mxu0 %v341
      %381 = vmatprep.subr.bf16.mxu0 0
      %382 = vmatpush1.bf16.msra.mxu0 %v342
      %383 = vmatprep.subr.bf16.mxu0 0
      %384 = vmatpush1.bf16.msra.mxu0 %v343
      %385 = vmatprep.subr.bf16.mxu0 0
      %386 = vmatpush1.bf16.msra.mxu0 %v344
      %387 = vmatprep.subr.bf16.mxu0 0
      %388 = vmatpush1.bf16.msra.mxu0 %v345
      %389 = vmatprep.subr.bf16.mxu0 0
      %390 = vmatpush1.bf16.msra.mxu0 %v346
      %391 = vmatprep.subr.bf16.mxu0 0
      %392 = vmatpush1.bf16.msra.mxu0 %v347
      %393 = vmatprep.subr.bf16.mxu0 0
      %394 = vmatpush1.bf16.msra.mxu0 %v348
      %395 = vmatprep.subr.bf16.mxu0 0
      %396 = vmatpush1.bf16.msra.mxu0 %v349
      %397 = vmatprep.subr.bf16.mxu0 0
      %398 = vmatpush1.bf16.msra.mxu0 %v350
      %399 = vmatprep.mubr.bf16.mxu0 %v268
      %400 = vmatmul.mubr.bf16.gmra.mrb[0].mxu0 %v267
      %v401 = vpop.f32.mrb[0].mxu0
      %v402 = vadd.f32 0.0, %v401
      %v403 = vpop.f32.mrb[0].mxu0
      %v404 = vpop.f32.mrb[0].mxu0
      %v405 = vadd.f32 0.0, %v404
      %v406 = vpop.f32.mrb[0].mxu0
      %407 = vdwg.mxu0
      %v408 = vpack.c.bf16 %v405, %v402
      %v410 = vunpack.c.l.b16 %v408
      %v411 = vunpack.c.h.b16 %v408
      %v412 = vpack.c.b16 %v410, %v410
      %v413 = vpack.c.b16 %v411, %v411
      %416 = vst [vmem:[%s224] sm:$0xf] %v412
      %417 = vst [vmem:[%s224 + $0x4] sm:$0xf] %v413
      %s418 = smul.u32 2, %s18
      %p419 = scmp.lt.s32.totalorder %s418, 3
      %s420 = scalar_select %p419, %s418, 3
      %p421 = scmp.lt.s32.totalorder %s19, 0
      %s422 = scalar_select %p421, %s19, 0
      %s423 = sadd.s32 %s422, %s420
      %s424 = smul.addr %s423, 4
      %s425 = scalar_lea.vmem %s2, %s424
      // Predicated region
      $region29: #{adv_discriminator_forward.11} parent=27 // pred_check
        %p426 = pneg %p108
      $region30: #{adv_discriminator_forward.11} parent=27 // pred_check_branch
        %428 = sbr.rel (%p426) target = $region32
      $region31: #{adv_discriminator_forward.11} parent=27 // pred_region
        %s429 = smul.u32 2, %s18
      $region32: #{adv_discriminator_forward.11} parent=27 // pred_fallthru
        _
    $region28: #{adv_discriminator_forward.11} parent=5 // pred_fallthru
      _
    %p430 = scmp.le.s32.totalorder 2, %s8
    // Predicated region
    $region33: #{adv_discriminator_forward.11} parent=5 // pred_check
      %p431 = pneg %p430
    $region34: #{adv_discriminator_forward.11} parent=5 // pred_check_branch
      %433 = sbr.rel (%p431) target = $region36
    $region35: #{adv_discriminator_forward.11} parent=5 // pred_region
      %s434 = ssub.s32 %s8, 2
      // Predicated region
      $region37: #{adv_discriminator_forward.11} parent=35 // pred_check
        %p435 = pneg %p114
      $region38: #{adv_discriminator_forward.11} parent=35 // pred_check_branch
        %437 = sbr.rel (%p435) target = $region40
      $region39: #{adv_discriminator_forward.11} parent=35 // pred_region
        %s438 = smul.u32 2, %s21
        %p439 = scmp.lt.s32.totalorder %s438, 3
        %s440 = scalar_select %p439, %s438, 3
        %p441 = scmp.lt.s32.totalorder %s22, 0
        %s442 = scalar_select %p441, %s22, 0
        %s443 = sadd.s32 %s442, %s440
        %s444 = smul.addr %s443, 4
        %s445 = scalar_lea.vmem %s2, %s444
      $region40: #{adv_discriminator_forward.11} parent=35 // pred_fallthru
        _
    $region36: #{adv_discriminator_forward.11} parent=5 // pred_fallthru
      _
  $region6: #{adv_discriminator_forward.11} parent=0 // loop_footer
    %s12 = sadd.s32 1, %s8
  $region7: #{adv_discriminator_forward.11} parent=0 // loop_footer_branch
    %7 = sbr.rel target = $region3
  $region8: #{adv_discriminator_forward.11} parent=0 // loop_exit
    _

// kernel: adv_discriminator_forward.12
$region0: #{adv_discriminator_forward.12}
  #allocation0 [shape = 'u32[]', space=smem, size = 0x4, offset = 0x4, fixed_abs, tag = 'smem constant byte address 0x4 - core index']
  #allocation1 [shape = 'u32[144,128]{1,0:T(1,128)}', space=vmem, size = 0x12000, scoped, tag = 'internal scratch']
  %s0 = inlined_call_operand.vmem [shape: bf16[2,16,128], index: 0, kind: input, shape index: {}]
  %s1 = inlined_call_operand.vmem [shape: bf16[2,16,128], index: 1, kind: output, shape index: {}]
  %s2 = sld [smem:[#allocation0]]
  $region37: #{adv_discriminator_forward.12} parent=0
    _
  %s4 = ssub.s32 1, %s2
  %s5 = scalar_select 0, %s4, %s2
  loop: start=0, step=1, limit=4
  $region2: #{adv_discriminator_forward.12} parent=0 // loop_pre_header
    _
  $region3: #{adv_discriminator_forward.12} parent=0 // loop_header
    %s7 = sphi 0, %s11
    %p8 = scmp.ge.s32.totalorder %s7, 4
    %s14 = sphi 0, %s26
    %s15 = sphi 0, %s22
    %s16 = sphi 0, %s14
    %s17 = sphi 0, %s15
    %s18 = sphi 0, %s16
    %s19 = sphi 0, %s17
    %s31 = sphi 0, %s33
    %s34 = sphi 0, %s31
    %s35 = sphi 0, %s34
    %s51 = sphi 0, %s35
    %s59 = sphi 0, %s61
    %s62 = sphi 0, %s59
    %s63 = sphi 0, %s62
    %s79 = sphi 0, %s63
  $region4: #{adv_discriminator_forward.12} parent=0 // loop_header_branch
    %10 = sbr.rel (%p8) target = $region8
  $region5: #{adv_discriminator_forward.12} parent=0 // loop_body
    %s12 = ssub.s32 %s7, 1
    %s13 = ssub.s32 %s7, 2
    %s20 = sadd.s32 1, %s15
    %p21 = scmp.ge.s32.totalorder %s20, 1
    %s22 = scalar_select %p21, 0, %s20
    %s23 = sadd.s32 1, %s14
    %s24 = scalar_select %p21, %s23, %s14
    %p25 = scmp.ge.s32.totalorder %s24, 2
    %s26 = scalar_select %p25, 0, %s24
    %s27 = ssub.s32 %s14, %s26
    %s28 = ssub.s32 %s15, %s22
    %s29 = sor.u32 %s27, %s28
    %p30 = scmp.eq.s32.totalorder %s29, 0
    %s32 = sadd.s32 %s31, 1
    %s33 = scalar_select %p30, %s31, %s32
    %p36 = pneg %p30
    %p37 = scmp.eq.s32.totalorder %s7, 1
    %p38 = por %p36, %p37
    %p39 = scmp.ne.s32.totalorder %s31, %s34
    %p40 = scmp.eq.s32.totalorder %s7, 0
    %p41 = por %p39, %p40
    %p42 = scmp.ne.s32.totalorder %s31, %s34
    %p43 = scmp.eq.s32.totalorder %s12, 1
    %p44 = por %p42, %p43
    %p45 = scmp.ne.s32.totalorder %s34, %s35
    %p46 = scmp.eq.s32.totalorder %s12, 0
    %p47 = por %p45, %p46
    %p48 = scmp.ne.s32.totalorder %s34, %s35
    %p49 = scmp.eq.s32.totalorder %s13, 1
    %p50 = por %p48, %p49
    %p52 = scmp.ne.s32.totalorder %s35, %s51
    %p53 = scmp.eq.s32.totalorder %s13, 0
    %p54 = por %p52, %p53
    %s55 = ssub.s32 %s14, %s26
    %s56 = ssub.s32 %s15, %s22
    %s57 = sor.u32 %s55, %s56
    %p58 = scmp.eq.s32.totalorder %s57, 0
    %s60 = sadd.s32 %s59, 1
    %s61 = scalar_select %p58, %s59, %s60
    %p64 = pneg %p58
    %p65 = scmp.eq.s32.totalorder %s7, 1
    %p66 = por %p64, %p65
    %p67 = scmp.ne.s32.totalorder %s59, %s62
    %p68 = scmp.eq.s32.totalorder %s7, 0
    %p69 = por %p67, %p68
    %p70 = scmp.ne.s32.totalorder %s59, %s62
    %p71 = scmp.eq.s32.totalorder %s12, 1
    %p72 = por %p70, %p71
    %p73 = scmp.ne.s32.totalorder %s62, %s63
    %p74 = scmp.eq.s32.totalorder %s12, 0
    %p75 = por %p73, %p74
    %p76 = scmp.ne.s32.totalorder %s62, %s63
    %p77 = scmp.eq.s32.totalorder %s13, 1
    %p78 = por %p76, %p77
    %p80 = scmp.ne.s32.totalorder %s63, %s79
    %p81 = scmp.eq.s32.totalorder %s13, 0
    %p82 = por %p80, %p81
    %p83 = scmp.le.s32.totalorder 1, %s7
    %p84 = scmp.lt.s32.totalorder %s7, 3
    %p85 = pnand %p83, %p84
    %p86 = pneg %p85
    // Predicated region
    $region9: #{adv_discriminator_forward.12} parent=5 // pred_check
      _
    $region10: #{adv_discriminator_forward.12} parent=5 // pred_check_branch
      %88 = sbr.rel (%p85) target = $region12
    $region11: #{adv_discriminator_forward.12} parent=5 // pred_region
      %s89 = ssub.s32 %s7, 1
    $region12: #{adv_discriminator_forward.12} parent=5 // pred_fallthru
      _
    %p90 = scmp.lt.s32.totalorder %s7, 2
    // Predicated region
    $region13: #{adv_discriminator_forward.12} parent=5 // pred_check
      %p91 = pneg %p90
    $region14: #{adv_discriminator_forward.12} parent=5 // pred_check_branch
      %93 = sbr.rel (%p91) target = $region16
    $region15: #{adv_discriminator_forward.12} parent=5 // pred_region
      // Predicated region
      $region17: #{adv_discriminator_forward.12} parent=15 // pred_check
        %p94 = pneg %p41
      $region18: #{adv_discriminator_forward.12} parent=15 // pred_check_branch
        %96 = sbr.rel (%p94) target = $region20
      $region19: #{adv_discriminator_forward.12} parent=15 // pred_region
        %p97 = scmp.lt.s32.totalorder %s14, 1
        %s98 = scalar_select %p97, %s14, 1
        %p99 = scmp.lt.s32.totalorder %s15, 0
        %s100 = scalar_select %p99, %s15, 0
        %s101 = smul.addr %s98, 2
        %s102 = sadd.s32 %s100, %s101
        %s103 = smul.addr %s102, 4
        %s104 = scalar_lea.vmem %s0, %s103
      $region20: #{adv_discriminator_forward.12} parent=15 // pred_fallthru
        _
    $region16: #{adv_discriminator_forward.12} parent=5 // pred_fallthru
      _
    %p105 = scmp.le.s32.totalorder 1, %s7
    %p106 = scmp.lt.s32.totalorder %s7, 3
    %p107 = pnand %p105, %p106
    %p108 = pneg %p107
    // Predicated region
    $region21: #{adv_discriminator_forward.12} parent=5 // pred_check
      _
    $region22: #{adv_discriminator_forward.12} parent=5 // pred_check_branch
      %110 = sbr.rel (%p107) target = $region24
    $region23: #{adv_discriminator_forward.12} parent=5 // pred_region
      %s111 = ssub.s32 %s7, 1
      %p112 = scmp.lt.s32.totalorder %s16, 1
      %s113 = scalar_select %p112, %s16, 1
      %p114 = scmp.lt.s32.totalorder %s17, 0
      %s115 = scalar_select %p114, %s17, 0
      %s116 = smul.addr %s113, 2
      %s117 = sadd.s32 %s115, %s116
      %s118 = smul.addr %s117, 4
      %s119 = scalar_lea.vmem %s0, %s118
      %p120 = pneg %p47
      %p121 = pneg %p44
      %p122 = pneg %p75
      %p123 = pneg %p72
      %p124 = scmp.lt.s32.totalorder %s16, 1
      %s125 = scalar_select %p124, %s16, 1
      %p126 = scmp.lt.s32.totalorder %s17, 0
      %s127 = scalar_select %p126, %s17, 0
      %s128 = smul.addr %s125, 2
      %s129 = sadd.s32 %s127, %s128
      %s130 = smul.addr %s129, 4
      %s131 = scalar_lea.vmem %s1, %s130
      %p132 = scmp.lt.s32.totalorder %s16, 1
      %s133 = scalar_select %p132, %s16, 1
      %p134 = scmp.lt.s32.totalorder %s17, 0
      %s135 = scalar_select %p134, %s17, 0
      %s136 = smul.addr %s133, 2
      %s137 = sadd.s32 %s135, %s136
      %s138 = smul.addr %s137, 4
      %s139 = scalar_lea.vmem %s0, %s138
      %p140 = scmp.lt.s32.totalorder %s16, 1
      %s141 = scalar_select %p140, %s16, 1
      %p142 = scmp.lt.s32.totalorder %s17, 0
      %s143 = scalar_select %p142, %s17, 0
      %s144 = smul.addr %s141, 2
      %s145 = sadd.s32 %s143, %s144
      %s146 = smul.addr %s145, 4
      %s147 = scalar_lea.vmem %s1, %s146
      %v148 = vld [vmem:[%s139] sm:$0xf]
      %v149 = vld [vmem:[%s139 + $0x4] sm:$0xf]
      %v150 = vunpack.c.l.bf16 %v148
      %v151 = vunpack.c.l.bf16 %v149
      %v152 = vadd.f32 %v150, %v151
      %v153 = vrot.slane %v152, 4
      %v154 = vadd.f32 %v152, %v153
      %v155 = vrot.slane %v154, 2
      %v156 = vadd.f32 %v154, %v155
      %v157 = vrot.slane %v156, 1
      %v158 = vadd.f32 %v156, %v157
      %v159 = vmul.f32 %v150, %v150
      %v160 = vmul.f32 %v151, %v151
      %v161 = vadd.f32 %v159, %v160
      %v162 = vrot.slane %v161, 4
      %v163 = vadd.f32 %v161, %v162
      %v164 = vrot.slane %v163, 2
      %v165 = vadd.f32 %v163, %v164
      %v166 = vrot.slane %v165, 1
      %v167 = vadd.f32 %v165, %v166
      %v168 = vmul.f32 %v158, 0.0625
      %v169 = vmul.f32 %v167, 0.0625
      %v170 = vmul.f32 %v168, %v168
      %v171 = vsub.f32 %v169, %v170
      %v172 = vmax.f32 %v171, 0.0
      %v173 = vsub.f32 %v150, %v168
      %v174 = vsub.f32 %v151, %v168
      %v175 = vadd.f32 %v172, 1e-05
      %v176 = vrsqrt.pop %v175
      %v177 = vmul.f32 %v173, %v176
      %v178 = vmul.f32 %v174, %v176
      %vm179 = vcmp.ge.f32.partialorder %v177, 0.0
      %vm180 = vcmp.ge.f32.partialorder %v178, 0.0
      %v181 = vmul.f32 %v177, 0.2
      %v182 = vmul.f32 %v178, 0.2
      %v183 = vsel %vm179, %v177, %v181
      %v184 = vsel %vm180, %v178, %v182
      %v185 = vpack.c.bf16 %v184, %v183
      %v187 = vunpack.c.l.b16 %v185
      %v188 = vunpack.c.h.b16 %v185
      %v189 = vpack.c.b16 %v187, %v187
      %v190 = vpack.c.b16 %v188, %v188
      %193 = vst [vmem:[%s147] sm:$0xf] %v189
      %194 = vst [vmem:[%s147 + $0x4] sm:$0xf] %v190
      %p195 = scmp.lt.s32.totalorder %s16, 1
      %s196 = scalar_select %p195, %s16, 1
      %p197 = scmp.lt.s32.totalorder %s17, 0
      %s198 = scalar_select %p197, %s17, 0
      %s199 = smul.addr %s196, 2
      %s200 = sadd.s32 %s198, %s199
      %s201 = smul.addr %s200, 4
      %s202 = scalar_lea.vmem %s1, %s201
      // Predicated region
      $region25: #{adv_discriminator_forward.12} parent=23 // pred_check
        %p203 = pneg %p72
      $region26: #{adv_discriminator_forward.12} parent=23 // pred_check_branch
        %205 = sbr.rel (%p203) target = $region28
      $region27: #{adv_discriminator_forward.12} parent=23 // pred_region
        _
      $region28: #{adv_discriminator_forward.12} parent=23 // pred_fallthru
        _
    $region24: #{adv_discriminator_forward.12} parent=5 // pred_fallthru
      _
    %p206 = scmp.le.s32.totalorder 2, %s7
    // Predicated region
    $region29: #{adv_discriminator_forward.12} parent=5 // pred_check
      %p207 = pneg %p206
    $region30: #{adv_discriminator_forward.12} parent=5 // pred_check_branch
      %209 = sbr.rel (%p207) target = $region32
    $region31: #{adv_discriminator_forward.12} parent=5 // pred_region
      %s210 = ssub.s32 %s7, 2
      // Predicated region
      $region33: #{adv_discriminator_forward.12} parent=31 // pred_check
        %p211 = pneg %p78
      $region34: #{adv_discriminator_forward.12} parent=31 // pred_check_branch
        %213 = sbr.rel (%p211) target = $region36
      $region35: #{adv_discriminator_forward.12} parent=31 // pred_region
        %p214 = scmp.lt.s32.totalorder %s18, 1
        %s215 = scalar_select %p214, %s18, 1
        %p216 = scmp.lt.s32.totalorder %s19, 0
        %s217 = scalar_select %p216, %s19, 0
        %s218 = smul.addr %s215, 2
        %s219 = sadd.s32 %s217, %s218
        %s220 = smul.addr %s219, 4
        %s221 = scalar_lea.vmem %s1, %s220
      $region36: #{adv_discriminator_forward.12} parent=31 // pred_fallthru
        _
    $region32: #{adv_discriminator_forward.12} parent=5 // pred_fallthru
      _
  $region6: #{adv_discriminator_forward.12} parent=0 // loop_footer
    %s11 = sadd.s32 1, %s7
  $region7: #{adv_discriminator_forward.12} parent=0 // loop_footer_branch
    %6 = sbr.rel target = $region3
  $region8: #{adv_discriminator_forward.12} parent=0 // loop_exit
    _

// kernel: adv_discriminator_forward.14
$region0: #{adv_discriminator_forward.14}
  #allocation0 [shape = 'u32[]', space=smem, size = 0x4, offset = 0x4, fixed_abs, tag = 'smem constant byte address 0x4 - core index']
  #allocation1 [shape = 'u32[144,128]{1,0:T(1,128)}', space=vmem, size = 0x12000, scoped, tag = 'internal scratch']
  %s0 = inlined_call_operand.vmem [shape: bf16[2,9,128], index: 0, kind: input, shape index: {}]
  %s1 = inlined_call_operand.vmem [shape: bf16[2,9,128], index: 1, kind: output, shape index: {}]
  %s2 = sld [smem:[#allocation0]]
  $region37: #{adv_discriminator_forward.14} parent=0
    _
  %s4 = ssub.s32 1, %s2
  %s5 = scalar_select 0, %s4, %s2
  loop: start=0, step=1, limit=4
  $region2: #{adv_discriminator_forward.14} parent=0 // loop_pre_header
    _
  $region3: #{adv_discriminator_forward.14} parent=0 // loop_header
    %s7 = sphi 0, %s11
    %p8 = scmp.ge.s32.totalorder %s7, 4
    %s14 = sphi 0, %s26
    %s15 = sphi 0, %s22
    %s16 = sphi 0, %s14
    %s17 = sphi 0, %s15
    %s18 = sphi 0, %s16
    %s19 = sphi 0, %s17
    %s31 = sphi 0, %s33
    %s34 = sphi 0, %s31
    %s35 = sphi 0, %s34
    %s51 = sphi 0, %s35
    %s59 = sphi 0, %s61
    %s62 = sphi 0, %s59
    %s63 = sphi 0, %s62
    %s79 = sphi 0, %s63
  $region4: #{adv_discriminator_forward.14} parent=0 // loop_header_branch
    %10 = sbr.rel (%p8) target = $region8
  $region5: #{adv_discriminator_forward.14} parent=0 // loop_body
    %s12 = ssub.s32 %s7, 1
    %s13 = ssub.s32 %s7, 2
    %s20 = sadd.s32 1, %s15
    %p21 = scmp.ge.s32.totalorder %s20, 1
    %s22 = scalar_select %p21, 0, %s20
    %s23 = sadd.s32 1, %s14
    %s24 = scalar_select %p21, %s23, %s14
    %p25 = scmp.ge.s32.totalorder %s24, 2
    %s26 = scalar_select %p25, 0, %s24
    %s27 = ssub.s32 %s14, %s26
    %s28 = ssub.s32 %s15, %s22
    %s29 = sor.u32 %s27, %s28
    %p30 = scmp.eq.s32.totalorder %s29, 0
    %s32 = sadd.s32 %s31, 1
    %s33 = scalar_select %p30, %s31, %s32
    %p36 = pneg %p30
    %p37 = scmp.eq.s32.totalorder %s7, 1
    %p38 = por %p36, %p37
    %p39 = scmp.ne.s32.totalorder %s31, %s34
    %p40 = scmp.eq.s32.totalorder %s7, 0
    %p41 = por %p39, %p40
    %p42 = scmp.ne.s32.totalorder %s31, %s34
    %p43 = scmp.eq.s32.totalorder %s12, 1
    %p44 = por %p42, %p43
    %p45 = scmp.ne.s32.totalorder %s34, %s35
    %p46 = scmp.eq.s32.totalorder %s12, 0
    %p47 = por %p45, %p46
    %p48 = scmp.ne.s32.totalorder %s34, %s35
    %p49 = scmp.eq.s32.totalorder %s13, 1
    %p50 = por %p48, %p49
    %p52 = scmp.ne.s32.totalorder %s35, %s51
    %p53 = scmp.eq.s32.totalorder %s13, 0
    %p54 = por %p52, %p53
    %s55 = ssub.s32 %s14, %s26
    %s56 = ssub.s32 %s15, %s22
    %s57 = sor.u32 %s55, %s56
    %p58 = scmp.eq.s32.totalorder %s57, 0
    %s60 = sadd.s32 %s59, 1
    %s61 = scalar_select %p58, %s59, %s60
    %p64 = pneg %p58
    %p65 = scmp.eq.s32.totalorder %s7, 1
    %p66 = por %p64, %p65
    %p67 = scmp.ne.s32.totalorder %s59, %s62
    %p68 = scmp.eq.s32.totalorder %s7, 0
    %p69 = por %p67, %p68
    %p70 = scmp.ne.s32.totalorder %s59, %s62
    %p71 = scmp.eq.s32.totalorder %s12, 1
    %p72 = por %p70, %p71
    %p73 = scmp.ne.s32.totalorder %s62, %s63
    %p74 = scmp.eq.s32.totalorder %s12, 0
    %p75 = por %p73, %p74
    %p76 = scmp.ne.s32.totalorder %s62, %s63
    %p77 = scmp.eq.s32.totalorder %s13, 1
    %p78 = por %p76, %p77
    %p80 = scmp.ne.s32.totalorder %s63, %s79
    %p81 = scmp.eq.s32.totalorder %s13, 0
    %p82 = por %p80, %p81
    %p83 = scmp.le.s32.totalorder 1, %s7
    %p84 = scmp.lt.s32.totalorder %s7, 3
    %p85 = pnand %p83, %p84
    %p86 = pneg %p85
    // Predicated region
    $region9: #{adv_discriminator_forward.14} parent=5 // pred_check
      _
    $region10: #{adv_discriminator_forward.14} parent=5 // pred_check_branch
      %88 = sbr.rel (%p85) target = $region12
    $region11: #{adv_discriminator_forward.14} parent=5 // pred_region
      %s89 = ssub.s32 %s7, 1
    $region12: #{adv_discriminator_forward.14} parent=5 // pred_fallthru
      _
    %p90 = scmp.lt.s32.totalorder %s7, 2
    // Predicated region
    $region13: #{adv_discriminator_forward.14} parent=5 // pred_check
      %p91 = pneg %p90
    $region14: #{adv_discriminator_forward.14} parent=5 // pred_check_branch
      %93 = sbr.rel (%p91) target = $region16
    $region15: #{adv_discriminator_forward.14} parent=5 // pred_region
      // Predicated region
      $region17: #{adv_discriminator_forward.14} parent=15 // pred_check
        %p94 = pneg %p41
      $region18: #{adv_discriminator_forward.14} parent=15 // pred_check_branch
        %96 = sbr.rel (%p94) target = $region20
      $region19: #{adv_discriminator_forward.14} parent=15 // pred_region
        %p97 = scmp.lt.s32.totalorder %s14, 1
        %s98 = scalar_select %p97, %s14, 1
        %p99 = scmp.lt.s32.totalorder %s15, 0
        %s100 = scalar_select %p99, %s15, 0
        %s101 = smul.addr %s98, 2
        %s102 = sadd.s32 %s100, %s101
        %s103 = smul.addr %s102, 4
        %s104 = scalar_lea.vmem %s0, %s103
      $region20: #{adv_discriminator_forward.14} parent=15 // pred_fallthru
        _
    $region16: #{adv_discriminator_forward.14} parent=5 // pred_fallthru
      _
    %p105 = scmp.le.s32.totalorder 1, %s7
    %p106 = scmp.lt.s32.totalorder %s7, 3
    %p107 = pnand %p105, %p106
    %p108 = pneg %p107
    // Predicated region
    $region21: #{adv_discriminator_forward.14} parent=5 // pred_check
      _
    $region22: #{adv_discriminator_forward.14} parent=5 // pred_check_branch
      %110 = sbr.rel (%p107) target = $region24
    $region23: #{adv_discriminator_forward.14} parent=5 // pred_region
      %s111 = ssub.s32 %s7, 1
      %p112 = scmp.lt.s32.totalorder %s16, 1
      %s113 = scalar_select %p112, %s16, 1
      %p114 = scmp.lt.s32.totalorder %s17, 0
      %s115 = scalar_select %p114, %s17, 0
      %s116 = smul.addr %s113, 2
      %s117 = sadd.s32 %s115, %s116
      %s118 = smul.addr %s117, 4
      %s119 = scalar_lea.vmem %s0, %s118
      %p120 = pneg %p47
      %p121 = pneg %p44
      %p122 = pneg %p75
      %p123 = pneg %p72
      %p124 = scmp.lt.s32.totalorder %s16, 1
      %s125 = scalar_select %p124, %s16, 1
      %p126 = scmp.lt.s32.totalorder %s17, 0
      %s127 = scalar_select %p126, %s17, 0
      %s128 = smul.addr %s125, 2
      %s129 = sadd.s32 %s127, %s128
      %s130 = smul.addr %s129, 4
      %s131 = scalar_lea.vmem %s1, %s130
      %p132 = scmp.lt.s32.totalorder %s16, 1
      %s133 = scalar_select %p132, %s16, 1
      %p134 = scmp.lt.s32.totalorder %s17, 0
      %s135 = scalar_select %p134, %s17, 0
      %s136 = smul.addr %s133, 2
      %s137 = sadd.s32 %s135, %s136
      %s138 = smul.addr %s137, 4
      %s139 = scalar_lea.vmem %s0, %s138
      %p140 = scmp.lt.s32.totalorder %s16, 1
      %s141 = scalar_select %p140, %s16, 1
      %p142 = scmp.lt.s32.totalorder %s17, 0
      %s143 = scalar_select %p142, %s17, 0
      %s144 = smul.addr %s141, 2
      %s145 = sadd.s32 %s143, %s144
      %s146 = smul.addr %s145, 4
      %s147 = scalar_lea.vmem %s1, %s146
      %v148 = vld [vmem:[%s139] sm:$0xf]
      %v149 = vld [vmem:[%s139 + $0x4] sm:$0x1]
      %v150 = vunpack.c.l.bf16 %v148
      %v151 = vunpack.c.l.bf16 %v149
      %vm152 = vcmask 1040384
      %v153 = vsel %vm152, %v151, 0.0
      %v154 = vadd.f32 %v150, %v153
      %v155 = vrot.slane %v154, 4
      %v156 = vadd.f32 %v154, %v155
      %v157 = vrot.slane %v156, 2
      %v158 = vadd.f32 %v156, %v157
      %v159 = vrot.slane %v158, 1
      %v160 = vadd.f32 %v158, %v159
      %v161 = vmul.f32 %v150, %v150
      %v162 = vmul.f32 %v151, %v151
      %v163 = vsel %vm152, %v162, 0.0
      %v164 = vadd.f32 %v161, %v163
      %v165 = vrot.slane %v164, 4
      %v166 = vadd.f32 %v164, %v165
      %v167 = vrot.slane %v166, 2
      %v168 = vadd.f32 %v166, %v167
      %v169 = vrot.slane %v168, 1
      %v170 = vadd.f32 %v168, %v169
      %v171 = vmul.f32 %v160, 0.11111111
      %v172 = vmul.f32 %v170, 0.11111111
      %v173 = vmul.f32 %v171, %v171
      %v174 = vsub.f32 %v172, %v173
      %v175 = vmax.f32 %v174, 0.0
      %v176 = vsub.f32 %v150, %v171
      %v177 = vsub.f32 %v151, %v171
      %v178 = vadd.f32 %v175, 1e-05
      %v179 = vrsqrt.pop %v178
      %v180 = vmul.f32 %v176, %v179
      %v181 = vmul.f32 %v177, %v179
      %vm182 = vcmp.ge.f32.partialorder %v180, 0.0
      %vm183 = vcmp.ge.f32.partialorder %v181, 0.0
      %v184 = vmul.f32 %v180, 0.2
      %v185 = vmul.f32 %v181, 0.2
      %v186 = vsel %vm182, %v180, %v184
      %v187 = vsel %vm183, %v181, %v185
      %v188 = vpack.c.bf16 %v187, %v186
      %v190 = vunpack.c.l.b16 %v188
      %v191 = vunpack.c.h.b16 %v188
      %v192 = vpack.c.b16 %v190, %v190
      %v193 = vpack.c.b16 %v191, %v191
      %196 = vst [vmem:[%s147] sm:$0xf] %v192
      %vm197 = vcmask 1040384
      %vm198 = vsmask.f32 256
      %vm199 = vmand %vm197, %vm198
      %v200 = vld [vmem:[%s147 + $0x4] sm:$0x1]
      %v201 = vsel %vm199, %v193, %v200
      %202 = vst [vmem:[%s147 + $0x4] sm:$0x1] %v201
      %p203 = scmp.lt.s32.totalorder %s16, 1
      %s204 = scalar_select %p203, %s16, 1
      %p205 = scmp.lt.s32.totalorder %s17, 0
      %s206 = scalar_select %p205, %s17, 0
      %s207 = smul.addr %s204, 2
      %s208 = sadd.s32 %s206, %s207
      %s209 = smul.addr %s208, 4
      %s210 = scalar_lea.vmem %s1, %s209
      // Predicated region
      $region25: #{adv_discriminator_forward.14} parent=23 // pred_check
        %p211 = pneg %p72
      $region26: #{adv_discriminator_forward.14} parent=23 // pred_check_branch
        %213 = sbr.rel (%p211) target = $region28
      $region27: #{adv_discriminator_forward.14} parent=23 // pred_region
        _
      $region28: #{adv_discriminator_forward.14} parent=23 // pred_fallthru
        _
    $region24: #{adv_discriminator_forward.14} parent=5 // pred_fallthru
      _
    %p214 = scmp.le.s32.totalorder 2, %s7
    // Predicated region
    $region29: #{adv_discriminator_forward.14} parent=5 // pred_check
      %p215 = pneg %p214
    $region30: #{adv_discriminator_forward.14} parent=5 // pred_check_branch
      %217 = sbr.rel (%p215) target = $region32
    $region31: #{adv_discriminator_forward.14} parent=5 // pred_region
      %s218 = ssub.s32 %s7, 2
      // Predicated region
      $region33: #{adv_discriminator_forward.14} parent=31 // pred_check
        %p219 = pneg %p78
      $region34: #{adv_discriminator_forward.14} parent=31 // pred_check_branch
        %221 = sbr.rel (%p219) target = $region36
      $region35: #{adv_discriminator_forward.14} parent=31 // pred_region
        %p222 = scmp.lt.s32.totalorder %s18, 1
        %s223 = scalar_select %p222, %s18, 1
        %p224 = scmp.lt.s32.totalorder %s19, 0
        %s225 = scalar_select %p224, %s19, 0
        %s226 = smul.addr %s223, 2
        %s227 = sadd.s32 %s225, %s226
        %s228 = smul.addr %s227, 4
        %s229 = scalar_lea.vmem %s1, %s228
      $region36: #{adv_discriminator_forward.14} parent=31 // pred_fallthru
        _
    $region32: #{adv_discriminator_forward.14} parent=5 // pred_fallthru
      _
  $region6: #{adv_discriminator_forward.14} parent=0 // loop_footer
    %s11 = sadd.s32 1, %s7
  $region7: #{adv_discriminator_forward.14} parent=0 // loop_footer_branch
    %6 = sbr.rel target = $region3
  $region8: #{adv_discriminator_forward.14} parent=0 // loop_exit
    _

// kernel: adv_discriminator_forward.13
$region0: #{adv_discriminator_forward.13}
  #allocation0 [shape = 'u32[]', space=smem, size = 0x4, offset = 0x4, fixed_abs, tag = 'smem constant byte address 0x4 - core index']
  #allocation1 [shape = 'u32[144,128]{1,0:T(1,128)}', space=vmem, size = 0x12000, scoped, tag = 'internal scratch']
  %s0 = inlined_call_operand.vmem [shape: bf16[32,512], index: 0, kind: input, shape index: {}]
  %s1 = inlined_call_operand.vmem [shape: bf16[512,128], index: 1, kind: input, shape index: {}]
  %s2 = inlined_call_operand.vmem [shape: bf16[32,128], index: 2, kind: output, shape index: {}]
  %s3 = sld [smem:[#allocation0]]
  $region18: #{adv_discriminator_forward.13} parent=0
    _
  %s5 = ssub.s32 1, %s3
  %s6 = scalar_select 0, %s5, %s3
  // Predicated region
  $region2: #{adv_discriminator_forward.13} parent=0 // pred_check
    _
  $region3: #{adv_discriminator_forward.13} parent=0 // pred_check_branch
    %8 = sbr.rel (0) target = $region5
  $region4: #{adv_discriminator_forward.13} parent=0 // pred_region
    _
  $region5: #{adv_discriminator_forward.13} parent=0 // pred_fallthru
    _
  // Predicated region
  $region6: #{adv_discriminator_forward.13} parent=0 // pred_check
    _
  $region7: #{adv_discriminator_forward.13} parent=0 // pred_check_branch
    %10 = sbr.rel (0) target = $region9
  $region8: #{adv_discriminator_forward.13} parent=0 // pred_region
    _
  $region9: #{adv_discriminator_forward.13} parent=0 // pred_fallthru
    _
  %v12 = vld [vmem:[%s0] sm:$0xff]
  %v13 = vld [vmem:[%s0 + $0x8] sm:$0xff]
  %v14 = vld [vmem:[%s0 + $0x10] sm:$0xff]
  %v15 = vld [vmem:[%s0 + $0x18] sm:$0xff]
  %v16 = vld [vmem:[%s0 + $0x20] sm:$0xff]
  %v17 = vld [vmem:[%s0 + $0x28] sm:$0xff]
  %v18 = vld [vmem:[%s0 + $0x30] sm:$0xff]
  %v19 = vld [vmem:[%s0 + $0x38] sm:$0xff]
  %v20 = vld [vmem:[%s1] sm:$0xf]
  %v21 = vld [vmem:[%s1 + $0x4] sm:$0xf]
  %v22 = vld [vmem:[%s1 + $0x8] sm:$0xf]
  %v23 = vld [vmem:[%s1 + $0xc] sm:$0xf]
  %v24 = vld [vmem:[%s1 + $0x10] sm:$0xf]
  %v25 = vld [vmem:[%s1 + $0x14] sm:$0xf]
  %v26 = vld [vmem:[%s1 + $0x18] sm:$0xf]
  %v27 = vld [vmem:[%s1 + $0x1c] sm:$0xf]
  %v28 = vld [vmem:[%s1 + $0x20] sm:$0xf]
  %v29 = vld [vmem:[%s1 + $0x24] sm:$0xf]
  %v30 = vld [vmem:[%s1 + $0x28] sm:$0xf]
  %v31 = vld [vmem:[%s1 + $0x2c] sm:$0xf]
  %v32 = vld [vmem:[%s1 + $0x30] sm:$0xf]
  %v33 = vld [vmem:[%s1 + $0x34] sm:$0xf]
  %v34 = vld [vmem:[%s1 + $0x38] sm:$0xf]
  %v35 = vld [vmem:[%s1 + $0x3c] sm:$0xf]
  %v36 = vld [vmem:[%s1 + $0x40] sm:$0xf]
  %v37 = vld [vmem:[%s1 + $0x44] sm:$0xf]
  %v38 = vld [vmem:[%s1 + $0x48] sm:$0xf]
  %v39 = vld [vmem:[%s1 + $0x4c] sm:$0xf]
  %v40 = vld [vmem:[%s1 + $0x50] sm:$0xf]
  %v41 = vld [vmem:[%s1 + $0x54] sm:$0xf]
  %v42 = vld [vmem:[%s1 + $0x58] sm:$0xf]
  %v43 = vld [vmem:[%s1 + $0x5c] sm:$0xf]
  %v44 = vld [vmem:[%s1 + $0x60] sm:$0xf]
  %v45 = vld [vmem:[%s1 + $0x64] sm:$0xf]
  %v46 = vld [vmem:[%s1 + $0x68] sm:$0xf]
  %v47 = vld [vmem:[%s1 + $0x6c] sm:$0xf]
  %v48 = vld [vmem:[%s1 + $0x70] sm:$0xf]
  %v49 = vld [vmem:[%s1 + $0x74] sm:$0xf]
  %v50 = vld [vmem:[%s1 + $0x78] sm:$0xf]
  %v51 = vld [vmem:[%s1 + $0x7c] sm:$0xf]
  %v52 = vld [vmem:[%s1 + $0x80] sm:$0xf]
  %v53 = vld [vmem:[%s1 + $0x84] sm:$0xf]
  %v54 = vld [vmem:[%s1 + $0x88] sm:$0xf]
  %v55 = vld [vmem:[%s1 + $0x8c] sm:$0xf]
  %v56 = vld [vmem:[%s1 + $0x90] sm:$0xf]
  %v57 = vld [vmem:[%s1 + $0x94] sm:$0xf]
  %v58 = vld [vmem:[%s1 + $0x98] sm:$0xf]
  %v59 = vld [vmem:[%s1 + $0x9c] sm:$0xf]
  %v60 = vld [vmem:[%s1 + $0xa0] sm:$0xf]
  %v61 = vld [vmem:[%s1 + $0xa4] sm:$0xf]
  %v62 = vld [vmem:[%s1 + $0xa8] sm:$0xf]
  %v63 = vld [vmem:[%s1 + $0xac] sm:$0xf]
  %v64 = vld [vmem:[%s1 + $0xb0] sm:$0xf]
  %v65 = vld [vmem:[%s1 + $0xb4] sm:$0xf]
  %v66 = vld [vmem:[%s1 + $0xb8] sm:$0xf]
  %v67 = vld [vmem:[%s1 + $0xbc] sm:$0xf]
  %v68 = vld [vmem:[%s1 + $0xc0] sm:$0xf]
  %v69 = vld [vmem:[%s1 + $0xc4] sm:$0xf]
  %v70 = vld [vmem:[%s1 + $0xc8] sm:$0xf]
  %v71 = vld [vmem:[%s1 + $0xcc] sm:$0xf]
  %v72 = vld [vmem:[%s1 + $0xd0] sm:$0xf]
  %v73 = vld [vmem:[%s1 + $0xd4] sm:$0xf]
  %v74 = vld [vmem:[%s1 + $0xd8] sm:$0xf]
  %v75 = vld [vmem:[%s1 + $0xdc] sm:$0xf]
  %v76 = vld [vmem:[%s1 + $0xe0] sm:$0xf]
  %v77 = vld [vmem:[%s1 + $0xe4] sm:$0xf]
  %v78 = vld [vmem:[%s1 + $0xe8] sm:$0xf]
  %v79 = vld [vmem:[%s1 + $0xec] sm:$0xf]
  %v80 = vld [vmem:[%s1 + $0xf0] sm:$0xf]
  %v81 = vld [vmem:[%s1 + $0xf4] sm:$0xf]
  %v82 = vld [vmem:[%s1 + $0xf8] sm:$0xf]
  %v83 = vld [vmem:[%s1 + $0xfc] sm:$0xf]
  %v92 = vunpack.c.l.b16 %v12
  %v93 = vunpack.c.h.b16 %v12
  %v94 = vunpack.c.l.b16 %v13
  %v95 = vunpack.c.h.b16 %v13
  %v96 = vunpack.c.l.b16 %v14
  %v97 = vunpack.c.h.b16 %v14
  %v98 = vunpack.c.l.b16 %v15
  %v99 = vunpack.c.h.b16 %v15
  %v100 = vunpack.c.l.b16 %v16
  %v101 = vunpack.c.h.b16 %v16
  %v102 = vunpack.c.l.b16 %v17
  %v103 = vunpack.c.h.b16 %v17
  %v104 = vunpack.c.l.b16 %v18
  %v105 = vunpack.c.h.b16 %v18
  %v106 = vunpack.c.l.b16 %v19
  %v107 = vunpack.c.h.b16 %v19
  %v108 = vpack.c.b16 %v96, %v92
  %v109 = vpack.c.b16 %v97, %v93
  %v110 = vpack.c.b16 %v98, %v94
  %v111 = vpack.c.b16 %v99, %v95
  %v112 = vpack.c.b16 %v104, %v100
  %v113 = vpack.c.b16 %v105, %v101
  %v114 = vpack.c.b16 %v106, %v102
  %v115 = vpack.c.b16 %v107, %v103
  %v188 = vunpack.c.l.b16 %v20
  %v189 = vunpack.c.l.b16 %v21
  %v190 = vunpack.c.l.b16 %v22
  %v191 = vunpack.c.l.b16 %v23
  %v192 = vunpack.c.l.b16 %v24
  %v193 = vunpack.c.l.b16 %v25
  %v194 = vunpack.c.l.b16 %v26
  %v195 = vunpack.c.l.b16 %v27
  %v196 = vunpack.c.l.b16 %v28
  %v197 = vunpack.c.l.b16 %v29
  %v198 = vunpack.c.l.b16 %v30
  %v199 = vunpack.c.l.b16 %v31
  %v200 = vunpack.c.l.b16 %v32
  %v201 = vunpack.c.l.b16 %v33
  %v202 = vunpack.c.l.b16 %v34
  %v203 = vunpack.c.l.b16 %v35
  %v204 = vunpack.c.l.b16 %v36
  %v205 = vunpack.c.l.b16 %v37
  %v206 = vunpack.c.l.b16 %v38
  %v207 = vunpack.c.l.b16 %v39
  %v208 = vunpack.c.l.b16 %v40
  %v209 = vunpack.c.l.b16 %v41
  %v210 = vunpack.c.l.b16 %v42
  %v211 = vunpack.c.l.b16 %v43
  %v212 = vunpack.c.l.b16 %v44
  %v213 = vunpack.c.l.b16 %v45
  %v214 = vunpack.c.l.b16 %v46
  %v215 = vunpack.c.l.b16 %v47
  %v216 = vunpack.c.l.b16 %v48
  %v217 = vunpack.c.l.b16 %v49
  %v218 = vunpack.c.l.b16 %v50
  %v219 = vunpack.c.l.b16 %v51
  %v220 = vunpack.c.l.b16 %v52
  %v221 = vunpack.c.l.b16 %v53
  %v222 = vunpack.c.l.b16 %v54
  %v223 = vunpack.c.l.b16 %v55
  %v224 = vunpack.c.l.b16 %v56
  %v225 = vunpack.c.l.b16 %v57
  %v226 = vunpack.c.l.b16 %v58
  %v227 = vunpack.c.l.b16 %v59
  %v228 = vunpack.c.l.b16 %v60
  %v229 = vunpack.c.l.b16 %v61
  %v230 = vunpack.c.l.b16 %v62
  %v231 = vunpack.c.l.b16 %v63
  %v232 = vunpack.c.l.b16 %v64
  %v233 = vunpack.c.l.b16 %v65
  %v234 = vunpack.c.l.b16 %v66
  %v235 = vunpack.c.l.b16 %v67
  %v236 = vunpack.c.l.b16 %v68
  %v237 = vunpack.c.l.b16 %v69
  %v238 = vunpack.c.l.b16 %v70
  %v239 = vunpack.c.l.b16 %v71
  %v240 = vunpack.c.l.b16 %v72
  %v241 = vunpack.c.l.b16 %v73
  %v242 = vunpack.c.l.b16 %v74
  %v243 = vunpack.c.l.b16 %v75
  %v244 = vunpack.c.l.b16 %v76
  %v245 = vunpack.c.l.b16 %v77
  %v246 = vunpack.c.l.b16 %v78
  %v247 = vunpack.c.l.b16 %v79
  %v248 = vunpack.c.l.b16 %v80
  %v249 = vunpack.c.l.b16 %v81
  %v250 = vunpack.c.l.b16 %v82
  %v251 = vunpack.c.l.b16 %v83
  %v252 = vpack.c.b16 %v189, %v188
  %v253 = vpack.c.b16 %v191, %v190
  %v254 = vpack.c.b16 %v193, %v192
  %v255 = vpack.c.b16 %v195, %v194
  %v256 = vpack.c.b16 %v197, %v196
  %v257 = vpack.c.b16 %v199, %v198
  %v258 = vpack.c.b16 %v201, %v200
  %v259 = vpack.c.b16 %v203, %v202
  %v260 = vpack.c.b16 %v205, %v204
  %v261 = vpack.c.b16 %v207, %v206
  %v262 = vpack.c.b16 %v209, %v208
  %v263 = vpack.c.b16 %v211, %v210
  %v264 = vpack.c.b16 %v213, %v212
  %v265 = vpack.c.b16 %v215, %v214
  %v266 = vpack.c.b16 %v217, %v216
  %v267 = vpack.c.b16 %v219, %v218
  %v268 = vpack.c.b16 %v221, %v220
  %v269 = vpack.c.b16 %v223, %v222
  %v270 = vpack.c.b16 %v225, %v224
  %v271 = vpack.c.b16 %v227, %v226
  %v272 = vpack.c.b16 %v229, %v228
  %v273 = vpack.c.b16 %v231, %v230
  %v274 = vpack.c.b16 %v233, %v232
  %v275 = vpack.c.b16 %v235, %v234
  %v276 = vpack.c.b16 %v237, %v236
  %v277 = vpack.c.b16 %v239, %v238
  %v278 = vpack.c.b16 %v241, %v240
  %v279 = vpack.c.b16 %v243, %v242
  %v280 = vpack.c.b16 %v245, %v244
  %v281 = vpack.c.b16 %v247, %v246
  %v282 = vpack.c.b16 %v249, %v248
  %v283 = vpack.c.b16 %v251, %v250
  %316 = vmatprep.subr.bf16.mxu0 0
  %317 = vmatpush1.bf16.msra.mxu0 %v252
  %318 = vmatprep.subr.bf16.mxu0 0
  %319 = vmatpush1.bf16.msra.mxu0 %v253
  %320 = vmatprep.subr.bf16.mxu0 0
  %321 = vmatpush1.bf16.msra.mxu0 %v254
  %322 = vmatprep.subr.bf16.mxu0 0
  %323 = vmatpush1.bf16.msra.mxu0 %v255
  %324 = vmatprep.subr.bf16.mxu0 0
  %325 = vmatpush1.bf16.msra.mxu0 %v256
  %326 = vmatprep.subr.bf16.mxu0 0
  %327 = vmatpush1.bf16.msra.mxu0 %v257
  %328 = vmatprep.subr.bf16.mxu0 0
  %329 = vmatpush1.bf16.msra.mxu0 %v258
  %330 = vmatprep.subr.bf16.mxu0 0
  %331 = vmatpush1.bf16.msra.mxu0 %v259
  %332 = vmatprep.subr.bf16.mxu0 0
  %333 = vmatpush1.bf16.msra.mxu0 %v260
  %334 = vmatprep.subr.bf16.mxu0 0
  %335 = vmatpush1.bf16.msra.mxu0 %v261
  %336 = vmatprep.subr.bf16.mxu0 0
  %337 = vmatpush1.bf16.msra.mxu0 %v262
  %338 = vmatprep.subr.bf16.mxu0 0
  %339 = vmatpush1.bf16.msra.mxu0 %v263
  %340 = vmatprep.subr.bf16.mxu0 0
  %341 = vmatpush1.bf16.msra.mxu0 %v264
  %342 = vmatprep.subr.bf16.mxu0 0
  %343 = vmatpush1.bf16.msra.mxu0 %v265
  %344 = vmatprep.subr.bf16.mxu0 0
  %345 = vmatpush1.bf16.msra.mxu0 %v266
  %346 = vmatprep.subr.bf16.mxu0 0
  %347 = vmatpush1.bf16.msra.mxu0 %v267
  %348 = vmatprep.mubr.bf16.mxu0 %v109
  %349 = vmatmul.mubr.bf16.gmra.mrb[0].mxu0 %v108
  %v350 = vpop.f32.mrb[0].mxu0
  %v351 = vadd.f32 0.0, %v350
  %v352 = vpop.f32.mrb[0].mxu0
  %v353 = vpop.f32.mrb[0].mxu0
  %v354 = vadd.f32 0.0, %v353
  %v355 = vpop.f32.mrb[0].mxu0
  %356 = vmatprep.mubr.bf16.mxu0 %v113
  %357 = vmatmul.mubr.bf16.gmra.mrb[0].mxu0 %v112
  %v358 = vpop.f32.mrb[0].mxu0
  %v359 = vadd.f32 0.0, %v358
  %v360 = vpop.f32.mrb[0].mxu0
  %v361 = vpop.f32.mrb[0].mxu0
  %v362 = vadd.f32 0.0, %v361
  %v363 = vpop.f32.mrb[0].mxu0
  %364 = vdwg.mxu0
  %365 = vmatprep.subr.bf16.mxu0 0
  %366 = vmatpush1.bf16.msra.mxu0 %v268
  %367 = vmatprep.subr.bf16.mxu0 0
  %368 = vmatpush1.bf16.msra.mxu0 %v269
  %369 = vmatprep.subr.bf16.mxu0 0
  %370 = vmatpush1.bf16.msra.mxu0 %v270
  %371 = vmatprep.subr.bf16.mxu0 0
  %372 = vmatpush1.bf16.msra.mxu0 %v271
  %373 = vmatprep.subr.bf16.mxu0 0
  %374 = vmatpush1.bf16.msra.mxu0 %v272
  %375 = vmatprep.subr.bf16.mxu0 0
  %376 = vmatpush1.bf16.msra.mxu0 %v273
  %377 = vmatprep.subr.bf16.mxu0 0
  %378 = vmatpush1.bf16.msra.mxu0 %v274
  %379 = vmatprep.subr.bf16.mxu0 0
  %380 = vmatpush1.bf16.msra.mxu0 %v275
  %381 = vmatprep.subr.bf16.mxu0 0
  %382 = vmatpush1.bf16.msra.mxu0 %v276
  %383 = vmatprep.subr.bf16.mxu0 0
  %384 = vmatpush1.bf16.msra.mxu0 %v277
  %385 = vmatprep.subr.bf16.mxu0 0
  %386 = vmatpush1.bf16.msra.mxu0 %v278
  %387 = vmatprep.subr.bf16.mxu0 0
  %388 = vmatpush1.bf16.msra.mxu0 %v279
  %389 = vmatprep.subr.bf16.mxu0 0
  %390 = vmatpush1.bf16.msra.mxu0 %v280
  %391 = vmatprep.subr.bf16.mxu0 0
  %392 = vmatpush1.bf16.msra.mxu0 %v281
  %393 = vmatprep.subr.bf16.mxu0 0
  %394 = vmatpush1.bf16.msra.mxu0 %v282
  %395 = vmatprep.subr.bf16.mxu0 0
  %396 = vmatpush1.bf16.msra.mxu0 %v283
  %397 = vmatprep.mubr.bf16.mxu0 %v111
  %398 = vmatmul.mubr.bf16.gmra.mrb[0].mxu0 %v110
  %v399 = vpop.f32.mrb[0].mxu0
  %v400 = vadd.f32 %v351, %v399
  %v401 = vpop.f32.mrb[0].mxu0
  %v402 = vpop.f32.mrb[0].mxu0
  %v403 = vadd.f32 %v354, %v402
  %v404 = vpop.f32.mrb[0].mxu0
  %405 = vmatprep.mubr.bf16.mxu0 %v115
  %406 = vmatmul.mubr.bf16.gmra.mrb[0].mxu0 %v114
  %v407 = vpop.f32.mrb[0].mxu0
  %v408 = vadd.f32 %v359, %v407
  %v409 = vpop.f32.mrb[0].mxu0
  %v410 = vpop.f32.mrb[0].mxu0
  %v411 = vadd.f32 %v362, %v410
  %v412 = vpop.f32.mrb[0].mxu0
  %413 = vdwg.mxu0
  %v414 = vpack.c.bf16 %v403, %v400
  %v415 = vpack.c.bf16 %v411, %v408
  %v418 = vunpack.c.l.b16 %v414
  %v419 = vunpack.c.h.b16 %v414
  %v420 = vunpack.c.l.b16 %v415
  %v421 = vunpack.c.h.b16 %v415
  %v422 = vpack.c.b16 %v418, %v418
  %v423 = vpack.c.b16 %v419, %v419
  %v424 = vpack.c.b16 %v420, %v420
  %v425 = vpack.c.b16 %v421, %v421
  %430 = vst [vmem:[%s2] sm:$0xf] %v422
  %431 = vst [vmem:[%s2 + $0x4] sm:$0xf] %v423
  %432 = vst [vmem:[%s2 + $0x8] sm:$0xf] %v424
  %433 = vst [vmem:[%s2 + $0xc] sm:$0xf] %v425
  // Predicated region
  $region10: #{adv_discriminator_forward.13} parent=0 // pred_check
    _
  $region11: #{adv_discriminator_forward.13} parent=0 // pred_check_branch
    %435 = sbr.rel (0) target = $region13
  $region12: #{adv_discriminator_forward.13} parent=0 // pred_region
    _
  $region13: #{adv_discriminator_forward.13} parent=0 // pred_fallthru
    _
  // Predicated region
  $region14: #{adv_discriminator_forward.13} parent=0 // pred_check
    _
  $region15: #{adv_discriminator_forward.13} parent=0 // pred_check_branch
    %437 = sbr.rel (0) target = $region17
  $region16: #{adv_discriminator_forward.13} parent=0 // pred_region
    _
  $region17: #{adv_discriminator_forward.13} parent=0 // pred_fallthru
    _

// kernel: adv_discriminator_forward.15
$region0: #{adv_discriminator_forward.15}
  #allocation0 [shape = 'u32[]', space=smem, size = 0x4, offset = 0x4, fixed_abs, tag = 'smem constant byte address 0x4 - core index']
  #allocation1 [shape = 'u32[144,128]{1,0:T(1,128)}', space=vmem, size = 0x12000, scoped, tag = 'internal scratch']
  %s0 = inlined_call_operand.vmem [shape: bf16[16,1024], index: 0, kind: input, shape index: {}]
  %s1 = inlined_call_operand.vmem [shape: bf16[1024,128], index: 1, kind: input, shape index: {}]
  %s2 = inlined_call_operand.vmem [shape: f32[1,128], index: 2, kind: input, shape index: {}]
  %s3 = inlined_call_operand.vmem [shape: bf16[16,128], index: 3, kind: output, shape index: {}]
  %s4 = sld [smem:[#allocation0]]
  $region22: #{adv_discriminator_forward.15} parent=0
    _
  %s6 = ssub.s32 1, %s4
  %s7 = scalar_select 0, %s6, %s4
  // Predicated region
  $region2: #{adv_discriminator_forward.15} parent=0 // pred_check
    _
  $region3: #{adv_discriminator_forward.15} parent=0 // pred_check_branch
    %9 = sbr.rel (0) target = $region5
  $region4: #{adv_discriminator_forward.15} parent=0 // pred_region
    _
  $region5: #{adv_discriminator_forward.15} parent=0 // pred_fallthru
    _
  // Predicated region
  $region6: #{adv_discriminator_forward.15} parent=0 // pred_check
    _
  $region7: #{adv_discriminator_forward.15} parent=0 // pred_check_branch
    %11 = sbr.rel (0) target = $region9
  $region8: #{adv_discriminator_forward.15} parent=0 // pred_region
    _
  $region9: #{adv_discriminator_forward.15} parent=0 // pred_fallthru
    _
  // Predicated region
  $region10: #{adv_discriminator_forward.15} parent=0 // pred_check
    _
  $region11: #{adv_discriminator_forward.15} parent=0 // pred_check_branch
    %13 = sbr.rel (0) target = $region13
  $region12: #{adv_discriminator_forward.15} parent=0 // pred_region
    _
  $region13: #{adv_discriminator_forward.15} parent=0 // pred_fallthru
    _
  %v15 = vld [vmem:[%s0] sm:$0xff]
  %v16 = vld [vmem:[%s0 + $0x8] sm:$0xff]
  %v17 = vld [vmem:[%s0 + $0x10] sm:$0xff]
  %v18 = vld [vmem:[%s0 + $0x18] sm:$0xff]
  %v19 = vld [vmem:[%s0 + $0x20] sm:$0xff]
  %v20 = vld [vmem:[%s0 + $0x28] sm:$0xff]
  %v21 = vld [vmem:[%s0 + $0x30] sm:$0xff]
  %v22 = vld [vmem:[%s0 + $0x38] sm:$0xff]
  %v23 = vld [vmem:[%s1] sm:$0xf]
  %v24 = vld [vmem:[%s1 + $0x4] sm:$0xf]
  %v25 = vld [vmem:[%s1 + $0x8] sm:$0xf]
  %v26 = vld [vmem:[%s1 + $0xc] sm:$0xf]
  %v27 = vld [vmem:[%s1 + $0x10] sm:$0xf]
  %v28 = vld [vmem:[%s1 + $0x14] sm:$0xf]
  %v29 = vld [vmem:[%s1 + $0x18] sm:$0xf]
  %v30 = vld [vmem:[%s1 + $0x1c] sm:$0xf]
  %v31 = vld [vmem:[%s1 + $0x20] sm:$0xf]
  %v32 = vld [vmem:[%s1 + $0x24] sm:$0xf]
  %v33 = vld [vmem:[%s1 + $0x28] sm:$0xf]
  %v34 = vld [vmem:[%s1 + $0x2c] sm:$0xf]
  %v35 = vld [vmem:[%s1 + $0x30] sm:$0xf]
  %v36 = vld [vmem:[%s1 + $0x34] sm:$0xf]
  %v37 = vld [vmem:[%s1 + $0x38] sm:$0xf]
  %v38 = vld [vmem:[%s1 + $0x3c] sm:$0xf]
  %v39 = vld [vmem:[%s1 + $0x40] sm:$0xf]
  %v40 = vld [vmem:[%s1 + $0x44] sm:$0xf]
  %v41 = vld [vmem:[%s1 + $0x48] sm:$0xf]
  %v42 = vld [vmem:[%s1 + $0x4c] sm:$0xf]
  %v43 = vld [vmem:[%s1 + $0x50] sm:$0xf]
  %v44 = vld [vmem:[%s1 + $0x54] sm:$0xf]
  %v45 = vld [vmem:[%s1 + $0x58] sm:$0xf]
  %v46 = vld [vmem:[%s1 + $0x5c] sm:$0xf]
  %v47 = vld [vmem:[%s1 + $0x60] sm:$0xf]
  %v48 = vld [vmem:[%s1 + $0x64] sm:$0xf]
  %v49 = vld [vmem:[%s1 + $0x68] sm:$0xf]
  %v50 = vld [vmem:[%s1 + $0x6c] sm:$0xf]
  %v51 = vld [vmem:[%s1 + $0x70] sm:$0xf]
  %v52 = vld [vmem:[%s1 + $0x74] sm:$0xf]
  %v53 = vld [vmem:[%s1 + $0x78] sm:$0xf]
  %v54 = vld [vmem:[%s1 + $0x7c] sm:$0xf]
  %v55 = vld [vmem:[%s1 + $0x80] sm:$0xf]
  %v56 = vld [vmem:[%s1 + $0x84] sm:$0xf]
  %v57 = vld [vmem:[%s1 + $0x88] sm:$0xf]
  %v58 = vld [vmem:[%s1 + $0x8c] sm:$0xf]
  %v59 = vld [vmem:[%s1 + $0x90] sm:$0xf]
  %v60 = vld [vmem:[%s1 + $0x94] sm:$0xf]
  %v61 = vld [vmem:[%s1 + $0x98] sm:$0xf]
  %v62 = vld [vmem:[%s1 + $0x9c] sm:$0xf]
  %v63 = vld [vmem:[%s1 + $0xa0] sm:$0xf]
  %v64 = vld [vmem:[%s1 + $0xa4] sm:$0xf]
  %v65 = vld [vmem:[%s1 + $0xa8] sm:$0xf]
  %v66 = vld [vmem:[%s1 + $0xac] sm:$0xf]
  %v67 = vld [vmem:[%s1 + $0xb0] sm:$0xf]
  %v68 = vld [vmem:[%s1 + $0xb4] sm:$0xf]
  %v69 = vld [vmem:[%s1 + $0xb8] sm:$0xf]
  %v70 = vld [vmem:[%s1 + $0xbc] sm:$0xf]
  %v71 = vld [vmem:[%s1 + $0xc0] sm:$0xf]
  %v72 = vld [vmem:[%s1 + $0xc4] sm:$0xf]
  %v73 = vld [vmem:[%s1 + $0xc8] sm:$0xf]
  %v74 = vld [vmem:[%s1 + $0xcc] sm:$0xf]
  %v75 = vld [vmem:[%s1 + $0xd0] sm:$0xf]
  %v76 = vld [vmem:[%s1 + $0xd4] sm:$0xf]
  %v77 = vld [vmem:[%s1 + $0xd8] sm:$0xf]
  %v78 = vld [vmem:[%s1 + $0xdc] sm:$0xf]
  %v79 = vld [vmem:[%s1 + $0xe0] sm:$0xf]
  %v80 = vld [vmem:[%s1 + $0xe4] sm:$0xf]
  %v81 = vld [vmem:[%s1 + $0xe8] sm:$0xf]
  %v82 = vld [vmem:[%s1 + $0xec] sm:$0xf]
  %v83 = vld [vmem:[%s1 + $0xf0] sm:$0xf]
  %v84 = vld [vmem:[%s1 + $0xf4] sm:$0xf]
  %v85 = vld [vmem:[%s1 + $0xf8] sm:$0xf]
  %v86 = vld [vmem:[%s1 + $0xfc] sm:$0xf]
  %v87 = vld [vmem:[%s1 + $0x100] sm:$0xf]
  %v88 = vld [vmem:[%s1 + $0x104] sm:$0xf]
  %v89 = vld [vmem:[%s1 + $0x108] sm:$0xf]
  %v90 = vld [vmem:[%s1 + $0x10c] sm:$0xf]
  %v91 = vld [vmem:[%s1 + $0x110] sm:$0xf]
  %v92 = vld [vmem:[%s1 + $0x114] sm:$0xf]
  %v93 = vld [vmem:[%s1 + $0x118] sm:$0xf]
  %v94 = vld [vmem:[%s1 + $0x11c] sm:$0xf]
  %v95 = vld [vmem:[%s1 + $0x120] sm:$0xf]
  %v96 = vld [vmem:[%s1 + $0x124] sm:$0xf]
  %v97 = vld [vmem:[%s1 + $0x128] sm:$0xf]
  %v98 = vld [vmem:[%s1 + $0x12c] sm:$0xf]
  %v99 = vld [vmem:[%s1 + $0x130] sm:$0xf]
  %v100 = vld [vmem:[%s1 + $0x134] sm:$0xf]
  %v101 = vld [vmem:[%s1 + $0x138] sm:$0xf]
  %v102 = vld [vmem:[%s1 + $0x13c] sm:$0xf]
  %v103 = vld [vmem:[%s1 + $0x140] sm:$0xf]
  %v104 = vld [vmem:[%s1 + $0x144] sm:$0xf]
  %v105 = vld [vmem:[%s1 + $0x148] sm:$0xf]
  %v106 = vld [vmem:[%s1 + $0x14c] sm:$0xf]
  %v107 = vld [vmem:[%s1 + $0x150] sm:$0xf]
  %v108 = vld [vmem:[%s1 + $0x154] sm:$0xf]
  %v109 = vld [vmem:[%s1 + $0x158] sm:$0xf]
  %v110 = vld [vmem:[%s1 + $0x15c] sm:$0xf]
  %v111 = vld [vmem:[%s1 + $0x160] sm:$0xf]
  %v112 = vld [vmem:[%s1 + $0x164] sm:$0xf]
  %v113 = vld [vmem:[%s1 + $0x168] sm:$0xf]
  %v114 = vld [vmem:[%s1 + $0x16c] sm:$0xf]
  %v115 = vld [vmem:[%s1 + $0x170] sm:$0xf]
  %v116 = vld [vmem:[%s1 + $0x174] sm:$0xf]
  %v117 = vld [vmem:[%s1 + $0x178] sm:$0xf]
  %v118 = vld [vmem:[%s1 + $0x17c] sm:$0xf]
  %v119 = vld [vmem:[%s1 + $0x180] sm:$0xf]
  %v120 = vld [vmem:[%s1 + $0x184] sm:$0xf]
  %v121 = vld [vmem:[%s1 + $0x188] sm:$0xf]
  %v122 = vld [vmem:[%s1 + $0x18c] sm:$0xf]
  %v123 = vld [vmem:[%s1 + $0x190] sm:$0xf]
  %v124 = vld [vmem:[%s1 + $0x194] sm:$0xf]
  %v125 = vld [vmem:[%s1 + $0x198] sm:$0xf]
  %v126 = vld [vmem:[%s1 + $0x19c] sm:$0xf]
  %v127 = vld [vmem:[%s1 + $0x1a0] sm:$0xf]
  %v128 = vld [vmem:[%s1 + $0x1a4] sm:$0xf]
  %v129 = vld [vmem:[%s1 + $0x1a8] sm:$0xf]
  %v130 = vld [vmem:[%s1 + $0x1ac] sm:$0xf]
  %v131 = vld [vmem:[%s1 + $0x1b0] sm:$0xf]
  %v132 = vld [vmem:[%s1 + $0x1b4] sm:$0xf]
  %v133 = vld [vmem:[%s1 + $0x1b8] sm:$0xf]
  %v134 = vld [vmem:[%s1 + $0x1bc] sm:$0xf]
  %v135 = vld [vmem:[%s1 + $0x1c0] sm:$0xf]
  %v136 = vld [vmem:[%s1 + $0x1c4] sm:$0xf]
  %v137 = vld [vmem:[%s1 + $0x1c8] sm:$0xf]
  %v138 = vld [vmem:[%s1 + $0x1cc] sm:$0xf]
  %v139 = vld [vmem:[%s1 + $0x1d0] sm:$0xf]
  %v140 = vld [vmem:[%s1 + $0x1d4] sm:$0xf]
  %v141 = vld [vmem:[%s1 + $0x1d8] sm:$0xf]
  %v142 = vld [vmem:[%s1 + $0x1dc] sm:$0xf]
  %v143 = vld [vmem:[%s1 + $0x1e0] sm:$0xf]
  %v144 = vld [vmem:[%s1 + $0x1e4] sm:$0xf]
  %v145 = vld [vmem:[%s1 + $0x1e8] sm:$0xf]
  %v146 = vld [vmem:[%s1 + $0x1ec] sm:$0xf]
  %v147 = vld [vmem:[%s1 + $0x1f0] sm:$0xf]
  %v148 = vld [vmem:[%s1 + $0x1f4] sm:$0xf]
  %v149 = vld [vmem:[%s1 + $0x1f8] sm:$0xf]
  %v150 = vld [vmem:[%s1 + $0x1fc] sm:$0xf]
  %v151 = vld [vmem:[%s2] sm:$0x1]
  %v153 = vlaneseq
  %v154 = vshrl.u32 %v153, 7
  %v155 = vsub.s32 0, %v154
  %v156 = vrot.slane %v151, %v155
  %v166 = vunpack.c.l.b16 %v15
  %v167 = vunpack.c.h.b16 %v15
  %v168 = vunpack.c.l.b16 %v16
  %v169 = vunpack.c.h.b16 %v16
  %v170 = vunpack.c.l.b16 %v17
  %v171 = vunpack.c.h.b16 %v17
  %v172 = vunpack.c.l.b16 %v18
  %v173 = vunpack.c.h.b16 %v18
  %v174 = vunpack.c.l.b16 %v19
  %v175 = vunpack.c.h.b16 %v19
  %v176 = vunpack.c.l.b16 %v20
  %v177 = vunpack.c.h.b16 %v20
  %v178 = vunpack.c.l.b16 %v21
  %v179 = vunpack.c.h.b16 %v21
  %v180 = vunpack.c.l.b16 %v22
  %v181 = vunpack.c.h.b16 %v22
  %v182 = vpack.c.b16 %v174, %v166
  %v183 = vpack.c.b16 %v175, %v167
  %v184 = vpack.c.b16 %v176, %v168
  %v185 = vpack.c.b16 %v177, %v169
  %v186 = vpack.c.b16 %v178, %v170
  %v187 = vpack.c.b16 %v179, %v171
  %v188 = vpack.c.b16 %v180, %v172
  %v189 = vpack.c.b16 %v181, %v173
  %v326 = vunpack.c.l.b16 %v23
  %v327 = vunpack.c.l.b16 %v24
  %v328 = vunpack.c.l.b16 %v25
  %v329 = vunpack.c.l.b16 %v26
  %v330 = vunpack.c.l.b16 %v27
  %v331 = vunpack.c.l.b16 %v28
  %v332 = vunpack.c.l.b16 %v29
  %v333 = vunpack.c.l.b16 %v30
  %v334 = vunpack.c.l.b16 %v31
  %v335 = vunpack.c.l.b16 %v32
  %v336 = vunpack.c.l.b16 %v33
  %v337 = vunpack.c.l.b16 %v34
  %v338 = vunpack.c.l.b16 %v35
  %v339 = vunpack.c.l.b16 %v36
  %v340 = vunpack.c.l.b16 %v37
  %v341 = vunpack.c.l.b16 %v38
  %v342 = vunpack.c.l.b16 %v39
  %v343 = vunpack.c.l.b16 %v40
  %v344 = vunpack.c.l.b16 %v41
  %v345 = vunpack.c.l.b16 %v42
  %v346 = vunpack.c.l.b16 %v43
  %v347 = vunpack.c.l.b16 %v44
  %v348 = vunpack.c.l.b16 %v45
  %v349 = vunpack.c.l.b16 %v46
  %v350 = vunpack.c.l.b16 %v47
  %v351 = vunpack.c.l.b16 %v48
  %v352 = vunpack.c.l.b16 %v49
  %v353 = vunpack.c.l.b16 %v50
  %v354 = vunpack.c.l.b16 %v51
  %v355 = vunpack.c.l.b16 %v52
  %v356 = vunpack.c.l.b16 %v53
  %v357 = vunpack.c.l.b16 %v54
  %v358 = vunpack.c.l.b16 %v55
  %v359 = vunpack.c.l.b16 %v56
  %v360 = vunpack.c.l.b16 %v57
  %v361 = vunpack.c.l.b16 %v58
  %v362 = vunpack.c.l.b16 %v59
  %v363 = vunpack.c.l.b16 %v60
  %v364 = vunpack.c.l.b16 %v61
  %v365 = vunpack.c.l.b16 %v62
  %v366 = vunpack.c.l.b16 %v63
  %v367 = vunpack.c.l.b16 %v64
  %v368 = vunpack.c.l.b16 %v65
  %v369 = vunpack.c.l.b16 %v66
  %v370 = vunpack.c.l.b16 %v67
  %v371 = vunpack.c.l.b16 %v68
  %v372 = vunpack.c.l.b16 %v69
  %v373 = vunpack.c.l.b16 %v70
  %v374 = vunpack.c.l.b16 %v71
  %v375 = vunpack.c.l.b16 %v72
  %v376 = vunpack.c.l.b16 %v73
  %v377 = vunpack.c.l.b16 %v74
  %v378 = vunpack.c.l.b16 %v75
  %v379 = vunpack.c.l.b16 %v76
  %v380 = vunpack.c.l.b16 %v77
  %v381 = vunpack.c.l.b16 %v78
  %v382 = vunpack.c.l.b16 %v79
  %v383 = vunpack.c.l.b16 %v80
  %v384 = vunpack.c.l.b16 %v81
  %v385 = vunpack.c.l.b16 %v82
  %v386 = vunpack.c.l.b16 %v83
  %v387 = vunpack.c.l.b16 %v84
  %v388 = vunpack.c.l.b16 %v85
  %v389 = vunpack.c.l.b16 %v86
  %v390 = vunpack.c.l.b16 %v87
  %v391 = vunpack.c.l.b16 %v88
  %v392 = vunpack.c.l.b16 %v89
  %v393 = vunpack.c.l.b16 %v90
  %v394 = vunpack.c.l.b16 %v91
  %v395 = vunpack.c.l.b16 %v92
  %v396 = vunpack.c.l.b16 %v93
  %v397 = vunpack.c.l.b16 %v94
  %v398 = vunpack.c.l.b16 %v95
  %v399 = vunpack.c.l.b16 %v96
  %v400 = vunpack.c.l.b16 %v97
  %v401 = vunpack.c.l.b16 %v98
  %v402 = vunpack.c.l.b16 %v99
  %v403 = vunpack.c.l.b16 %v100
  %v404 = vunpack.c.l.b16 %v101
  %v405 = vunpack.c.l.b16 %v102
  %v406 = vunpack.c.l.b16 %v103
  %v407 = vunpack.c.l.b16 %v104
  %v408 = vunpack.c.l.b16 %v105
  %v409 = vunpack.c.l.b16 %v106
  %v410 = vunpack.c.l.b16 %v107
  %v411 = vunpack.c.l.b16 %v108
  %v412 = vunpack.c.l.b16 %v109
  %v413 = vunpack.c.l.b16 %v110
  %v414 = vunpack.c.l.b16 %v111
  %v415 = vunpack.c.l.b16 %v112
  %v416 = vunpack.c.l.b16 %v113
  %v417 = vunpack.c.l.b16 %v114
  %v418 = vunpack.c.l.b16 %v115
  %v419 = vunpack.c.l.b16 %v116
  %v420 = vunpack.c.l.b16 %v117
  %v421 = vunpack.c.l.b16 %v118
  %v422 = vunpack.c.l.b16 %v119
  %v423 = vunpack.c.l.b16 %v120
  %v424 = vunpack.c.l.b16 %v121
  %v425 = vunpack.c.l.b16 %v122
  %v426 = vunpack.c.l.b16 %v123
  %v427 = vunpack.c.l.b16 %v124
  %v428 = vunpack.c.l.b16 %v125
  %v429 = vunpack.c.l.b16 %v126
  %v430 = vunpack.c.l.b16 %v127
  %v431 = vunpack.c.l.b16 %v128
  %v432 = vunpack.c.l.b16 %v129
  %v433 = vunpack.c.l.b16 %v130
  %v434 = vunpack.c.l.b16 %v131
  %v435 = vunpack.c.l.b16 %v132
  %v436 = vunpack.c.l.b16 %v133
  %v437 = vunpack.c.l.b16 %v134
  %v438 = vunpack.c.l.b16 %v135
  %v439 = vunpack.c.l.b16 %v136
  %v440 = vunpack.c.l.b16 %v137
  %v441 = vunpack.c.l.b16 %v138
  %v442 = vunpack.c.l.b16 %v139
  %v443 = vunpack.c.l.b16 %v140
  %v444 = vunpack.c.l.b16 %v141
  %v445 = vunpack.c.l.b16 %v142
  %v446 = vunpack.c.l.b16 %v143
  %v447 = vunpack.c.l.b16 %v144
  %v448 = vunpack.c.l.b16 %v145
  %v449 = vunpack.c.l.b16 %v146
  %v450 = vunpack.c.l.b16 %v147
  %v451 = vunpack.c.l.b16 %v148
  %v452 = vunpack.c.l.b16 %v149
  %v453 = vunpack.c.l.b16 %v150
  %v454 = vpack.c.b16 %v327, %v326
  %v455 = vpack.c.b16 %v329, %v328
  %v456 = vpack.c.b16 %v331, %v330
  %v457 = vpack.c.b16 %v333, %v332
  %v458 = vpack.c.b16 %v335, %v334
  %v459 = vpack.c.b16 %v337, %v336
  %v460 = vpack.c.b16 %v339, %v338
  %v461 = vpack.c.b16 %v341, %v340
  %v462 = vpack.c.b16 %v343, %v342
  %v463 = vpack.c.b16 %v345, %v344
  %v464 = vpack.c.b16 %v347, %v346
  %v465 = vpack.c.b16 %v349, %v348
  %v466 = vpack.c.b16 %v351, %v350
  %v467 = vpack.c.b16 %v353, %v352
  %v468 = vpack.c.b16 %v355, %v354
  %v469 = vpack.c.b16 %v357, %v356
  %v470 = vpack.c.b16 %v359, %v358
  %v471 = vpack.c.b16 %v361, %v360
  %v472 = vpack.c.b16 %v363, %v362
  %v473 = vpack.c.b16 %v365, %v364
  %v474 = vpack.c.b16 %v367, %v366
  %v475 = vpack.c.b16 %v369, %v368
  %v476 = vpack.c.b16 %v371, %v370
  %v477 = vpack.c.b16 %v373, %v372
  %v478 = vpack.c.b16 %v375, %v374
  %v479 = vpack.c.b16 %v377, %v376
  %v480 = vpack.c.b16 %v379, %v378
  %v481 = vpack.c.b16 %v381, %v380
  %v482 = vpack.c.b16 %v383, %v382
  %v483 = vpack.c.b16 %v385, %v384
  %v484 = vpack.c.b16 %v387, %v386
  %v485 = vpack.c.b16 %v389, %v388
  %v486 = vpack.c.b16 %v391, %v390
  %v487 = vpack.c.b16 %v393, %v392
  %v488 = vpack.c.b16 %v395, %v394
  %v489 = vpack.c.b16 %v397, %v396
  %v490 = vpack.c.b16 %v399, %v398
  %v491 = vpack.c.b16 %v401, %v400
  %v492 = vpack.c.b16 %v403, %v402
  %v493 = vpack.c.b16 %v405, %v404
  %v494 = vpack.c.b16 %v407, %v406
  %v495 = vpack.c.b16 %v409, %v408
  %v496 = vpack.c.b16 %v411, %v410
  %v497 = vpack.c.b16 %v413, %v412
  %v498 = vpack.c.b16 %v415, %v414
  %v499 = vpack.c.b16 %v417, %v416
  %v500 = vpack.c.b16 %v419, %v418
  %v501 = vpack.c.b16 %v421, %v420
  %v502 = vpack.c.b16 %v423, %v422
  %v503 = vpack.c.b16 %v425, %v424
  %v504 = vpack.c.b16 %v427, %v426
  %v505 = vpack.c.b16 %v429, %v428
  %v506 = vpack.c.b16 %v431, %v430
  %v507 = vpack.c.b16 %v433, %v432
  %v508 = vpack.c.b16 %v435, %v434
  %v509 = vpack.c.b16 %v437, %v436
  %v510 = vpack.c.b16 %v439, %v438
  %v511 = vpack.c.b16 %v441, %v440
  %v512 = vpack.c.b16 %v443, %v442
  %v513 = vpack.c.b16 %v445, %v444
  %v514 = vpack.c.b16 %v447, %v446
  %v515 = vpack.c.b16 %v449, %v448
  %v516 = vpack.c.b16 %v451, %v450
  %v517 = vpack.c.b16 %v453, %v452
  %582 = vmatprep.subr.bf16.mxu0 0
  %583 = vmatpush1.bf16.msra.mxu0 %v454
  %584 = vmatprep.subr.bf16.mxu0 0
  %585 = vmatpush1.bf16.msra.mxu0 %v455
  %586 = vmatprep.subr.bf16.mxu0 0
  %587 = vmatpush1.bf16.msra.mxu0 %v456
  %588 = vmatprep.subr.bf16.mxu0 0
  %589 = vmatpush1.bf16.msra.mxu0 %v457
  %590 = vmatprep.subr.bf16.mxu0 0
  %591 = vmatpush1.bf16.msra.mxu0 %v458
  %592 = vmatprep.subr.bf16.mxu0 0
  %593 = vmatpush1.bf16.msra.mxu0 %v459
  %594 = vmatprep.subr.bf16.mxu0 0
  %595 = vmatpush1.bf16.msra.mxu0 %v460
  %596 = vmatprep.subr.bf16.mxu0 0
  %597 = vmatpush1.bf16.msra.mxu0 %v461
  %598 = vmatprep.subr.bf16.mxu0 0
  %599 = vmatpush1.bf16.msra.mxu0 %v462
  %600 = vmatprep.subr.bf16.mxu0 0
  %601 = vmatpush1.bf16.msra.mxu0 %v463
  %602 = vmatprep.subr.bf16.mxu0 0
  %603 = vmatpush1.bf16.msra.mxu0 %v464
  %604 = vmatprep.subr.bf16.mxu0 0
  %605 = vmatpush1.bf16.msra.mxu0 %v465
  %606 = vmatprep.subr.bf16.mxu0 0
  %607 = vmatpush1.bf16.msra.mxu0 %v466
  %608 = vmatprep.subr.bf16.mxu0 0
  %609 = vmatpush1.bf16.msra.mxu0 %v467
  %610 = vmatprep.subr.bf16.mxu0 0
  %611 = vmatpush1.bf16.msra.mxu0 %v468
  %612 = vmatprep.subr.bf16.mxu0 0
  %613 = vmatpush1.bf16.msra.mxu0 %v469
  %614 = vmatprep.mubr.bf16.mxu0 %v183
  %615 = vmatmul.mubr.bf16.gmra.mrb[0].mxu0 %v182
  %v616 = vpop.f32.mrb[0].mxu0
  %v617 = vadd.f32 %v156, %v616
  %v618 = vpop.f32.mrb[0].mxu0
  %v619 = vpop.f32.mrb[0].mxu0
  %v620 = vadd.f32 %v156, %v619
  %v621 = vpop.f32.mrb[0].mxu0
  %622 = vdwg.mxu0
  %623 = vmatprep.subr.bf16.mxu0 0
  %624 = vmatpush1.bf16.msra.mxu0 %v470
  %625 = vmatprep.subr.bf16.mxu0 0
  %626 = vmatpush1.bf16.msra.mxu0 %v471
  %627 = vmatprep.subr.bf16.mxu0 0
  %628 = vmatpush1.bf16.msra.mxu0 %v472
  %629 = vmatprep.subr.bf16.mxu0 0
  %630 = vmatpush1.bf16.msra.mxu0 %v473
  %631 = vmatprep.subr.bf16.mxu0 0
  %632 = vmatpush1.bf16.msra.mxu0 %v474
  %633 = vmatprep.subr.bf16.mxu0 0
  %634 = vmatpush1.bf16.msra.mxu0 %v475
  %635 = vmatprep.subr.bf16.mxu0 0
  %636 = vmatpush1.bf16.msra.mxu0 %v476
  %637 = vmatprep.subr.bf16.mxu0 0
  %638 = vmatpush1.bf16.msra.mxu0 %v477
  %639 = vmatprep.subr.bf16.mxu0 0
  %640 = vmatpush1.bf16.msra.mxu0 %v478
  %641 = vmatprep.subr.bf16.mxu0 0
  %642 = vmatpush1.bf16.msra.mxu0 %v479
  %643 = vmatprep.subr.bf16.mxu0 0
  %644 = vmatpush1.bf16.msra.mxu0 %v480
  %645 = vmatprep.subr.bf16.mxu0 0
  %646 = vmatpush1.bf16.msra.mxu0 %v481
  %647 = vmatprep.subr.bf16.mxu0 0
  %648 = vmatpush1.bf16.msra.mxu0 %v482
  %649 = vmatprep.subr.bf16.mxu0 0
  %650 = vmatpush1.bf16.msra.mxu0 %v483
  %651 = vmatprep.subr.bf16.mxu0 0
  %652 = vmatpush1.bf16.msra.mxu0 %v484
  %653 = vmatprep.subr.bf16.mxu0 0
  %654 = vmatpush1.bf16.msra.mxu0 %v485
  %655 = vmatprep.mubr.bf16.mxu0 %v185
  %656 = vmatmul.mubr.bf16.gmra.mrb[0].mxu0 %v184
  %v657 = vpop.f32.mrb[0].mxu0
  %v658 = vadd.f32 %v617, %v657
  %v659 = vpop.f32.mrb[0].mxu0
  %v660 = vpop.f32.mrb[0].mxu0
  %v661 = vadd.f32 %v620, %v660
  %v662 = vpop.f32.mrb[0].mxu0
  %663 = vdwg.mxu0
  %664 = vmatprep.subr.bf16.mxu0 0
  %665 = vmatpush1.bf16.msra.mxu0 %v486
  %666 = vmatprep.subr.bf16.mxu0 0
  %667 = vmatpush1.bf16.msra.mxu0 %v487
  %668 = vmatprep.subr.bf16.mxu0 0
  %669 = vmatpush1.bf16.msra.mxu0 %v488
  %670 = vmatprep.subr.bf16.mxu0 0
  %671 = vmatpush1.bf16.msra.mxu0 %v489
  %672 = vmatprep.subr.bf16.mxu0 0
  %673 = vmatpush1.bf16.msra.mxu0 %v490
  %674 = vmatprep.subr.bf16.mxu0 0
  %675 = vmatpush1.bf16.msra.mxu0 %v491
  %676 = vmatprep.subr.bf16.mxu0 0
  %677 = vmatpush1.bf16.msra.mxu0 %v492
  %678 = vmatprep.subr.bf16.mxu0 0
  %679 = vmatpush1.bf16.msra.mxu0 %v493
  %680 = vmatprep.subr.bf16.mxu0 0
  %681 = vmatpush1.bf16.msra.mxu0 %v494
  %682 = vmatprep.subr.bf16.mxu0 0
  %683 = vmatpush1.bf16.msra.mxu0 %v495
  %684 = vmatprep.subr.bf16.mxu0 0
  %685 = vmatpush1.bf16.msra.mxu0 %v496
  %686 = vmatprep.subr.bf16.mxu0 0
  %687 = vmatpush1.bf16.msra.mxu0 %v497
  %688 = vmatprep.subr.bf16.mxu0 0
  %689 = vmatpush1.bf16.msra.mxu0 %v498
  %690 = vmatprep.subr.bf16.mxu0 0
  %691 = vmatpush1.bf16.msra.mxu0 %v499
  %692 = vmatprep.subr.bf16.mxu0 0
  %693 = vmatpush1.bf16.msra.mxu0 %v500
  %694 = vmatprep.subr.bf16.mxu0 0
  %695 = vmatpush1.bf16.msra.mxu0 %v501
  %696 = vmatprep.mubr.bf16.mxu0 %v187
  %697 = vmatmul.mubr.bf16.gmra.mrb[0].mxu0 %v186
  %v698 = vpop.f32.mrb[0].mxu0
  %v699 = vadd.f32 %v658, %v698
  %v700 = vpop.f32.mrb[0].mxu0
  %v701 = vpop.f32.mrb[0].mxu0
  %v702 = vadd.f32 %v661, %v701
  %v703 = vpop.f32.mrb[0].mxu0
  %704 = vdwg.mxu0
  %705 = vmatprep.subr.bf16.mxu0 0
  %706 = vmatpush1.bf16.msra.mxu0 %v502
  %707 = vmatprep.subr.bf16.mxu0 0
  %708 = vmatpush1.bf16.msra.mxu0 %v503
  %709 = vmatprep.subr.bf16.mxu0 0
  %710 = vmatpush1.bf16.msra.mxu0 %v504
  %711 = vmatprep.subr.bf16.mxu0 0
  %712 = vmatpush1.bf16.msra.mxu0 %v505
  %713 = vmatprep.subr.bf16.mxu0 0
  %714 = vmatpush1.bf16.msra.mxu0 %v506
  %715 = vmatprep.subr.bf16.mxu0 0
  %716 = vmatpush1.bf16.msra.mxu0 %v507
  %717 = vmatprep.subr.bf16.mxu0 0
  %718 = vmatpush1.bf16.msra.mxu0 %v508
  %719 = vmatprep.subr.bf16.mxu0 0
  %720 = vmatpush1.bf16.msra.mxu0 %v509
  %721 = vmatprep.subr.bf16.mxu0 0
  %722 = vmatpush1.bf16.msra.mxu0 %v510
  %723 = vmatprep.subr.bf16.mxu0 0
  %724 = vmatpush1.bf16.msra.mxu0 %v511
  %725 = vmatprep.subr.bf16.mxu0 0
  %726 = vmatpush1.bf16.msra.mxu0 %v512
  %727 = vmatprep.subr.bf16.mxu0 0
  %728 = vmatpush1.bf16.msra.mxu0 %v513
  %729 = vmatprep.subr.bf16.mxu0 0
  %730 = vmatpush1.bf16.msra.mxu0 %v514
  %731 = vmatprep.subr.bf16.mxu0 0
  %732 = vmatpush1.bf16.msra.mxu0 %v515
  %733 = vmatprep.subr.bf16.mxu0 0
  %734 = vmatpush1.bf16.msra.mxu0 %v516
  %735 = vmatprep.subr.bf16.mxu0 0
  %736 = vmatpush1.bf16.msra.mxu0 %v517
  %737 = vmatprep.mubr.bf16.mxu0 %v189
  %738 = vmatmul.mubr.bf16.gmra.mrb[0].mxu0 %v188
  %v739 = vpop.f32.mrb[0].mxu0
  %v740 = vadd.f32 %v699, %v739
  %v741 = vpop.f32.mrb[0].mxu0
  %v742 = vpop.f32.mrb[0].mxu0
  %v743 = vadd.f32 %v702, %v742
  %v744 = vpop.f32.mrb[0].mxu0
  %745 = vdwg.mxu0
  %v746 = vpack.c.bf16 %v743, %v740
  %v748 = vunpack.c.l.b16 %v746
  %v749 = vunpack.c.h.b16 %v746
  %v750 = vpack.c.b16 %v748, %v748
  %v751 = vpack.c.b16 %v749, %v749
  %754 = vst [vmem:[%s3] sm:$0xf] %v750
  %755 = vst [vmem:[%s3 + $0x4] sm:$0xf] %v751
  // Predicated region
  $region14: #{adv_discriminator_forward.15} parent=0 // pred_check
    _
  $region15: #{adv_discriminator_forward.15} parent=0 // pred_check_branch
    %757 = sbr.rel (0) target = $region17
  $region16: #{adv_discriminator_forward.15} parent=0 // pred_region
    _
  $region17: #{adv_discriminator_forward.15} parent=0 // pred_fallthru
    _
  // Predicated region
  $region18: #{adv_discriminator_forward.15} parent=0 // pred_check
    _
  $region19: #{adv_discriminator_forward.15} parent=0 // pred_check_branch
    %759 = sbr.rel (0) target = $region21
  $region20: #{adv_discriminator_forward.15} parent=0 // pred_region
    _
  $region21: #{adv_discriminator_forward.15} parent=0 // pred_fallthru
    _

</llo_original>
